<compile_context>
chip_gen: v5e
topology: v5e:2x2
jax: 0.10.0
libtpu: 0.0.40
codegen_flags: <defaults>
</compile_context>

<pallas_src>
import math
import functools

import jax
import jax.numpy as jnp
from jax.experimental import pallas as pl
from jax.experimental.pallas import tpu as pltpu


def _layernorm(x, g, b, eps=1e-5):
    mu = jnp.mean(x, axis=-1, keepdims=True)
    var = jnp.mean((x - mu) ** 2, axis=-1, keepdims=True)
    return (x - mu) * jax.lax.rsqrt(var + eps) * g + b


def encoder_kernel(
    x_ref, pe_ref, cls_ref, wvp_ref, bvp_ref,
    wqkv_ref, bqkv_ref, wo_ref, bo_ref, ln1g_ref, ln1b_ref,
    w1_ref, b1_ref, w2_ref, b2_ref, ln2g_ref, ln2b_ref,
    wcl_ref, bcl_ref, gn_ref, bn_ref,
    o_ref, seq_scr,
    *, num_heads, out_pad):
    """One grid step = one transformer layer for one (batch, patch-tile) block.

    grid = (B, N // n_block, num_layers); the layer axis (last, fastest) is
    "arbitrary", so per-layer weights stream through VMEM while `seq_scr`
    carries the (n_block, S, H) activations across layers.
    """
    layer = pl.program_id(2)
    num_layers = pl.num_programs(2)
    Nb, S, H = seq_scr.shape
    T = S - 1
    nh = num_heads
    dh = H // nh
    cdt = wvp_ref.dtype                     # matmul compute dtype (bf16)

    # ---- layer 0: var_proj + CLS prepend + sinusoidal positional encoding ----
    @pl.when(layer == 0)
    def _init():
        x = x_ref[0]                                                 # (Nb,T,F) bf16
        xw = jnp.dot(x.reshape(Nb * T, x.shape[-1]), wvp_ref[...],
                     preferred_element_type=jnp.float32)
        xw = xw.reshape(Nb, T, H) + bvp_ref[...] + pe_ref[1:, :][None]
        seq_scr[:, 1:, :] = xw
        # CLS token stays f32 end-to-end (no bf16 round-trip through a GEMM).
        seq_scr[:, 0:1, :] = jnp.broadcast_to(
            (cls_ref[...] + pe_ref[0:1, :])[None], (Nb, 1, H))

    # ---- one post-norm TransformerEncoderLayer (eval mode, dropout = id) -----
    seq = seq_scr[...]                                               # (Nb,S,H) f32
    rows_f32 = seq.reshape(Nb * S, H)
    rows = rows_f32.astype(cdt)

    def _proj(w, b):                         # fused GEMM over all Nb*S rows
        return jnp.dot(rows, w, preferred_element_type=jnp.float32) + b

    # 1/sqrt(head_dim) is folded into wq/bq in the wrapper (scale q, not scores)
    q = _proj(wqkv_ref[0, 0], bqkv_ref[0, 0])
    k = _proj(wqkv_ref[0, 1], bqkv_ref[0, 1])
    v = _proj(wqkv_ref[0, 2], bqkv_ref[0, 2])

    # TODO(synk): for large production S, block the kv axis with online-softmax
    # accumulators instead of materializing the (.., S, S) f32 score tensor.
    if nh == 1:
        q3 = q.reshape(Nb, S, H).astype(cdt)
        k3 = k.reshape(Nb, S, H).astype(cdt)
        v3 = v.reshape(Nb, S, H).astype(cdt)
        s = jnp.einsum('nqd,nkd->nqk', q3, k3,
                       preferred_element_type=jnp.float32)
        s = s - jnp.max(s, axis=-1, keepdims=True)
        p = jnp.exp(s)
        p = p * pl.reciprocal(jnp.sum(p, axis=-1, keepdims=True), approx=True)
        ctx = jnp.einsum('nqk,nkd->nqd', p.astype(cdt), v3,
                         preferred_element_type=jnp.float32)
    else:
        # Head-batched einsums on the native (Nb,S,nh,dh) layout — no XLU
        # transposes.  TODO(synk): validate rank-4 dot_general lowering for
        # nh > 1 configs (the shipped config has nh == 1).
        qh = q.reshape(Nb, S, nh, dh).astype(cdt)
        kh = k.reshape(Nb, S, nh, dh).astype(cdt)
        vh = v.reshape(Nb, S, nh, dh).astype(cdt)
        s = jnp.einsum('nqhd,nkhd->nhqk', qh, kh,
                       preferred_element_type=jnp.float32)
        s = s - jnp.max(s, axis=-1, keepdims=True)
        p = jnp.exp(s)
        p = p * pl.reciprocal(jnp.sum(p, axis=-1, keepdims=True), approx=True)
        ctx = jnp.einsum('nhqk,nkhd->nqhd', p.astype(cdt), vh,
                         preferred_element_type=jnp.float32)
    ctx = ctx.reshape(Nb * S, H)

    attn = jnp.dot(ctx.astype(cdt), wo_ref[0],
                   preferred_element_type=jnp.float32) + bo_ref[0]
    h1 = _layernorm(rows_f32 + attn, ln1g_ref[0], ln1b_ref[0])
    ff = jnp.dot(
        jnp.maximum(jnp.dot(h1.astype(cdt), w1_ref[0],
                            preferred_element_type=jnp.float32) + b1_ref[0],
                    0.0).astype(cdt),
        w2_ref[0], preferred_element_type=jnp.float32) + b2_ref[0]
    new_rows = _layernorm(h1 + ff, ln2g_ref[0], ln2b_ref[0])        # (Nb*S,H) f32
    seq_scr[...] = new_rows.reshape(Nb, S, H)

    # ---- last layer: CLS readout -> cls_to_latent -> final LayerNorm ---------
    @pl.when(layer == num_layers - 1)
    def _final():
        cls_out = new_rows.reshape(Nb, S, H)[:, 0, :]               # (Nb, H)
        lat = jnp.dot(cls_out.astype(cdt), wcl_ref[...],
                      preferred_element_type=jnp.float32) + bcl_ref[...]
        out = _layernorm(lat, gn_ref[...], bn_ref[...])
        if out_pad:                                                 # lane-dense slab
            out = jnp.concatenate(
                [out, jnp.zeros((Nb, out_pad), jnp.float32)], axis=-1)
        o_ref[0] = out


def _vmem_limit_bytes(estimate):
    phys = 128 * 1024 * 1024
    try:
        phys = int(pltpu.get_tpu_info().vmem_capacity_bytes)
    except Exception:
        pass                                  # fall back to 128 MiB assumption
    return int(max(16 * 1024 * 1024, min(int(estimate), int(phys * 0.85))))


def my_timeseries_encoder(x, params, *, num_heads, num_layers, n_block=8,
                          compute_dtype=jnp.bfloat16):
    B, N, T, F = x.shape
    H = params['wvp'].shape[1]
    D = params['wcl'].shape[1]
    ffn = params['w1'].shape[-1]
    S = T + 1
    assert num_heads >= 1, "hidden_dim < 16 gives nhead=0 in the PyTorch module"
    assert H % num_heads == 0
    assert H % 2 == 0, "sinusoidal positional encoding assumes an even hidden dim"
    dh = H // num_heads

    # N ("patch") tile: it is the second-to-last output dim, so it must be a
    # multiple of 8 sublanes unless it spans all of N.
    if n_block is None or n_block > N:
        n_block = N
    if N % n_block != 0 or (n_block != N and n_block % 8 != 0):
        n_block = N
    num_n = N // n_block

    # sinusoidal positional encoding over S = T+1 (CLS prepended at position 0)
    pos = jnp.arange(S, dtype=jnp.float32)[:, None]
    div = jnp.exp(jnp.arange(0, H, 2, dtype=jnp.float32) * (-math.log(10000.0) / H))
    pe = jnp.zeros((S, H), jnp.float32)
    pe = pe.at[:, 0::2].set(jnp.sin(pos * div))
    pe = pe.at[:, 1::2].set(jnp.cos(pos * div))

    # Fold the attention scale 1/sqrt(head_dim) into the q projection.
    scale = 1.0 / math.sqrt(dh)
    wqkv = params['wqkv'].at[:, 0].multiply(scale)
    bqkv = params['bqkv'].at[:, 0].multiply(scale)

    # matmul operands in bf16 (f32 accumulation); biases / LN / CLS / PE stay f32
    cdt = compute_dtype
    x_c = x.astype(cdt)
    wvp = params['wvp'].astype(cdt)
    wqkv = wqkv.astype(cdt)
    wo = params['wo'].astype(cdt)
    w1 = params['w1'].astype(cdt)
    w2 = params['w2'].astype(cdt)
    wcl = params['wcl'].astype(cdt)

    Dp = ((D + 127) // 128) * 128             # lane-dense output width

    kernel = functools.partial(encoder_kernel, num_heads=num_heads,
                               out_pad=Dp - D)

    inputs = (x_c, pe, params['cls'], wvp, params['bvp'],
              wqkv, bqkv, wo, params['bo'], params['ln1g'], params['ln1b'],
              w1, params['b1'], w2, params['b2'], params['ln2g'], params['ln2b'],
              wcl, params['bcl'], params['gn'], params['bn'])

    def invariant(a):
        # grid-invariant params: single-buffered (default double-buffering would
        # just duplicate them in VMEM for zero benefit).
        nd = a.ndim
        return pl.BlockSpec(a.shape, lambda b, n, l, _nd=nd: (0,) * _nd,
                            pipeline_mode=pl.Buffered(1))

    def per_layer(a):
        # streamed one layer at a time along the (arbitrary) layer grid axis;
        # default double-buffering lets layer l+1 weights DMA under layer l.
        nd = a.ndim
        return pl.BlockSpec((1,) + a.shape[1:],
                            lambda b, n, l, _nd=nd: (l,) + (0,) * (_nd - 1))

    # TODO(synk): if F stays tiny at production sizes, repack x (or do var_proj
    # in the wrapper) so this block's last dim is >=128 lanes wide.
    x_spec = pl.BlockSpec((1, n_block, T, F), lambda b, n, l: (b, n, 0, 0))

    in_specs = ([x_spec]
                + [invariant(a) for a in inputs[1:5]]
                + [per_layer(a) for a in inputs[5:17]]
                + [invariant(a) for a in inputs[17:]])
    out_spec = pl.BlockSpec((1, n_block, Dp), lambda b, n, l: (b, n, 0))

    # advisory cost estimate for XLA scheduling around the custom call
    flops_layer = (3 * 2 * S * H * H          # q/k/v projections
                   + 2 * 2 * S * S * H        # scores + p@v
                   + 2 * S * H * H            # output projection
                   + 2 * 2 * S * H * ffn)     # FFN
    flops = B * N * (2 * T * F * H + num_layers * flops_layer + 2 * H * D)
    transcendentals = B * N * num_layers * num_heads * S * S
    bytes_accessed = int(sum(int(a.size) * a.dtype.itemsize for a in inputs)
                         + B * N * Dp * 4)

    # generation-aware VMEM limit from actual block / scratch sizes
    f32b, cb = 4, jnp.dtype(cdt).itemsize
    layer_w = (4 * H * H + 2 * H * ffn) * cb
    layer_b = (9 * H + ffn) * f32b
    x_blk = n_block * T * max(F, 128) * cb
    out_blk = n_block * Dp * f32b
    invariant_b = (S * H + 2 * H + 3 * Dp) * f32b + (F * H + H * D) * cb
    act = n_block * S * (7 * H + 2 * num_heads * S + ffn) * f32b
    vmem_est = (2 * (layer_w + layer_b + x_blk + out_blk)
                + invariant_b + n_block * S * H * f32b + act + (8 << 20))

    out = pl.pallas_call(
        kernel,
        out_shape=jax.ShapeDtypeStruct((B, N, Dp), jnp.float32),
        grid_spec=pltpu.PrefetchScalarGridSpec(
            num_scalar_prefetch=0,
            grid=(B, num_n, num_layers),
            in_specs=in_specs,
            out_specs=out_spec,
            scratch_shapes=[pltpu.VMEM((n_block, S, H), jnp.float32)]),
        compiler_params=pltpu.CompilerParams(
            dimension_semantics=("parallel", "parallel", "arbitrary"),
            vmem_limit_bytes=_vmem_limit_bytes(vmem_est)),
        cost_estimate=pl.CostEstimate(flops=int(flops),
                                      transcendentals=int(transcendentals),
                                      bytes_accessed=bytes_accessed),
    )(*inputs)

    return out[..., :D] if Dp != D else out


def init_params(key, F, H, D, L, ffn):
    keys = jax.random.split(key, 8)
    s = 0.02
    p = {}
    p['cls'] = jax.random.normal(keys[0], (1, H), jnp.float32)           # cls_token
    p['wvp'] = jax.random.normal(keys[1], (F, H), jnp.float32) * s       # var_proj
    p['bvp'] = jnp.zeros((1, H), jnp.float32)
    p['wqkv'] = jax.random.normal(keys[2], (L, 3, H, H), jnp.float32) * s
    p['bqkv'] = jnp.zeros((L, 3, 1, H), jnp.float32)
    p['wo'] = jax.random.normal(keys[3], (L, H, H), jnp.float32) * s
    p['bo'] = jnp.zeros((L, 1, H), jnp.float32)
    p['ln1g'] = jnp.ones((L, 1, H), jnp.float32)
    p['ln1b'] = jnp.zeros((L, 1, H), jnp.float32)
    p['w1'] = jax.random.normal(keys[4], (L, H, ffn), jnp.float32) * s
    p['b1'] = jnp.zeros((L, 1, ffn), jnp.float32)
    p['w2'] = jax.random.normal(keys[5], (L, ffn, H), jnp.float32) * s
    p['b2'] = jnp.zeros((L, 1, H), jnp.float32)
    p['ln2g'] = jnp.ones((L, 1, H), jnp.float32)
    p['ln2b'] = jnp.zeros((L, 1, H), jnp.float32)
    p['wcl'] = jax.random.normal(keys[6], (H, D), jnp.float32) * s       # cls_to_latent
    p['bcl'] = jnp.zeros((1, D), jnp.float32)
    p['gn'] = jnp.ones((1, D), jnp.float32)                              # final norm
    p['bn'] = jnp.zeros((1, D), jnp.float32)
    return p


if __name__ == "__main__":
    # small shapes consistent with the module: (B, N, T, F) -> (B, N, D)
    B, N, T, F = 2, 16, 8, 4
    latent_dim = 64
    H = latent_dim // 4                    # hidden_dim = 16
    num_heads = min(H // 16, 16)           # PyTorch: min(hidden_dim // 16, 16) = 1
    time_layers = 2
    ffn = H * 4                            # dim_feedforward = hidden_dim * 4

    key = jax.random.PRNGKey(0)
    kx, kp = jax.random.split(key)
    x = jax.random.normal(kx, (B, N, T, F), jnp.float32)
    params = init_params(kp, F, H, latent_dim, time_layers, ffn)

    # grid = (B=2, N/n_block=2, layers=2): exercises the parallel B/N axes and
    # the layer-streaming carry across the arbitrary axis.
    out = my_timeseries_encoder(x, params, num_heads=num_heads,
                                num_layers=time_layers, n_block=8)
    out = jax.block_until_ready(out)
    assert out.shape == (B, N, latent_dim)
    assert bool(jnp.all(jnp.isfinite(out)))
    print("KERNEL_OK")
</pallas_src>

<mosaic_0001>
module attributes {stable_mosaic.version = 11 : i64} {
  func.func @encoder_kernel(%arg0: i32, %arg1: i32, %arg2: i32, %arg3: memref<1x8x8x4xbf16, #tpu.memory_space<vmem>>, %arg4: memref<9x16xf32, #tpu.memory_space<vmem>>, %arg5: memref<1x16xf32, #tpu.memory_space<vmem>>, %arg6: memref<4x16xbf16, #tpu.memory_space<vmem>>, %arg7: memref<1x16xf32, #tpu.memory_space<vmem>>, %arg8: memref<1x3x16x16xbf16, #tpu.memory_space<vmem>>, %arg9: memref<1x3x1x16xf32, #tpu.memory_space<vmem>>, %arg10: memref<1x16x16xbf16, #tpu.memory_space<vmem>>, %arg11: memref<1x1x16xf32, #tpu.memory_space<vmem>>, %arg12: memref<1x1x16xf32, #tpu.memory_space<vmem>>, %arg13: memref<1x1x16xf32, #tpu.memory_space<vmem>>, %arg14: memref<1x16x64xbf16, #tpu.memory_space<vmem>>, %arg15: memref<1x1x64xf32, #tpu.memory_space<vmem>>, %arg16: memref<1x64x16xbf16, #tpu.memory_space<vmem>>, %arg17: memref<1x1x16xf32, #tpu.memory_space<vmem>>, %arg18: memref<1x1x16xf32, #tpu.memory_space<vmem>>, %arg19: memref<1x1x16xf32, #tpu.memory_space<vmem>>, %arg20: memref<16x64xbf16, #tpu.memory_space<vmem>>, %arg21: memref<1x64xf32, #tpu.memory_space<vmem>>, %arg22: memref<1x64xf32, #tpu.memory_space<vmem>>, %arg23: memref<1x64xf32, #tpu.memory_space<vmem>>, %arg24: memref<1x8x128xf32, #tpu.memory_space<vmem>>, %arg25: memref<8x9x16xf32, #tpu.memory_space<vmem>>) attributes {dimension_semantics = [#tpu.dimension_semantics<parallel>, #tpu.dimension_semantics<parallel>, #tpu.dimension_semantics<arbitrary>], iteration_bounds = array<i64: 2, 2, 2>, scalar_prefetch = 0 : i64, scratch_operands = 1 : i64, tpu.core_type = #tpu.core_type<tc>, window_params = [{transform_indices = @transform_0, window_bounds = array<i64: 1, 8, 8, 4>}, {pipeline_mode = #tpu.pipeline_mode<synchronous>, transform_indices = @transform_1, window_bounds = array<i64: 9, 16>}, {pipeline_mode = #tpu.pipeline_mode<synchronous>, transform_indices = @transform_2, window_bounds = array<i64: 1, 16>}, {pipeline_mode = #tpu.pipeline_mode<synchronous>, transform_indices = @transform_3, window_bounds = array<i64: 4, 16>}, {pipeline_mode = #tpu.pipeline_mode<synchronous>, transform_indices = @transform_4, window_bounds = array<i64: 1, 16>}, {transform_indices = @transform_5, window_bounds = array<i64: 1, 3, 16, 16>}, {transform_indices = @transform_6, window_bounds = array<i64: 1, 3, 1, 16>}, {transform_indices = @transform_7, window_bounds = array<i64: 1, 16, 16>}, {transform_indices = @transform_8, window_bounds = array<i64: 1, 1, 16>}, {transform_indices = @transform_9, window_bounds = array<i64: 1, 1, 16>}, {transform_indices = @transform_10, window_bounds = array<i64: 1, 1, 16>}, {transform_indices = @transform_11, window_bounds = array<i64: 1, 16, 64>}, {transform_indices = @transform_12, window_bounds = array<i64: 1, 1, 64>}, {transform_indices = @transform_13, window_bounds = array<i64: 1, 64, 16>}, {transform_indices = @transform_14, window_bounds = array<i64: 1, 1, 16>}, {transform_indices = @transform_15, window_bounds = array<i64: 1, 1, 16>}, {transform_indices = @transform_16, window_bounds = array<i64: 1, 1, 16>}, {pipeline_mode = #tpu.pipeline_mode<synchronous>, transform_indices = @transform_17, window_bounds = array<i64: 16, 64>}, {pipeline_mode = #tpu.pipeline_mode<synchronous>, transform_indices = @transform_18, window_bounds = array<i64: 1, 64>}, {pipeline_mode = #tpu.pipeline_mode<synchronous>, transform_indices = @transform_19, window_bounds = array<i64: 1, 64>}, {pipeline_mode = #tpu.pipeline_mode<synchronous>, transform_indices = @transform_20, window_bounds = array<i64: 1, 64>}, {transform_indices = @transform_21, window_bounds = array<i64: 1, 8, 128>}]} {
    %c0_i32 = arith.constant 0 : i32
    %0 = arith.cmpi eq, %arg2, %c0_i32 : i32
    %1 = arith.extui %0 : i1 to i32
    %c0_i32_0 = arith.constant 0 : i32
    %2 = arith.cmpi ne, %1, %c0_i32_0 : i32
    scf.if %2 {
      %c0_79 = arith.constant 0 : index
      %c0_80 = arith.constant 0 : index
      %c0_81 = arith.constant 0 : index
      %c0_82 = arith.constant 0 : index
      %132 = vector.load %arg3[%c0_79, %c0_80, %c0_81, %c0_82] : memref<1x8x8x4xbf16, #tpu.memory_space<vmem>>, vector<1x8x8x4xbf16>
      %133 = vector.shape_cast %132 : vector<1x8x8x4xbf16> to vector<8x8x4xbf16>
      %134 = vector.shape_cast %133 : vector<8x8x4xbf16> to vector<64x4xbf16>
      %c0_83 = arith.constant 0 : index
      %c0_84 = arith.constant 0 : index
      %135 = vector.load %arg6[%c0_83, %c0_84] : memref<4x16xbf16, #tpu.memory_space<vmem>>, vector<4x16xbf16>
      %cst_85 = arith.constant dense<0.000000e+00> : vector<64x16xf32>
      %136 = tpu.matmul %134, %135, %cst_85 {dimension_numbers = #tpu.dot_dimension_numbers<[1], [0], [0], [1], [0, 0, 1, 1], [], []>} : vector<64x4xbf16>, vector<4x16xbf16>, vector<64x16xf32> -> vector<64x16xf32>
      %137 = vector.shape_cast %136 : vector<64x16xf32> to vector<8x8x16xf32>
      %c0_86 = arith.constant 0 : index
      %c0_87 = arith.constant 0 : index
      %138 = vector.load %arg7[%c0_86, %c0_87] : memref<1x16xf32, #tpu.memory_space<vmem>>, vector<1x16xf32>
      %139 = vector.shape_cast %138 : vector<1x16xf32> to vector<1x1x16xf32>
      %140 = vector.broadcast %139 : vector<1x1x16xf32> to vector<8x8x16xf32>
      %141 = arith.addf %137, %140 : vector<8x8x16xf32>
      %c1_88 = arith.constant 1 : index
      %c0_89 = arith.constant 0 : index
      %142 = vector.load %arg4[%c1_88, %c0_89] : memref<9x16xf32, #tpu.memory_space<vmem>>, vector<8x16xf32>
      %143 = vector.shape_cast %142 : vector<8x16xf32> to vector<1x8x16xf32>
      %144 = vector.broadcast %143 : vector<1x8x16xf32> to vector<8x8x16xf32>
      %145 = arith.addf %141, %144 : vector<8x8x16xf32>
      %c0_90 = arith.constant 0 : index
      %c1_91 = arith.constant 1 : index
      %c0_92 = arith.constant 0 : index
      %146 = vector.load %arg25[%c0_90, %c1_91, %c0_92] : memref<8x9x16xf32, #tpu.memory_space<vmem>>, vector<8x8x16xf32>
      tpu.vector_store %arg25[%c0_90, %c1_91, %c0_92], %145 {strides = array<i32>} : memref<8x9x16xf32, #tpu.memory_space<vmem>>, vector<8x8x16xf32>,
      %c0_93 = arith.constant 0 : index
      %c0_94 = arith.constant 0 : index
      %147 = vector.load %arg5[%c0_93, %c0_94] : memref<1x16xf32, #tpu.memory_space<vmem>>, vector<1x16xf32>
      %c0_95 = arith.constant 0 : index
      %c0_96 = arith.constant 0 : index
      %148 = vector.load %arg4[%c0_95, %c0_96] : memref<9x16xf32, #tpu.memory_space<vmem>>, vector<1x16xf32>
      %149 = arith.addf %147, %148 : vector<1x16xf32>
      %150 = vector.shape_cast %149 : vector<1x16xf32> to vector<1x1x16xf32>
      %151 = vector.shape_cast %150 : vector<1x1x16xf32> to vector<1x1x16xf32>
      %152 = vector.broadcast %151 : vector<1x1x16xf32> to vector<8x1x16xf32>
      %c0_97 = arith.constant 0 : index
      %c0_98 = arith.constant 0 : index
      %c0_99 = arith.constant 0 : index
      %153 = vector.load %arg25[%c0_97, %c0_98, %c0_99] : memref<8x9x16xf32, #tpu.memory_space<vmem>>, vector<8x1x16xf32>
      tpu.vector_store %arg25[%c0_97, %c0_98, %c0_99], %152 {strides = array<i32>} : memref<8x9x16xf32, #tpu.memory_space<vmem>>, vector<8x1x16xf32>,
    } else {
    }
    %c0 = arith.constant 0 : index
    %c0_1 = arith.constant 0 : index
    %c0_2 = arith.constant 0 : index
    %3 = vector.load %arg25[%c0, %c0_1, %c0_2] : memref<8x9x16xf32, #tpu.memory_space<vmem>>, vector<8x9x16xf32>
    %4 = vector.shape_cast %3 : vector<8x9x16xf32> to vector<72x16xf32>
    %5 = arith.truncf %4 : vector<72x16xf32> to vector<72x16xbf16>
    %c0_3 = arith.constant 0 : index
    %c0_4 = arith.constant 0 : index
    %c0_5 = arith.constant 0 : index
    %c0_6 = arith.constant 0 : index
    %6 = vector.load %arg8[%c0_3, %c0_4, %c0_5, %c0_6] : memref<1x3x16x16xbf16, #tpu.memory_space<vmem>>, vector<1x1x16x16xbf16>
    %7 = vector.shape_cast %6 : vector<1x1x16x16xbf16> to vector<16x16xbf16>
    %c0_7 = arith.constant 0 : index
    %c0_8 = arith.constant 0 : index
    %c0_9 = arith.constant 0 : index
    %c0_10 = arith.constant 0 : index
    %8 = vector.load %arg9[%c0_7, %c0_8, %c0_9, %c0_10] : memref<1x3x1x16xf32, #tpu.memory_space<vmem>>, vector<1x1x1x16xf32>
    %9 = vector.shape_cast %8 : vector<1x1x1x16xf32> to vector<1x16xf32>
    %cst = arith.constant dense<0.000000e+00> : vector<72x16xf32>
    %10 = tpu.matmul %5, %7, %cst {dimension_numbers = #tpu.dot_dimension_numbers<[1], [0], [0], [1], [0, 0, 1, 1], [], []>} : vector<72x16xbf16>, vector<16x16xbf16>, vector<72x16xf32> -> vector<72x16xf32>
    %11 = vector.broadcast %9 : vector<1x16xf32> to vector<72x16xf32>
    %12 = arith.addf %10, %11 : vector<72x16xf32>
    %c0_11 = arith.constant 0 : index
    %c1 = arith.constant 1 : index
    %c0_12 = arith.constant 0 : index
    %c0_13 = arith.constant 0 : index
    %13 = vector.load %arg8[%c0_11, %c1, %c0_12, %c0_13] : memref<1x3x16x16xbf16, #tpu.memory_space<vmem>>, vector<1x1x16x16xbf16>
    %14 = vector.shape_cast %13 : vector<1x1x16x16xbf16> to vector<16x16xbf16>
    %c0_14 = arith.constant 0 : index
    %c1_15 = arith.constant 1 : index
    %c0_16 = arith.constant 0 : index
    %c0_17 = arith.constant 0 : index
    %15 = vector.load %arg9[%c0_14, %c1_15, %c0_16, %c0_17] : memref<1x3x1x16xf32, #tpu.memory_space<vmem>>, vector<1x1x1x16xf32>
    %16 = vector.shape_cast %15 : vector<1x1x1x16xf32> to vector<1x16xf32>
    %cst_18 = arith.constant dense<0.000000e+00> : vector<72x16xf32>
    %17 = tpu.matmul %5, %14, %cst_18 {dimension_numbers = #tpu.dot_dimension_numbers<[1], [0], [0], [1], [0, 0, 1, 1], [], []>} : vector<72x16xbf16>, vector<16x16xbf16>, vector<72x16xf32> -> vector<72x16xf32>
    %18 = vector.broadcast %16 : vector<1x16xf32> to vector<72x16xf32>
    %19 = arith.addf %17, %18 : vector<72x16xf32>
    %c0_19 = arith.constant 0 : index
    %c2 = arith.constant 2 : index
    %c0_20 = arith.constant 0 : index
    %c0_21 = arith.constant 0 : index
    %20 = vector.load %arg8[%c0_19, %c2, %c0_20, %c0_21] : memref<1x3x16x16xbf16, #tpu.memory_space<vmem>>, vector<1x1x16x16xbf16>
    %21 = vector.shape_cast %20 : vector<1x1x16x16xbf16> to vector<16x16xbf16>
    %c0_22 = arith.constant 0 : index
    %c2_23 = arith.constant 2 : index
    %c0_24 = arith.constant 0 : index
    %c0_25 = arith.constant 0 : index
    %22 = vector.load %arg9[%c0_22, %c2_23, %c0_24, %c0_25] : memref<1x3x1x16xf32, #tpu.memory_space<vmem>>, vector<1x1x1x16xf32>
    %23 = vector.shape_cast %22 : vector<1x1x1x16xf32> to vector<1x16xf32>
    %cst_26 = arith.constant dense<0.000000e+00> : vector<72x16xf32>
    %24 = tpu.matmul %5, %21, %cst_26 {dimension_numbers = #tpu.dot_dimension_numbers<[1], [0], [0], [1], [0, 0, 1, 1], [], []>} : vector<72x16xbf16>, vector<16x16xbf16>, vector<72x16xf32> -> vector<72x16xf32>
    %25 = vector.broadcast %23 : vector<1x16xf32> to vector<72x16xf32>
    %26 = arith.addf %24, %25 : vector<72x16xf32>
    %27 = vector.shape_cast %12 : vector<72x16xf32> to vector<8x9x16xf32>
    %28 = arith.truncf %27 : vector<8x9x16xf32> to vector<8x9x16xbf16>
    %29 = vector.shape_cast %19 : vector<72x16xf32> to vector<8x9x16xf32>
    %30 = arith.truncf %29 : vector<8x9x16xf32> to vector<8x9x16xbf16>
    %31 = vector.shape_cast %26 : vector<72x16xf32> to vector<8x9x16xf32>
    %32 = arith.truncf %31 : vector<8x9x16xf32> to vector<8x9x16xbf16>
    "tpu.trace_start"() <{level = 10 : i32, message = "nqd,nkd->nqk"}> : () -> ()
    %cst_27 = arith.constant dense<0.000000e+00> : vector<8x9x9xf32>
    %33 = tpu.matmul %28, %30, %cst_27 {dimension_numbers = #tpu.dot_dimension_numbers<[2], [2], [1], [1], [0, 0, 0, 1, 1, 1], [0], [0]>} : vector<8x9x16xbf16>, vector<8x9x16xbf16>, vector<8x9x9xf32> -> vector<8x9x9xf32>
    "tpu.trace_stop"() : () -> ()
    %cst_28 = arith.constant dense<0xFF800000> : vector<8x9xf32>
    %34 = vector.multi_reduction <maximumf>, %33, %cst_28 [2] : vector<8x9x9xf32> to vector<8x9xf32>
    %35 = vector.shape_cast %34 : vector<8x9xf32> to vector<8x9x1xf32>
    %36 = vector.broadcast %35 : vector<8x9x1xf32> to vector<8x9x9xf32>
    %37 = arith.subf %33, %36 : vector<8x9x9xf32>
    %38 = math.exp %37 : vector<8x9x9xf32>
    %cst_29 = arith.constant dense<0.000000e+00> : vector<8x9xf32>
    %39 = vector.multi_reduction <add>, %38, %cst_29 [2] : vector<8x9x9xf32> to vector<8x9xf32>
    %40 = vector.shape_cast %39 : vector<8x9xf32> to vector<8x9x1xf32>
    %41 = tpu.reciprocal %40 {approx = true} : vector<8x9x1xf32> -> vector<8x9x1xf32>
    %42 = vector.broadcast %41 : vector<8x9x1xf32> to vector<8x9x9xf32>
    %43 = arith.mulf %38, %42 : vector<8x9x9xf32>
    %44 = arith.truncf %43 : vector<8x9x9xf32> to vector<8x9x9xbf16>
    "tpu.trace_start"() <{level = 10 : i32, message = "nqk,nkd->nqd"}> : () -> ()
    %cst_30 = arith.constant dense<0.000000e+00> : vector<8x9x16xf32>
    %45 = tpu.matmul %44, %32, %cst_30 {dimension_numbers = #tpu.dot_dimension_numbers<[2], [1], [1], [2], [0, 0, 0, 1, 1, 2], [0], [0]>} : vector<8x9x9xbf16>, vector<8x9x16xbf16>, vector<8x9x16xf32> -> vector<8x9x16xf32>
    "tpu.trace_stop"() : () -> ()
    %46 = vector.shape_cast %45 : vector<8x9x16xf32> to vector<72x16xf32>
    %47 = arith.truncf %46 : vector<72x16xf32> to vector<72x16xbf16>
    %c0_31 = arith.constant 0 : index
    %c0_32 = arith.constant 0 : index
    %c0_33 = arith.constant 0 : index
    %48 = vector.load %arg10[%c0_31, %c0_32, %c0_33] : memref<1x16x16xbf16, #tpu.memory_space<vmem>>, vector<1x16x16xbf16>
    %49 = vector.shape_cast %48 : vector<1x16x16xbf16> to vector<16x16xbf16>
    %cst_34 = arith.constant dense<0.000000e+00> : vector<72x16xf32>
    %50 = tpu.matmul %47, %49, %cst_34 {dimension_numbers = #tpu.dot_dimension_numbers<[1], [0], [0], [1], [0, 0, 1, 1], [], []>} : vector<72x16xbf16>, vector<16x16xbf16>, vector<72x16xf32> -> vector<72x16xf32>
    %c0_35 = arith.constant 0 : index
    %c0_36 = arith.constant 0 : index
    %c0_37 = arith.constant 0 : index
    %51 = vector.load %arg11[%c0_35, %c0_36, %c0_37] : memref<1x1x16xf32, #tpu.memory_space<vmem>>, vector<1x1x16xf32>
    %52 = vector.shape_cast %51 : vector<1x1x16xf32> to vector<1x16xf32>
    %53 = vector.broadcast %52 : vector<1x16xf32> to vector<72x16xf32>
    %54 = arith.addf %50, %53 : vector<72x16xf32>
    %55 = arith.addf %4, %54 : vector<72x16xf32>
    %c0_38 = arith.constant 0 : index
    %c0_39 = arith.constant 0 : index
    %c0_40 = arith.constant 0 : index
    %56 = vector.load %arg12[%c0_38, %c0_39, %c0_40] : memref<1x1x16xf32, #tpu.memory_space<vmem>>, vector<1x1x16xf32>
    %57 = vector.shape_cast %56 : vector<1x1x16xf32> to vector<1x16xf32>
    %c0_41 = arith.constant 0 : index
    %c0_42 = arith.constant 0 : index
    %c0_43 = arith.constant 0 : index
    %58 = vector.load %arg13[%c0_41, %c0_42, %c0_43] : memref<1x1x16xf32, #tpu.memory_space<vmem>>, vector<1x1x16xf32>
    %59 = vector.shape_cast %58 : vector<1x1x16xf32> to vector<1x16xf32>
    %cst_44 = arith.constant dense<0.000000e+00> : vector<72xf32>
    %60 = vector.multi_reduction <add>, %55, %cst_44 [1] : vector<72x16xf32> to vector<72xf32>
    %61 = vector.shape_cast %60 : vector<72xf32> to vector<72x1xf32>
    %cst_45 = arith.constant 1.600000e+01 : f32
    %62 = vector.broadcast %cst_45 : f32 to vector<72x1xf32>
    %63 = arith.divf %61, %62 : vector<72x1xf32>
    %64 = vector.broadcast %63 : vector<72x1xf32> to vector<72x16xf32>
    %65 = arith.subf %55, %64 : vector<72x16xf32>
    %66 = arith.mulf %65, %65 : vector<72x16xf32>
    %cst_46 = arith.constant dense<0.000000e+00> : vector<72xf32>
    %67 = vector.multi_reduction <add>, %66, %cst_46 [1] : vector<72x16xf32> to vector<72xf32>
    %68 = vector.shape_cast %67 : vector<72xf32> to vector<72x1xf32>
    %cst_47 = arith.constant 1.600000e+01 : f32
    %69 = vector.broadcast %cst_47 : f32 to vector<72x1xf32>
    %70 = arith.divf %68, %69 : vector<72x1xf32>
    %71 = vector.broadcast %63 : vector<72x1xf32> to vector<72x16xf32>
    %72 = arith.subf %55, %71 : vector<72x16xf32>
    %cst_48 = arith.constant 9.99999974E-6 : f32
    %73 = vector.broadcast %cst_48 : f32 to vector<72x1xf32>
    %74 = arith.addf %70, %73 : vector<72x1xf32>
    %75 = math.rsqrt %74 : vector<72x1xf32>
    %76 = vector.broadcast %75 : vector<72x1xf32> to vector<72x16xf32>
    %77 = arith.mulf %72, %76 : vector<72x16xf32>
    %78 = vector.broadcast %57 : vector<1x16xf32> to vector<72x16xf32>
    %79 = arith.mulf %77, %78 : vector<72x16xf32>
    %80 = vector.broadcast %59 : vector<1x16xf32> to vector<72x16xf32>
    %81 = arith.addf %79, %80 : vector<72x16xf32>
    %82 = arith.truncf %81 : vector<72x16xf32> to vector<72x16xbf16>
    %c0_49 = arith.constant 0 : index
    %c0_50 = arith.constant 0 : index
    %c0_51 = arith.constant 0 : index
    %83 = vector.load %arg14[%c0_49, %c0_50, %c0_51] : memref<1x16x64xbf16, #tpu.memory_space<vmem>>, vector<1x16x64xbf16>
    %84 = vector.shape_cast %83 : vector<1x16x64xbf16> to vector<16x64xbf16>
    %cst_52 = arith.constant dense<0.000000e+00> : vector<72x64xf32>
    %85 = tpu.matmul %82, %84, %cst_52 {dimension_numbers = #tpu.dot_dimension_numbers<[1], [0], [0], [1], [0, 0, 1, 1], [], []>} : vector<72x16xbf16>, vector<16x64xbf16>, vector<72x64xf32> -> vector<72x64xf32>
    %c0_53 = arith.constant 0 : index
    %c0_54 = arith.constant 0 : index
    %c0_55 = arith.constant 0 : index
    %86 = vector.load %arg15[%c0_53, %c0_54, %c0_55] : memref<1x1x64xf32, #tpu.memory_space<vmem>>, vector<1x1x64xf32>
    %87 = vector.shape_cast %86 : vector<1x1x64xf32> to vector<1x64xf32>
    %88 = vector.broadcast %87 : vector<1x64xf32> to vector<72x64xf32>
    %89 = arith.addf %85, %88 : vector<72x64xf32>
    %cst_56 = arith.constant 0.000000e+00 : f32
    %90 = vector.broadcast %cst_56 : f32 to vector<72x64xf32>
    %91 = arith.maximumf %89, %90 : vector<72x64xf32>
    %92 = arith.truncf %91 : vector<72x64xf32> to vector<72x64xbf16>
    %c0_57 = arith.constant 0 : index
    %c0_58 = arith.constant 0 : index
    %c0_59 = arith.constant 0 : index
    %93 = vector.load %arg16[%c0_57, %c0_58, %c0_59] : memref<1x64x16xbf16, #tpu.memory_space<vmem>>, vector<1x64x16xbf16>
    %94 = vector.shape_cast %93 : vector<1x64x16xbf16> to vector<64x16xbf16>
    %cst_60 = arith.constant dense<0.000000e+00> : vector<72x16xf32>
    %95 = tpu.matmul %92, %94, %cst_60 {dimension_numbers = #tpu.dot_dimension_numbers<[1], [0], [0], [1], [0, 0, 1, 1], [], []>} : vector<72x64xbf16>, vector<64x16xbf16>, vector<72x16xf32> -> vector<72x16xf32>
    %c0_61 = arith.constant 0 : index
    %c0_62 = arith.constant 0 : index
    %c0_63 = arith.constant 0 : index
    %96 = vector.load %arg17[%c0_61, %c0_62, %c0_63] : memref<1x1x16xf32, #tpu.memory_space<vmem>>, vector<1x1x16xf32>
    %97 = vector.shape_cast %96 : vector<1x1x16xf32> to vector<1x16xf32>
    %98 = vector.broadcast %97 : vector<1x16xf32> to vector<72x16xf32>
    %99 = arith.addf %95, %98 : vector<72x16xf32>
    %100 = arith.addf %81, %99 : vector<72x16xf32>
    %c0_64 = arith.constant 0 : index
    %c0_65 = arith.constant 0 : index
    %c0_66 = arith.constant 0 : index
    %101 = vector.load %arg18[%c0_64, %c0_65, %c0_66] : memref<1x1x16xf32, #tpu.memory_space<vmem>>, vector<1x1x16xf32>
    %102 = vector.shape_cast %101 : vector<1x1x16xf32> to vector<1x16xf32>
    %c0_67 = arith.constant 0 : index
    %c0_68 = arith.constant 0 : index
    %c0_69 = arith.constant 0 : index
    %103 = vector.load %arg19[%c0_67, %c0_68, %c0_69] : memref<1x1x16xf32, #tpu.memory_space<vmem>>, vector<1x1x16xf32>
    %104 = vector.shape_cast %103 : vector<1x1x16xf32> to vector<1x16xf32>
    %cst_70 = arith.constant dense<0.000000e+00> : vector<72xf32>
    %105 = vector.multi_reduction <add>, %100, %cst_70 [1] : vector<72x16xf32> to vector<72xf32>
    %106 = vector.shape_cast %105 : vector<72xf32> to vector<72x1xf32>
    %cst_71 = arith.constant 1.600000e+01 : f32
    %107 = vector.broadcast %cst_71 : f32 to vector<72x1xf32>
    %108 = arith.divf %106, %107 : vector<72x1xf32>
    %109 = vector.broadcast %108 : vector<72x1xf32> to vector<72x16xf32>
    %110 = arith.subf %100, %109 : vector<72x16xf32>
    %111 = arith.mulf %110, %110 : vector<72x16xf32>
    %cst_72 = arith.constant dense<0.000000e+00> : vector<72xf32>
    %112 = vector.multi_reduction <add>, %111, %cst_72 [1] : vector<72x16xf32> to vector<72xf32>
    %113 = vector.shape_cast %112 : vector<72xf32> to vector<72x1xf32>
    %cst_73 = arith.constant 1.600000e+01 : f32
    %114 = vector.broadcast %cst_73 : f32 to vector<72x1xf32>
    %115 = arith.divf %113, %114 : vector<72x1xf32>
    %116 = vector.broadcast %108 : vector<72x1xf32> to vector<72x16xf32>
    %117 = arith.subf %100, %116 : vector<72x16xf32>
    %cst_74 = arith.constant 9.99999974E-6 : f32
    %118 = vector.broadcast %cst_74 : f32 to vector<72x1xf32>
    %119 = arith.addf %115, %118 : vector<72x1xf32>
    %120 = math.rsqrt %119 : vector<72x1xf32>
    %121 = vector.broadcast %120 : vector<72x1xf32> to vector<72x16xf32>
    %122 = arith.mulf %117, %121 : vector<72x16xf32>
    %123 = vector.broadcast %102 : vector<1x16xf32> to vector<72x16xf32>
    %124 = arith.mulf %122, %123 : vector<72x16xf32>
    %125 = vector.broadcast %104 : vector<1x16xf32> to vector<72x16xf32>
    %126 = arith.addf %124, %125 : vector<72x16xf32>
    %127 = vector.shape_cast %126 : vector<72x16xf32> to vector<8x9x16xf32>
    %c0_75 = arith.constant 0 : index
    %c0_76 = arith.constant 0 : index
    %c0_77 = arith.constant 0 : index
    %128 = vector.load %arg25[%c0_75, %c0_76, %c0_77] : memref<8x9x16xf32, #tpu.memory_space<vmem>>, vector<8x9x16xf32>
    tpu.vector_store %arg25[%c0_75, %c0_76, %c0_77], %127 {strides = array<i32>} : memref<8x9x16xf32, #tpu.memory_space<vmem>>, vector<8x9x16xf32>,
    %c1_i32 = arith.constant 1 : i32
    %129 = arith.cmpi eq, %arg2, %c1_i32 : i32
    %130 = arith.extui %129 : i1 to i32
    %c0_i32_78 = arith.constant 0 : i32
    %131 = arith.cmpi ne, %130, %c0_i32_78 : i32
    scf.if %131 {
      %132 = vector.shape_cast %126 : vector<72x16xf32> to vector<8x9x16xf32>
      %133 = vector.extract_strided_slice %132 {offsets = [0, 0, 0], sizes = [8, 1, 16], strides = [1, 1, 1]} : vector<8x9x16xf32> to vector<8x1x16xf32>
      %134 = vector.shape_cast %133 : vector<8x1x16xf32> to vector<8x16xf32>
      %135 = arith.truncf %134 : vector<8x16xf32> to vector<8x16xbf16>
      %c0_79 = arith.constant 0 : index
      %c0_80 = arith.constant 0 : index
      %136 = vector.load %arg20[%c0_79, %c0_80] : memref<16x64xbf16, #tpu.memory_space<vmem>>, vector<16x64xbf16>
      %cst_81 = arith.constant dense<0.000000e+00> : vector<8x64xf32>
      %137 = tpu.matmul %135, %136, %cst_81 {dimension_numbers = #tpu.dot_dimension_numbers<[1], [0], [0], [1], [0, 0, 1, 1], [], []>} : vector<8x16xbf16>, vector<16x64xbf16>, vector<8x64xf32> -> vector<8x64xf32>
      %c0_82 = arith.constant 0 : index
      %c0_83 = arith.constant 0 : index
      %138 = vector.load %arg21[%c0_82, %c0_83] : memref<1x64xf32, #tpu.memory_space<vmem>>, vector<1x64xf32>
      %139 = vector.broadcast %138 : vector<1x64xf32> to vector<8x64xf32>
      %140 = arith.addf %137, %139 : vector<8x64xf32>
      %c0_84 = arith.constant 0 : index
      %c0_85 = arith.constant 0 : index
      %141 = vector.load %arg22[%c0_84, %c0_85] : memref<1x64xf32, #tpu.memory_space<vmem>>, vector<1x64xf32>
      %c0_86 = arith.constant 0 : index
      %c0_87 = arith.constant 0 : index
      %142 = vector.load %arg23[%c0_86, %c0_87] : memref<1x64xf32, #tpu.memory_space<vmem>>, vector<1x64xf32>
      %cst_88 = arith.constant dense<0.000000e+00> : vector<8xf32>
      %143 = vector.multi_reduction <add>, %140, %cst_88 [1] : vector<8x64xf32> to vector<8xf32>
      %144 = vector.shape_cast %143 : vector<8xf32> to vector<8x1xf32>
      %cst_89 = arith.constant 6.400000e+01 : f32
      %145 = vector.broadcast %cst_89 : f32 to vector<8x1xf32>
      %146 = arith.divf %144, %145 : vector<8x1xf32>
      %147 = vector.broadcast %146 : vector<8x1xf32> to vector<8x64xf32>
      %148 = arith.subf %140, %147 : vector<8x64xf32>
      %149 = arith.mulf %148, %148 : vector<8x64xf32>
      %cst_90 = arith.constant dense<0.000000e+00> : vector<8xf32>
      %150 = vector.multi_reduction <add>, %149, %cst_90 [1] : vector<8x64xf32> to vector<8xf32>
      %151 = vector.shape_cast %150 : vector<8xf32> to vector<8x1xf32>
      %cst_91 = arith.constant 6.400000e+01 : f32
      %152 = vector.broadcast %cst_91 : f32 to vector<8x1xf32>
      %153 = arith.divf %151, %152 : vector<8x1xf32>
      %154 = vector.broadcast %146 : vector<8x1xf32> to vector<8x64xf32>
      %155 = arith.subf %140, %154 : vector<8x64xf32>
      %cst_92 = arith.constant 9.99999974E-6 : f32
      %156 = vector.broadcast %cst_92 : f32 to vector<8x1xf32>
      %157 = arith.addf %153, %156 : vector<8x1xf32>
      %158 = math.rsqrt %157 : vector<8x1xf32>
      %159 = vector.broadcast %158 : vector<8x1xf32> to vector<8x64xf32>
      %160 = arith.mulf %155, %159 : vector<8x64xf32>
      %161 = vector.broadcast %141 : vector<1x64xf32> to vector<8x64xf32>
      %162 = arith.mulf %160, %161 : vector<8x64xf32>
      %163 = vector.broadcast %142 : vector<1x64xf32> to vector<8x64xf32>
      %164 = arith.addf %162, %163 : vector<8x64xf32>
      %cst_93 = arith.constant 0.000000e+00 : f32
      %165 = vector.broadcast %cst_93 : f32 to vector<8x64xf32>
      %166 = tpu.concatenate %164, %165 in 1 : vector<8x64xf32>, vector<8x64xf32> -> vector<8x128xf32>
      %c0_94 = arith.constant 0 : index
      %c0_95 = arith.constant 0 : index
      %c0_96 = arith.constant 0 : index
      %167 = vector.load %arg24[%c0_94, %c0_95, %c0_96] : memref<1x8x128xf32, #tpu.memory_space<vmem>>, vector<1x8x128xf32>
      %168 = vector.shape_cast %167 : vector<1x8x128xf32> to vector<8x128xf32>
      %169 = vector.shape_cast %166 : vector<8x128xf32> to vector<1x8x128xf32>
      tpu.vector_store %arg24[%c0_94, %c0_95, %c0_96], %169 {strides = array<i32>} : memref<1x8x128xf32, #tpu.memory_space<vmem>>, vector<1x8x128xf32>,
    } else {
    }
    return
  }
  func.func @transform_0(%arg0: i32, %arg1: i32, %arg2: i32) -> (i32, i32, i32, i32) {
    %c0_i32 = arith.constant 0 : i32
    %c0_i32_0 = arith.constant 0 : i32
    %c0_i32_1 = arith.constant 0 : i32
    return %arg0, %arg1, %c0_i32, %c0_i32_0 : i32, i32, i32, i32
  }
  func.func @transform_1(%arg0: i32, %arg1: i32, %arg2: i32) -> (i32, i32) {
    %c0_i32 = arith.constant 0 : i32
    %c0_i32_0 = arith.constant 0 : i32
    %c0_i32_1 = arith.constant 0 : i32
    return %c0_i32, %c0_i32_0 : i32, i32
  }
  func.func @transform_2(%arg0: i32, %arg1: i32, %arg2: i32) -> (i32, i32) {
    %c0_i32 = arith.constant 0 : i32
    %c0_i32_0 = arith.constant 0 : i32
    %c0_i32_1 = arith.constant 0 : i32
    return %c0_i32, %c0_i32_0 : i32, i32
  }
  func.func @transform_3(%arg0: i32, %arg1: i32, %arg2: i32) -> (i32, i32) {
    %c0_i32 = arith.constant 0 : i32
    %c0_i32_0 = arith.constant 0 : i32
    %c0_i32_1 = arith.constant 0 : i32
    return %c0_i32, %c0_i32_0 : i32, i32
  }
  func.func @transform_4(%arg0: i32, %arg1: i32, %arg2: i32) -> (i32, i32) {
    %c0_i32 = arith.constant 0 : i32
    %c0_i32_0 = arith.constant 0 : i32
    %c0_i32_1 = arith.constant 0 : i32
    return %c0_i32, %c0_i32_0 : i32, i32
  }
  func.func @transform_5(%arg0: i32, %arg1: i32, %arg2: i32) -> (i32, i32, i32, i32) {
    %c0_i32 = arith.constant 0 : i32
    %c0_i32_0 = arith.constant 0 : i32
    %c0_i32_1 = arith.constant 0 : i32
    %c0_i32_2 = arith.constant 0 : i32
    return %arg2, %c0_i32, %c0_i32_0, %c0_i32_1 : i32, i32, i32, i32
  }
  func.func @transform_6(%arg0: i32, %arg1: i32, %arg2: i32) -> (i32, i32, i32, i32) {
    %c0_i32 = arith.constant 0 : i32
    %c0_i32_0 = arith.constant 0 : i32
    %c0_i32_1 = arith.constant 0 : i32
    %c0_i32_2 = arith.constant 0 : i32
    return %arg2, %c0_i32, %c0_i32_0, %c0_i32_1 : i32, i32, i32, i32
  }
  func.func @transform_7(%arg0: i32, %arg1: i32, %arg2: i32) -> (i32, i32, i32) {
    %c0_i32 = arith.constant 0 : i32
    %c0_i32_0 = arith.constant 0 : i32
    %c0_i32_1 = arith.constant 0 : i32
    return %arg2, %c0_i32, %c0_i32_0 : i32, i32, i32
  }
  func.func @transform_8(%arg0: i32, %arg1: i32, %arg2: i32) -> (i32, i32, i32) {
    %c0_i32 = arith.constant 0 : i32
    %c0_i32_0 = arith.constant 0 : i32
    %c0_i32_1 = arith.constant 0 : i32
    return %arg2, %c0_i32, %c0_i32_0 : i32, i32, i32
  }
  func.func @transform_9(%arg0: i32, %arg1: i32, %arg2: i32) -> (i32, i32, i32) {
    %c0_i32 = arith.constant 0 : i32
    %c0_i32_0 = arith.constant 0 : i32
    %c0_i32_1 = arith.constant 0 : i32
    return %arg2, %c0_i32, %c0_i32_0 : i32, i32, i32
  }
  func.func @transform_10(%arg0: i32, %arg1: i32, %arg2: i32) -> (i32, i32, i32) {
    %c0_i32 = arith.constant 0 : i32
    %c0_i32_0 = arith.constant 0 : i32
    %c0_i32_1 = arith.constant 0 : i32
    return %arg2, %c0_i32, %c0_i32_0 : i32, i32, i32
  }
  func.func @transform_11(%arg0: i32, %arg1: i32, %arg2: i32) -> (i32, i32, i32) {
    %c0_i32 = arith.constant 0 : i32
    %c0_i32_0 = arith.constant 0 : i32
    %c0_i32_1 = arith.constant 0 : i32
    return %arg2, %c0_i32, %c0_i32_0 : i32, i32, i32
  }
  func.func @transform_12(%arg0: i32, %arg1: i32, %arg2: i32) -> (i32, i32, i32) {
    %c0_i32 = arith.constant 0 : i32
    %c0_i32_0 = arith.constant 0 : i32
    %c0_i32_1 = arith.constant 0 : i32
    return %arg2, %c0_i32, %c0_i32_0 : i32, i32, i32
  }
  func.func @transform_13(%arg0: i32, %arg1: i32, %arg2: i32) -> (i32, i32, i32) {
    %c0_i32 = arith.constant 0 : i32
    %c0_i32_0 = arith.constant 0 : i32
    %c0_i32_1 = arith.constant 0 : i32
    return %arg2, %c0_i32, %c0_i32_0 : i32, i32, i32
  }
  func.func @transform_14(%arg0: i32, %arg1: i32, %arg2: i32) -> (i32, i32, i32) {
    %c0_i32 = arith.constant 0 : i32
    %c0_i32_0 = arith.constant 0 : i32
    %c0_i32_1 = arith.constant 0 : i32
    return %arg2, %c0_i32, %c0_i32_0 : i32, i32, i32
  }
  func.func @transform_15(%arg0: i32, %arg1: i32, %arg2: i32) -> (i32, i32, i32) {
    %c0_i32 = arith.constant 0 : i32
    %c0_i32_0 = arith.constant 0 : i32
    %c0_i32_1 = arith.constant 0 : i32
    return %arg2, %c0_i32, %c0_i32_0 : i32, i32, i32
  }
  func.func @transform_16(%arg0: i32, %arg1: i32, %arg2: i32) -> (i32, i32, i32) {
    %c0_i32 = arith.constant 0 : i32
    %c0_i32_0 = arith.constant 0 : i32
    %c0_i32_1 = arith.constant 0 : i32
    return %arg2, %c0_i32, %c0_i32_0 : i32, i32, i32
  }
  func.func @transform_17(%arg0: i32, %arg1: i32, %arg2: i32) -> (i32, i32) {
    %c0_i32 = arith.constant 0 : i32
    %c0_i32_0 = arith.constant 0 : i32
    %c0_i32_1 = arith.constant 0 : i32
    return %c0_i32, %c0_i32_0 : i32, i32
  }
  func.func @transform_18(%arg0: i32, %arg1: i32, %arg2: i32) -> (i32, i32) {
    %c0_i32 = arith.constant 0 : i32
    %c0_i32_0 = arith.constant 0 : i32
    %c0_i32_1 = arith.constant 0 : i32
    return %c0_i32, %c0_i32_0 : i32, i32
  }
  func.func @transform_19(%arg0: i32, %arg1: i32, %arg2: i32) -> (i32, i32) {
    %c0_i32 = arith.constant 0 : i32
    %c0_i32_0 = arith.constant 0 : i32
    %c0_i32_1 = arith.constant 0 : i32
    return %c0_i32, %c0_i32_0 : i32, i32
  }
  func.func @transform_20(%arg0: i32, %arg1: i32, %arg2: i32) -> (i32, i32) {
    %c0_i32 = arith.constant 0 : i32
    %c0_i32_0 = arith.constant 0 : i32
    %c0_i32_1 = arith.constant 0 : i32
    return %c0_i32, %c0_i32_0 : i32, i32
  }
  func.func @transform_21(%arg0: i32, %arg1: i32, %arg2: i32) -> (i32, i32, i32) {
    %c0_i32 = arith.constant 0 : i32
    %c0_i32_0 = arith.constant 0 : i32
    return %arg0, %arg1, %c0_i32 : i32, i32, i32
  }
}

</mosaic_0001>

<llo_original>
// kernel: tpu_custom_call.1
$region0: #{tpu_custom_call.1}
  #allocation0 [shape = 'u32[]', space=smem, size = 0x4, offset = 0x4, fixed_abs, tag = 'smem constant byte address 0x4 - core index']
  #allocation1 [shape = 'u32[72,128]{1,0:T(1,128)}', space=vmem, size = 0x9000, scoped, tag = 'internal scratch']
  #allocation2 [shape = 'f32[8,9,16]{2,1,0:T(8,128)}', space=vmem, size = 0x10000, scoped, tag = 'scratch operand']
  %s0 = inlined_call_operand.vmem [shape: bf16[2,16,8,4], index: 0, kind: input, shape index: {}]
  %s1 = inlined_call_operand.vmem [shape: f32[9,16], index: 1, kind: input, shape index: {}]
  %s2 = inlined_call_operand.vmem [shape: f32[1,16], index: 2, kind: input, shape index: {}]
  %s3 = inlined_call_operand.vmem [shape: bf16[4,16], index: 3, kind: input, shape index: {}]
  %s4 = inlined_call_operand.vmem [shape: f32[1,16], index: 4, kind: input, shape index: {}]
  %s5 = inlined_call_operand.vmem [shape: bf16[2,3,16,16], index: 5, kind: input, shape index: {}]
  %s6 = inlined_call_operand.vmem [shape: f32[2,3,1,16], index: 6, kind: input, shape index: {}]
  %s7 = inlined_call_operand.vmem [shape: bf16[2,16,16], index: 7, kind: input, shape index: {}]
  %s8 = inlined_call_operand.vmem [shape: f32[2,1,16], index: 8, kind: input, shape index: {}]
  %s9 = inlined_call_operand.vmem [shape: f32[2,1,16], index: 9, kind: input, shape index: {}]
  %s10 = inlined_call_operand.vmem [shape: f32[2,1,16], index: 10, kind: input, shape index: {}]
  %s11 = inlined_call_operand.vmem [shape: bf16[2,16,64], index: 11, kind: input, shape index: {}]
  %s12 = inlined_call_operand.vmem [shape: f32[2,1,64], index: 12, kind: input, shape index: {}]
  %s13 = inlined_call_operand.vmem [shape: bf16[2,64,16], index: 13, kind: input, shape index: {}]
  %s14 = inlined_call_operand.vmem [shape: f32[2,1,16], index: 14, kind: input, shape index: {}]
  %s15 = inlined_call_operand.vmem [shape: f32[2,1,16], index: 15, kind: input, shape index: {}]
  %s16 = inlined_call_operand.vmem [shape: f32[2,1,16], index: 16, kind: input, shape index: {}]
  %s17 = inlined_call_operand.vmem [shape: bf16[16,64], index: 17, kind: input, shape index: {}]
  %s18 = inlined_call_operand.vmem [shape: f32[1,64], index: 18, kind: input, shape index: {}]
  %s19 = inlined_call_operand.vmem [shape: f32[1,64], index: 19, kind: input, shape index: {}]
  %s20 = inlined_call_operand.vmem [shape: f32[1,64], index: 20, kind: input, shape index: {}]
  %s21 = inlined_call_operand.hbm [shape: f32[2,16,128], index: 21, kind: output, shape index: {}]
  %s22 = sld [smem:[#allocation0]]
  $region125: #{tpu_custom_call.1} parent=0
    _
  %s24 = ssub.s32 1, %s22
  %s25 = scalar_select 0, %s24, %s22
  $region1: #{tpu_custom_call.1} parent=0
    #allocation3 [shape = 'u8[8192]{0}', space=vmem, size = 0x2000, scoped, tag = 'output window, operand 0']
    #allocation4 [shape = 's32[2]{0}', space=sflag, size = 0x8, scoped, tag = 'scoped memory for tpu_custom_call.1']
    %26 = vsyncpa [#allocation4], 0
    %s27 = scalar_lea.sflag [#allocation4], 1
    %28 = vsyncpa %s27, 0
    loop: start=0, step=1, limit=10
    $region2: #{tpu_custom_call.1} parent=1 // loop_pre_header
      _
    $region3: #{tpu_custom_call.1} parent=1 // loop_header
      %s30 = sphi 0, %s34
      %p31 = scmp.ge.s32.totalorder %s30, 10
      %s37 = sphi 0, %s56
      %s38 = sphi 0, %s52
      %s39 = sphi 0, %s48
      %s40 = sphi 0, %s37
      %s41 = sphi 0, %s38
      %s42 = sphi 0, %s39
      %s43 = sphi 0, %s40
      %s44 = sphi 0, %s41
      %s45 = sphi 0, %s42
      %s61 = sphi 0, %s63
      %s64 = sphi 0, %s61
      %s65 = sphi 0, %s64
      %s81 = sphi 0, %s65
      %s85 = sphi 0, %s85
      %s87 = sphi 0, %s85
      %s88 = sphi 0, %s87
      %s102 = sphi 0, %s88
      %s106 = sphi 0, %s106
      %s108 = sphi 0, %s106
      %s109 = sphi 0, %s108
      %s123 = sphi 0, %s109
      %s127 = sphi 0, %s127
      %s129 = sphi 0, %s127
      %s130 = sphi 0, %s129
      %s144 = sphi 0, %s130
      %s148 = sphi 0, %s148
      %s150 = sphi 0, %s148
      %s151 = sphi 0, %s150
      %s165 = sphi 0, %s151
      %s171 = sphi 0, %s173
      %s174 = sphi 0, %s171
      %s175 = sphi 0, %s174
      %s191 = sphi 0, %s175
      %s197 = sphi 0, %s199
      %s200 = sphi 0, %s197
      %s201 = sphi 0, %s200
      %s217 = sphi 0, %s201
      %s223 = sphi 0, %s225
      %s226 = sphi 0, %s223
      %s227 = sphi 0, %s226
      %s243 = sphi 0, %s227
      %s249 = sphi 0, %s251
      %s252 = sphi 0, %s249
      %s253 = sphi 0, %s252
      %s269 = sphi 0, %s253
      %s275 = sphi 0, %s277
      %s278 = sphi 0, %s275
      %s279 = sphi 0, %s278
      %s295 = sphi 0, %s279
      %s301 = sphi 0, %s303
      %s304 = sphi 0, %s301
      %s305 = sphi 0, %s304
      %s321 = sphi 0, %s305
      %s327 = sphi 0, %s329
      %s330 = sphi 0, %s327
      %s331 = sphi 0, %s330
      %s347 = sphi 0, %s331
      %s353 = sphi 0, %s355
      %s356 = sphi 0, %s353
      %s357 = sphi 0, %s356
      %s373 = sphi 0, %s357
      %s379 = sphi 0, %s381
      %s382 = sphi 0, %s379
      %s383 = sphi 0, %s382
      %s399 = sphi 0, %s383
      %s405 = sphi 0, %s407
      %s408 = sphi 0, %s405
      %s409 = sphi 0, %s408
      %s425 = sphi 0, %s409
      %s431 = sphi 0, %s433
      %s434 = sphi 0, %s431
      %s435 = sphi 0, %s434
      %s451 = sphi 0, %s435
      %s457 = sphi 0, %s459
      %s460 = sphi 0, %s457
      %s461 = sphi 0, %s460
      %s477 = sphi 0, %s461
      %s481 = sphi 0, %s481
      %s483 = sphi 0, %s481
      %s484 = sphi 0, %s483
      %s498 = sphi 0, %s484
      %s502 = sphi 0, %s502
      %s504 = sphi 0, %s502
      %s505 = sphi 0, %s504
      %s519 = sphi 0, %s505
      %s523 = sphi 0, %s523
      %s525 = sphi 0, %s523
      %s526 = sphi 0, %s525
      %s540 = sphi 0, %s526
      %s544 = sphi 0, %s544
      %s546 = sphi 0, %s544
      %s547 = sphi 0, %s546
      %s561 = sphi 0, %s547
      %s569 = sphi 0, %s571
      %s572 = sphi 0, %s569
      %s573 = sphi 0, %s572
      %s589 = sphi 0, %s573
    $region4: #{tpu_custom_call.1} parent=1 // loop_header_branch
      %33 = sbr.rel (%p31) target = $region8
    $region5: #{tpu_custom_call.1} parent=1 // loop_body
      %s35 = ssub.s32 %s30, 1
      %s36 = ssub.s32 %s30, 2
      %s46 = sadd.s32 1, %s39
      %p47 = scmp.ge.s32.totalorder %s46, 2
      %s48 = scalar_select %p47, 0, %s46
      %s49 = sadd.s32 1, %s38
      %s50 = scalar_select %p47, %s49, %s38
      %p51 = scmp.ge.s32.totalorder %s50, 2
      %s52 = scalar_select %p51, 0, %s50
      %s53 = sadd.s32 1, %s37
      %s54 = scalar_select %p51, %s53, %s37
      %p55 = scmp.ge.s32.totalorder %s54, 2
      %s56 = scalar_select %p55, 0, %s54
      %s57 = ssub.s32 %s37, %s56
      %s58 = ssub.s32 %s38, %s52
      %s59 = sor.u32 %s57, %s58
      %p60 = scmp.eq.s32.totalorder %s59, 0
      %s62 = sadd.s32 %s61, 1
      %s63 = scalar_select %p60, %s61, %s62
      %p66 = pneg %p60
      %p67 = scmp.eq.s32.totalorder %s30, 7
      %p68 = por %p66, %p67
      %p69 = scmp.ne.s32.totalorder %s61, %s64
      %p70 = scmp.eq.s32.totalorder %s30, 0
      %p71 = por %p69, %p70
      %p72 = scmp.ne.s32.totalorder %s61, %s64
      %p73 = scmp.eq.s32.totalorder %s35, 7
      %p74 = por %p72, %p73
      %p75 = scmp.ne.s32.totalorder %s64, %s65
      %p76 = scmp.eq.s32.totalorder %s35, 0
      %p77 = por %p75, %p76
      %p78 = scmp.ne.s32.totalorder %s64, %s65
      %p79 = scmp.eq.s32.totalorder %s36, 7
      %p80 = por %p78, %p79
      %p82 = scmp.ne.s32.totalorder %s65, %s81
      %p83 = scmp.eq.s32.totalorder %s36, 0
      %p84 = por %p82, %p83
      %s86 = sadd.s32 %s85, 1
      %p89 = scmp.eq.s32.totalorder %s30, 7
      %p90 = scmp.ne.s32.totalorder %s85, %s87
      %p91 = scmp.eq.s32.totalorder %s30, 0
      %p92 = por %p90, %p91
      %p93 = scmp.ne.s32.totalorder %s85, %s87
      %p94 = scmp.eq.s32.totalorder %s35, 7
      %p95 = por %p93, %p94
      %p96 = scmp.ne.s32.totalorder %s87, %s88
      %p97 = scmp.eq.s32.totalorder %s35, 0
      %p98 = por %p96, %p97
      %p99 = scmp.ne.s32.totalorder %s87, %s88
      %p100 = scmp.eq.s32.totalorder %s36, 7
      %p101 = por %p99, %p100
      %p103 = scmp.ne.s32.totalorder %s88, %s102
      %p104 = scmp.eq.s32.totalorder %s36, 0
      %p105 = por %p103, %p104
      %s107 = sadd.s32 %s106, 1
      %p110 = scmp.eq.s32.totalorder %s30, 7
      %p111 = scmp.ne.s32.totalorder %s106, %s108
      %p112 = scmp.eq.s32.totalorder %s30, 0
      %p113 = por %p111, %p112
      %p114 = scmp.ne.s32.totalorder %s106, %s108
      %p115 = scmp.eq.s32.totalorder %s35, 7
      %p116 = por %p114, %p115
      %p117 = scmp.ne.s32.totalorder %s108, %s109
      %p118 = scmp.eq.s32.totalorder %s35, 0
      %p119 = por %p117, %p118
      %p120 = scmp.ne.s32.totalorder %s108, %s109
      %p121 = scmp.eq.s32.totalorder %s36, 7
      %p122 = por %p120, %p121
      %p124 = scmp.ne.s32.totalorder %s109, %s123
      %p125 = scmp.eq.s32.totalorder %s36, 0
      %p126 = por %p124, %p125
      %s128 = sadd.s32 %s127, 1
      %p131 = scmp.eq.s32.totalorder %s30, 7
      %p132 = scmp.ne.s32.totalorder %s127, %s129
      %p133 = scmp.eq.s32.totalorder %s30, 0
      %p134 = por %p132, %p133
      %p135 = scmp.ne.s32.totalorder %s127, %s129
      %p136 = scmp.eq.s32.totalorder %s35, 7
      %p137 = por %p135, %p136
      %p138 = scmp.ne.s32.totalorder %s129, %s130
      %p139 = scmp.eq.s32.totalorder %s35, 0
      %p140 = por %p138, %p139
      %p141 = scmp.ne.s32.totalorder %s129, %s130
      %p142 = scmp.eq.s32.totalorder %s36, 7
      %p143 = por %p141, %p142
      %p145 = scmp.ne.s32.totalorder %s130, %s144
      %p146 = scmp.eq.s32.totalorder %s36, 0
      %p147 = por %p145, %p146
      %s149 = sadd.s32 %s148, 1
      %p152 = scmp.eq.s32.totalorder %s30, 7
      %p153 = scmp.ne.s32.totalorder %s148, %s150
      %p154 = scmp.eq.s32.totalorder %s30, 0
      %p155 = por %p153, %p154
      %p156 = scmp.ne.s32.totalorder %s148, %s150
      %p157 = scmp.eq.s32.totalorder %s35, 7
      %p158 = por %p156, %p157
      %p159 = scmp.ne.s32.totalorder %s150, %s151
      %p160 = scmp.eq.s32.totalorder %s35, 0
      %p161 = por %p159, %p160
      %p162 = scmp.ne.s32.totalorder %s150, %s151
      %p163 = scmp.eq.s32.totalorder %s36, 7
      %p164 = por %p162, %p163
      %p166 = scmp.ne.s32.totalorder %s151, %s165
      %p167 = scmp.eq.s32.totalorder %s36, 0
      %p168 = por %p166, %p167
      %s169 = ssub.s32 %s39, %s48
      %p170 = scmp.eq.s32.totalorder %s169, 0
      %s172 = sadd.s32 %s171, 1
      %s173 = scalar_select %p170, %s171, %s172
      %p176 = pneg %p170
      %p177 = scmp.eq.s32.totalorder %s30, 7
      %p178 = por %p176, %p177
      %p179 = scmp.ne.s32.totalorder %s171, %s174
      %p180 = scmp.eq.s32.totalorder %s30, 0
      %p181 = por %p179, %p180
      %p182 = scmp.ne.s32.totalorder %s171, %s174
      %p183 = scmp.eq.s32.totalorder %s35, 7
      %p184 = por %p182, %p183
      %p185 = scmp.ne.s32.totalorder %s174, %s175
      %p186 = scmp.eq.s32.totalorder %s35, 0
      %p187 = por %p185, %p186
      %p188 = scmp.ne.s32.totalorder %s174, %s175
      %p189 = scmp.eq.s32.totalorder %s36, 7
      %p190 = por %p188, %p189
      %p192 = scmp.ne.s32.totalorder %s175, %s191
      %p193 = scmp.eq.s32.totalorder %s36, 0
      %p194 = por %p192, %p193
      %s195 = ssub.s32 %s39, %s48
      %p196 = scmp.eq.s32.totalorder %s195, 0
      %s198 = sadd.s32 %s197, 1
      %s199 = scalar_select %p196, %s197, %s198
      %p202 = pneg %p196
      %p203 = scmp.eq.s32.totalorder %s30, 7
      %p204 = por %p202, %p203
      %p205 = scmp.ne.s32.totalorder %s197, %s200
      %p206 = scmp.eq.s32.totalorder %s30, 0
      %p207 = por %p205, %p206
      %p208 = scmp.ne.s32.totalorder %s197, %s200
      %p209 = scmp.eq.s32.totalorder %s35, 7
      %p210 = por %p208, %p209
      %p211 = scmp.ne.s32.totalorder %s200, %s201
      %p212 = scmp.eq.s32.totalorder %s35, 0
      %p213 = por %p211, %p212
      %p214 = scmp.ne.s32.totalorder %s200, %s201
      %p215 = scmp.eq.s32.totalorder %s36, 7
      %p216 = por %p214, %p215
      %p218 = scmp.ne.s32.totalorder %s201, %s217
      %p219 = scmp.eq.s32.totalorder %s36, 0
      %p220 = por %p218, %p219
      %s221 = ssub.s32 %s39, %s48
      %p222 = scmp.eq.s32.totalorder %s221, 0
      %s224 = sadd.s32 %s223, 1
      %s225 = scalar_select %p222, %s223, %s224
      %p228 = pneg %p222
      %p229 = scmp.eq.s32.totalorder %s30, 7
      %p230 = por %p228, %p229
      %p231 = scmp.ne.s32.totalorder %s223, %s226
      %p232 = scmp.eq.s32.totalorder %s30, 0
      %p233 = por %p231, %p232
      %p234 = scmp.ne.s32.totalorder %s223, %s226
      %p235 = scmp.eq.s32.totalorder %s35, 7
      %p236 = por %p234, %p235
      %p237 = scmp.ne.s32.totalorder %s226, %s227
      %p238 = scmp.eq.s32.totalorder %s35, 0
      %p239 = por %p237, %p238
      %p240 = scmp.ne.s32.totalorder %s226, %s227
      %p241 = scmp.eq.s32.totalorder %s36, 7
      %p242 = por %p240, %p241
      %p244 = scmp.ne.s32.totalorder %s227, %s243
      %p245 = scmp.eq.s32.totalorder %s36, 0
      %p246 = por %p244, %p245
      %s247 = ssub.s32 %s39, %s48
      %p248 = scmp.eq.s32.totalorder %s247, 0
      %s250 = sadd.s32 %s249, 1
      %s251 = scalar_select %p248, %s249, %s250
      %p254 = pneg %p248
      %p255 = scmp.eq.s32.totalorder %s30, 7
      %p256 = por %p254, %p255
      %p257 = scmp.ne.s32.totalorder %s249, %s252
      %p258 = scmp.eq.s32.totalorder %s30, 0
      %p259 = por %p257, %p258
      %p260 = scmp.ne.s32.totalorder %s249, %s252
      %p261 = scmp.eq.s32.totalorder %s35, 7
      %p262 = por %p260, %p261
      %p263 = scmp.ne.s32.totalorder %s252, %s253
      %p264 = scmp.eq.s32.totalorder %s35, 0
      %p265 = por %p263, %p264
      %p266 = scmp.ne.s32.totalorder %s252, %s253
      %p267 = scmp.eq.s32.totalorder %s36, 7
      %p268 = por %p266, %p267
      %p270 = scmp.ne.s32.totalorder %s253, %s269
      %p271 = scmp.eq.s32.totalorder %s36, 0
      %p272 = por %p270, %p271
      %s273 = ssub.s32 %s39, %s48
      %p274 = scmp.eq.s32.totalorder %s273, 0
      %s276 = sadd.s32 %s275, 1
      %s277 = scalar_select %p274, %s275, %s276
      %p280 = pneg %p274
      %p281 = scmp.eq.s32.totalorder %s30, 7
      %p282 = por %p280, %p281
      %p283 = scmp.ne.s32.totalorder %s275, %s278
      %p284 = scmp.eq.s32.totalorder %s30, 0
      %p285 = por %p283, %p284
      %p286 = scmp.ne.s32.totalorder %s275, %s278
      %p287 = scmp.eq.s32.totalorder %s35, 7
      %p288 = por %p286, %p287
      %p289 = scmp.ne.s32.totalorder %s278, %s279
      %p290 = scmp.eq.s32.totalorder %s35, 0
      %p291 = por %p289, %p290
      %p292 = scmp.ne.s32.totalorder %s278, %s279
      %p293 = scmp.eq.s32.totalorder %s36, 7
      %p294 = por %p292, %p293
      %p296 = scmp.ne.s32.totalorder %s279, %s295
      %p297 = scmp.eq.s32.totalorder %s36, 0
      %p298 = por %p296, %p297
      %s299 = ssub.s32 %s39, %s48
      %p300 = scmp.eq.s32.totalorder %s299, 0
      %s302 = sadd.s32 %s301, 1
      %s303 = scalar_select %p300, %s301, %s302
      %p306 = pneg %p300
      %p307 = scmp.eq.s32.totalorder %s30, 7
      %p308 = por %p306, %p307
      %p309 = scmp.ne.s32.totalorder %s301, %s304
      %p310 = scmp.eq.s32.totalorder %s30, 0
      %p311 = por %p309, %p310
      %p312 = scmp.ne.s32.totalorder %s301, %s304
      %p313 = scmp.eq.s32.totalorder %s35, 7
      %p314 = por %p312, %p313
      %p315 = scmp.ne.s32.totalorder %s304, %s305
      %p316 = scmp.eq.s32.totalorder %s35, 0
      %p317 = por %p315, %p316
      %p318 = scmp.ne.s32.totalorder %s304, %s305
      %p319 = scmp.eq.s32.totalorder %s36, 7
      %p320 = por %p318, %p319
      %p322 = scmp.ne.s32.totalorder %s305, %s321
      %p323 = scmp.eq.s32.totalorder %s36, 0
      %p324 = por %p322, %p323
      %s325 = ssub.s32 %s39, %s48
      %p326 = scmp.eq.s32.totalorder %s325, 0
      %s328 = sadd.s32 %s327, 1
      %s329 = scalar_select %p326, %s327, %s328
      %p332 = pneg %p326
      %p333 = scmp.eq.s32.totalorder %s30, 7
      %p334 = por %p332, %p333
      %p335 = scmp.ne.s32.totalorder %s327, %s330
      %p336 = scmp.eq.s32.totalorder %s30, 0
      %p337 = por %p335, %p336
      %p338 = scmp.ne.s32.totalorder %s327, %s330
      %p339 = scmp.eq.s32.totalorder %s35, 7
      %p340 = por %p338, %p339
      %p341 = scmp.ne.s32.totalorder %s330, %s331
      %p342 = scmp.eq.s32.totalorder %s35, 0
      %p343 = por %p341, %p342
      %p344 = scmp.ne.s32.totalorder %s330, %s331
      %p345 = scmp.eq.s32.totalorder %s36, 7
      %p346 = por %p344, %p345
      %p348 = scmp.ne.s32.totalorder %s331, %s347
      %p349 = scmp.eq.s32.totalorder %s36, 0
      %p350 = por %p348, %p349
      %s351 = ssub.s32 %s39, %s48
      %p352 = scmp.eq.s32.totalorder %s351, 0
      %s354 = sadd.s32 %s353, 1
      %s355 = scalar_select %p352, %s353, %s354
      %p358 = pneg %p352
      %p359 = scmp.eq.s32.totalorder %s30, 7
      %p360 = por %p358, %p359
      %p361 = scmp.ne.s32.totalorder %s353, %s356
      %p362 = scmp.eq.s32.totalorder %s30, 0
      %p363 = por %p361, %p362
      %p364 = scmp.ne.s32.totalorder %s353, %s356
      %p365 = scmp.eq.s32.totalorder %s35, 7
      %p366 = por %p364, %p365
      %p367 = scmp.ne.s32.totalorder %s356, %s357
      %p368 = scmp.eq.s32.totalorder %s35, 0
      %p369 = por %p367, %p368
      %p370 = scmp.ne.s32.totalorder %s356, %s357
      %p371 = scmp.eq.s32.totalorder %s36, 7
      %p372 = por %p370, %p371
      %p374 = scmp.ne.s32.totalorder %s357, %s373
      %p375 = scmp.eq.s32.totalorder %s36, 0
      %p376 = por %p374, %p375
      %s377 = ssub.s32 %s39, %s48
      %p378 = scmp.eq.s32.totalorder %s377, 0
      %s380 = sadd.s32 %s379, 1
      %s381 = scalar_select %p378, %s379, %s380
      %p384 = pneg %p378
      %p385 = scmp.eq.s32.totalorder %s30, 7
      %p386 = por %p384, %p385
      %p387 = scmp.ne.s32.totalorder %s379, %s382
      %p388 = scmp.eq.s32.totalorder %s30, 0
      %p389 = por %p387, %p388
      %p390 = scmp.ne.s32.totalorder %s379, %s382
      %p391 = scmp.eq.s32.totalorder %s35, 7
      %p392 = por %p390, %p391
      %p393 = scmp.ne.s32.totalorder %s382, %s383
      %p394 = scmp.eq.s32.totalorder %s35, 0
      %p395 = por %p393, %p394
      %p396 = scmp.ne.s32.totalorder %s382, %s383
      %p397 = scmp.eq.s32.totalorder %s36, 7
      %p398 = por %p396, %p397
      %p400 = scmp.ne.s32.totalorder %s383, %s399
      %p401 = scmp.eq.s32.totalorder %s36, 0
      %p402 = por %p400, %p401
      %s403 = ssub.s32 %s39, %s48
      %p404 = scmp.eq.s32.totalorder %s403, 0
      %s406 = sadd.s32 %s405, 1
      %s407 = scalar_select %p404, %s405, %s406
      %p410 = pneg %p404
      %p411 = scmp.eq.s32.totalorder %s30, 7
      %p412 = por %p410, %p411
      %p413 = scmp.ne.s32.totalorder %s405, %s408
      %p414 = scmp.eq.s32.totalorder %s30, 0
      %p415 = por %p413, %p414
      %p416 = scmp.ne.s32.totalorder %s405, %s408
      %p417 = scmp.eq.s32.totalorder %s35, 7
      %p418 = por %p416, %p417
      %p419 = scmp.ne.s32.totalorder %s408, %s409
      %p420 = scmp.eq.s32.totalorder %s35, 0
      %p421 = por %p419, %p420
      %p422 = scmp.ne.s32.totalorder %s408, %s409
      %p423 = scmp.eq.s32.totalorder %s36, 7
      %p424 = por %p422, %p423
      %p426 = scmp.ne.s32.totalorder %s409, %s425
      %p427 = scmp.eq.s32.totalorder %s36, 0
      %p428 = por %p426, %p427
      %s429 = ssub.s32 %s39, %s48
      %p430 = scmp.eq.s32.totalorder %s429, 0
      %s432 = sadd.s32 %s431, 1
      %s433 = scalar_select %p430, %s431, %s432
      %p436 = pneg %p430
      %p437 = scmp.eq.s32.totalorder %s30, 7
      %p438 = por %p436, %p437
      %p439 = scmp.ne.s32.totalorder %s431, %s434
      %p440 = scmp.eq.s32.totalorder %s30, 0
      %p441 = por %p439, %p440
      %p442 = scmp.ne.s32.totalorder %s431, %s434
      %p443 = scmp.eq.s32.totalorder %s35, 7
      %p444 = por %p442, %p443
      %p445 = scmp.ne.s32.totalorder %s434, %s435
      %p446 = scmp.eq.s32.totalorder %s35, 0
      %p447 = por %p445, %p446
      %p448 = scmp.ne.s32.totalorder %s434, %s435
      %p449 = scmp.eq.s32.totalorder %s36, 7
      %p450 = por %p448, %p449
      %p452 = scmp.ne.s32.totalorder %s435, %s451
      %p453 = scmp.eq.s32.totalorder %s36, 0
      %p454 = por %p452, %p453
      %s455 = ssub.s32 %s39, %s48
      %p456 = scmp.eq.s32.totalorder %s455, 0
      %s458 = sadd.s32 %s457, 1
      %s459 = scalar_select %p456, %s457, %s458
      %p462 = pneg %p456
      %p463 = scmp.eq.s32.totalorder %s30, 7
      %p464 = por %p462, %p463
      %p465 = scmp.ne.s32.totalorder %s457, %s460
      %p466 = scmp.eq.s32.totalorder %s30, 0
      %p467 = por %p465, %p466
      %p468 = scmp.ne.s32.totalorder %s457, %s460
      %p469 = scmp.eq.s32.totalorder %s35, 7
      %p470 = por %p468, %p469
      %p471 = scmp.ne.s32.totalorder %s460, %s461
      %p472 = scmp.eq.s32.totalorder %s35, 0
      %p473 = por %p471, %p472
      %p474 = scmp.ne.s32.totalorder %s460, %s461
      %p475 = scmp.eq.s32.totalorder %s36, 7
      %p476 = por %p474, %p475
      %p478 = scmp.ne.s32.totalorder %s461, %s477
      %p479 = scmp.eq.s32.totalorder %s36, 0
      %p480 = por %p478, %p479
      %s482 = sadd.s32 %s481, 1
      %p485 = scmp.eq.s32.totalorder %s30, 7
      %p486 = scmp.ne.s32.totalorder %s481, %s483
      %p487 = scmp.eq.s32.totalorder %s30, 0
      %p488 = por %p486, %p487
      %p489 = scmp.ne.s32.totalorder %s481, %s483
      %p490 = scmp.eq.s32.totalorder %s35, 7
      %p491 = por %p489, %p490
      %p492 = scmp.ne.s32.totalorder %s483, %s484
      %p493 = scmp.eq.s32.totalorder %s35, 0
      %p494 = por %p492, %p493
      %p495 = scmp.ne.s32.totalorder %s483, %s484
      %p496 = scmp.eq.s32.totalorder %s36, 7
      %p497 = por %p495, %p496
      %p499 = scmp.ne.s32.totalorder %s484, %s498
      %p500 = scmp.eq.s32.totalorder %s36, 0
      %p501 = por %p499, %p500
      %s503 = sadd.s32 %s502, 1
      %p506 = scmp.eq.s32.totalorder %s30, 7
      %p507 = scmp.ne.s32.totalorder %s502, %s504
      %p508 = scmp.eq.s32.totalorder %s30, 0
      %p509 = por %p507, %p508
      %p510 = scmp.ne.s32.totalorder %s502, %s504
      %p511 = scmp.eq.s32.totalorder %s35, 7
      %p512 = por %p510, %p511
      %p513 = scmp.ne.s32.totalorder %s504, %s505
      %p514 = scmp.eq.s32.totalorder %s35, 0
      %p515 = por %p513, %p514
      %p516 = scmp.ne.s32.totalorder %s504, %s505
      %p517 = scmp.eq.s32.totalorder %s36, 7
      %p518 = por %p516, %p517
      %p520 = scmp.ne.s32.totalorder %s505, %s519
      %p521 = scmp.eq.s32.totalorder %s36, 0
      %p522 = por %p520, %p521
      %s524 = sadd.s32 %s523, 1
      %p527 = scmp.eq.s32.totalorder %s30, 7
      %p528 = scmp.ne.s32.totalorder %s523, %s525
      %p529 = scmp.eq.s32.totalorder %s30, 0
      %p530 = por %p528, %p529
      %p531 = scmp.ne.s32.totalorder %s523, %s525
      %p532 = scmp.eq.s32.totalorder %s35, 7
      %p533 = por %p531, %p532
      %p534 = scmp.ne.s32.totalorder %s525, %s526
      %p535 = scmp.eq.s32.totalorder %s35, 0
      %p536 = por %p534, %p535
      %p537 = scmp.ne.s32.totalorder %s525, %s526
      %p538 = scmp.eq.s32.totalorder %s36, 7
      %p539 = por %p537, %p538
      %p541 = scmp.ne.s32.totalorder %s526, %s540
      %p542 = scmp.eq.s32.totalorder %s36, 0
      %p543 = por %p541, %p542
      %s545 = sadd.s32 %s544, 1
      %p548 = scmp.eq.s32.totalorder %s30, 7
      %p549 = scmp.ne.s32.totalorder %s544, %s546
      %p550 = scmp.eq.s32.totalorder %s30, 0
      %p551 = por %p549, %p550
      %p552 = scmp.ne.s32.totalorder %s544, %s546
      %p553 = scmp.eq.s32.totalorder %s35, 7
      %p554 = por %p552, %p553
      %p555 = scmp.ne.s32.totalorder %s546, %s547
      %p556 = scmp.eq.s32.totalorder %s35, 0
      %p557 = por %p555, %p556
      %p558 = scmp.ne.s32.totalorder %s546, %s547
      %p559 = scmp.eq.s32.totalorder %s36, 7
      %p560 = por %p558, %p559
      %p562 = scmp.ne.s32.totalorder %s547, %s561
      %p563 = scmp.eq.s32.totalorder %s36, 0
      %p564 = por %p562, %p563
      %s565 = ssub.s32 %s37, %s56
      %s566 = ssub.s32 %s38, %s52
      %s567 = sor.u32 %s565, %s566
      %p568 = scmp.eq.s32.totalorder %s567, 0
      %s570 = sadd.s32 %s569, 1
      %s571 = scalar_select %p568, %s569, %s570
      %p574 = pneg %p568
      %p575 = scmp.eq.s32.totalorder %s30, 7
      %p576 = por %p574, %p575
      %p577 = scmp.ne.s32.totalorder %s569, %s572
      %p578 = scmp.eq.s32.totalorder %s30, 0
      %p579 = por %p577, %p578
      %p580 = scmp.ne.s32.totalorder %s569, %s572
      %p581 = scmp.eq.s32.totalorder %s35, 7
      %p582 = por %p580, %p581
      %p583 = scmp.ne.s32.totalorder %s572, %s573
      %p584 = scmp.eq.s32.totalorder %s35, 0
      %p585 = por %p583, %p584
      %p586 = scmp.ne.s32.totalorder %s572, %s573
      %p587 = scmp.eq.s32.totalorder %s36, 7
      %p588 = por %p586, %p587
      %p590 = scmp.ne.s32.totalorder %s573, %s589
      %p591 = scmp.eq.s32.totalorder %s36, 0
      %p592 = por %p590, %p591
      %p593 = scmp.le.s32.totalorder 1, %s30
      %p594 = scmp.lt.s32.totalorder %s30, 9
      %p595 = pnand %p593, %p594
      %p596 = pneg %p595
      // Predicated region
      $region9: #{tpu_custom_call.1} parent=5 // pred_check
        _
      $region10: #{tpu_custom_call.1} parent=5 // pred_check_branch
        %598 = sbr.rel (%p595) target = $region12
      $region11: #{tpu_custom_call.1} parent=5 // pred_region
        %s599 = ssub.s32 %s30, 1
        // Predicated region
        $region13: #{tpu_custom_call.1} parent=11 // pred_check
          %p600 = pneg %p98
        $region14: #{tpu_custom_call.1} parent=11 // pred_check_branch
          %602 = sbr.rel (%p600) target = $region16
        $region15: #{tpu_custom_call.1} parent=11 // pred_region
          _
        $region16: #{tpu_custom_call.1} parent=11 // pred_fallthru
          _
        // Predicated region
        $region17: #{tpu_custom_call.1} parent=11 // pred_check
          %p603 = pneg %p119
        $region18: #{tpu_custom_call.1} parent=11 // pred_check_branch
          %605 = sbr.rel (%p603) target = $region20
        $region19: #{tpu_custom_call.1} parent=11 // pred_region
          _
        $region20: #{tpu_custom_call.1} parent=11 // pred_fallthru
          _
        // Predicated region
        $region21: #{tpu_custom_call.1} parent=11 // pred_check
          %p606 = pneg %p140
        $region22: #{tpu_custom_call.1} parent=11 // pred_check_branch
          %608 = sbr.rel (%p606) target = $region24
        $region23: #{tpu_custom_call.1} parent=11 // pred_region
          _
        $region24: #{tpu_custom_call.1} parent=11 // pred_fallthru
          _
        // Predicated region
        $region25: #{tpu_custom_call.1} parent=11 // pred_check
          %p609 = pneg %p161
        $region26: #{tpu_custom_call.1} parent=11 // pred_check_branch
          %611 = sbr.rel (%p609) target = $region28
        $region27: #{tpu_custom_call.1} parent=11 // pred_region
          _
        $region28: #{tpu_custom_call.1} parent=11 // pred_fallthru
          _
        // Predicated region
        $region29: #{tpu_custom_call.1} parent=11 // pred_check
          %p612 = pneg %p494
        $region30: #{tpu_custom_call.1} parent=11 // pred_check_branch
          %614 = sbr.rel (%p612) target = $region32
        $region31: #{tpu_custom_call.1} parent=11 // pred_region
          _
        $region32: #{tpu_custom_call.1} parent=11 // pred_fallthru
          _
        // Predicated region
        $region33: #{tpu_custom_call.1} parent=11 // pred_check
          %p615 = pneg %p515
        $region34: #{tpu_custom_call.1} parent=11 // pred_check_branch
          %617 = sbr.rel (%p615) target = $region36
        $region35: #{tpu_custom_call.1} parent=11 // pred_region
          _
        $region36: #{tpu_custom_call.1} parent=11 // pred_fallthru
          _
        // Predicated region
        $region37: #{tpu_custom_call.1} parent=11 // pred_check
          %p618 = pneg %p536
        $region38: #{tpu_custom_call.1} parent=11 // pred_check_branch
          %620 = sbr.rel (%p618) target = $region40
        $region39: #{tpu_custom_call.1} parent=11 // pred_region
          _
        $region40: #{tpu_custom_call.1} parent=11 // pred_fallthru
          _
        // Predicated region
        $region41: #{tpu_custom_call.1} parent=11 // pred_check
          %p621 = pneg %p557
        $region42: #{tpu_custom_call.1} parent=11 // pred_check_branch
          %623 = sbr.rel (%p621) target = $region44
        $region43: #{tpu_custom_call.1} parent=11 // pred_region
          _
        $region44: #{tpu_custom_call.1} parent=11 // pred_fallthru
          _
      $region12: #{tpu_custom_call.1} parent=5 // pred_fallthru
        _
      %p624 = scmp.lt.s32.totalorder %s30, 8
      // Predicated region
      $region45: #{tpu_custom_call.1} parent=5 // pred_check
        %p625 = pneg %p624
      $region46: #{tpu_custom_call.1} parent=5 // pred_check_branch
        %627 = sbr.rel (%p625) target = $region48
      $region47: #{tpu_custom_call.1} parent=5 // pred_region
        // Predicated region
        $region49: #{tpu_custom_call.1} parent=47 // pred_check
          %p628 = pneg %p71
        $region50: #{tpu_custom_call.1} parent=47 // pred_check_branch
          %630 = sbr.rel (%p628) target = $region52
        $region51: #{tpu_custom_call.1} parent=47 // pred_region
          %s631 = smul.u32 8, %s38
          %p632 = scmp.lt.s32.totalorder %s37, 1
          %s633 = scalar_select %p632, %s37, 1
          %p634 = scmp.lt.s32.totalorder %s631, 15
          %s635 = scalar_select %p634, %s631, 15
          %s636 = smul.addr %s633, 16
          %s637 = sadd.s32 %s635, %s636
          %s638 = smul.addr %s637, 4
          %s639 = scalar_lea.vmem %s0, %s638
          %s640 = smul.u32 8, %s38
        $region52: #{tpu_custom_call.1} parent=47 // pred_fallthru
          _
        // Predicated region
        $region53: #{tpu_custom_call.1} parent=47 // pred_check
          %p641 = pneg %p181
        $region54: #{tpu_custom_call.1} parent=47 // pred_check_branch
          %643 = sbr.rel (%p641) target = $region56
        $region55: #{tpu_custom_call.1} parent=47 // pred_region
          %p644 = scmp.lt.s32.totalorder %s39, 1
          %s645 = scalar_select %p644, %s39, 1
          %s646 = smul.addr %s645, 6
          %s647 = smul.addr %s646, 4
          %s648 = scalar_lea.vmem %s5, %s647
        $region56: #{tpu_custom_call.1} parent=47 // pred_fallthru
          _
        // Predicated region
        $region57: #{tpu_custom_call.1} parent=47 // pred_check
          %p649 = pneg %p207
        $region58: #{tpu_custom_call.1} parent=47 // pred_check_branch
          %651 = sbr.rel (%p649) target = $region60
        $region59: #{tpu_custom_call.1} parent=47 // pred_region
          %p652 = scmp.lt.s32.totalorder %s39, 1
          %s653 = scalar_select %p652, %s39, 1
          %s654 = smul.addr %s653, 3
          %s655 = scalar_lea.vmem %s6, %s654
        $region60: #{tpu_custom_call.1} parent=47 // pred_fallthru
          _
        // Predicated region
        $region61: #{tpu_custom_call.1} parent=47 // pred_check
          %p656 = pneg %p233
        $region62: #{tpu_custom_call.1} parent=47 // pred_check_branch
          %658 = sbr.rel (%p656) target = $region64
        $region63: #{tpu_custom_call.1} parent=47 // pred_region
          %p659 = scmp.lt.s32.totalorder %s39, 1
          %s660 = scalar_select %p659, %s39, 1
          %s661 = smul.addr %s660, 2
          %s662 = smul.addr %s661, 4
          %s663 = scalar_lea.vmem %s7, %s662
        $region64: #{tpu_custom_call.1} parent=47 // pred_fallthru
          _
        // Predicated region
        $region65: #{tpu_custom_call.1} parent=47 // pred_check
          %p664 = pneg %p259
        $region66: #{tpu_custom_call.1} parent=47 // pred_check_branch
          %666 = sbr.rel (%p664) target = $region68
        $region67: #{tpu_custom_call.1} parent=47 // pred_region
          %p667 = scmp.lt.s32.totalorder %s39, 1
          %s668 = scalar_select %p667, %s39, 1
          %s669 = scalar_lea.vmem %s8, %s668
        $region68: #{tpu_custom_call.1} parent=47 // pred_fallthru
          _
        // Predicated region
        $region69: #{tpu_custom_call.1} parent=47 // pred_check
          %p670 = pneg %p285
        $region70: #{tpu_custom_call.1} parent=47 // pred_check_branch
          %672 = sbr.rel (%p670) target = $region72
        $region71: #{tpu_custom_call.1} parent=47 // pred_region
          %p673 = scmp.lt.s32.totalorder %s39, 1
          %s674 = scalar_select %p673, %s39, 1
          %s675 = scalar_lea.vmem %s9, %s674
        $region72: #{tpu_custom_call.1} parent=47 // pred_fallthru
          _
        // Predicated region
        $region73: #{tpu_custom_call.1} parent=47 // pred_check
          %p676 = pneg %p311
        $region74: #{tpu_custom_call.1} parent=47 // pred_check_branch
          %678 = sbr.rel (%p676) target = $region76
        $region75: #{tpu_custom_call.1} parent=47 // pred_region
          %p679 = scmp.lt.s32.totalorder %s39, 1
          %s680 = scalar_select %p679, %s39, 1
          %s681 = scalar_lea.vmem %s10, %s680
        $region76: #{tpu_custom_call.1} parent=47 // pred_fallthru
          _
        // Predicated region
        $region77: #{tpu_custom_call.1} parent=47 // pred_check
          %p682 = pneg %p337
        $region78: #{tpu_custom_call.1} parent=47 // pred_check_branch
          %684 = sbr.rel (%p682) target = $region80
        $region79: #{tpu_custom_call.1} parent=47 // pred_region
          %p685 = scmp.lt.s32.totalorder %s39, 1
          %s686 = scalar_select %p685, %s39, 1
          %s687 = smul.addr %s686, 2
          %s688 = smul.addr %s687, 4
          %s689 = scalar_lea.vmem %s11, %s688
        $region80: #{tpu_custom_call.1} parent=47 // pred_fallthru
          _
        // Predicated region
        $region81: #{tpu_custom_call.1} parent=47 // pred_check
          %p690 = pneg %p363
        $region82: #{tpu_custom_call.1} parent=47 // pred_check_branch
          %692 = sbr.rel (%p690) target = $region84
        $region83: #{tpu_custom_call.1} parent=47 // pred_region
          %p693 = scmp.lt.s32.totalorder %s39, 1
          %s694 = scalar_select %p693, %s39, 1
          %s695 = scalar_lea.vmem %s12, %s694
        $region84: #{tpu_custom_call.1} parent=47 // pred_fallthru
          _
        // Predicated region
        $region85: #{tpu_custom_call.1} parent=47 // pred_check
          %p696 = pneg %p389
        $region86: #{tpu_custom_call.1} parent=47 // pred_check_branch
          %698 = sbr.rel (%p696) target = $region88
        $region87: #{tpu_custom_call.1} parent=47 // pred_region
          %p699 = scmp.lt.s32.totalorder %s39, 1
          %s700 = scalar_select %p699, %s39, 1
          %s701 = smul.addr %s700, 8
          %s702 = smul.addr %s701, 4
          %s703 = scalar_lea.vmem %s13, %s702
        $region88: #{tpu_custom_call.1} parent=47 // pred_fallthru
          _
        // Predicated region
        $region89: #{tpu_custom_call.1} parent=47 // pred_check
          %p704 = pneg %p415
        $region90: #{tpu_custom_call.1} parent=47 // pred_check_branch
          %706 = sbr.rel (%p704) target = $region92
        $region91: #{tpu_custom_call.1} parent=47 // pred_region
          %p707 = scmp.lt.s32.totalorder %s39, 1
          %s708 = scalar_select %p707, %s39, 1
          %s709 = scalar_lea.vmem %s14, %s708
        $region92: #{tpu_custom_call.1} parent=47 // pred_fallthru
          _
        // Predicated region
        $region93: #{tpu_custom_call.1} parent=47 // pred_check
          %p710 = pneg %p441
        $region94: #{tpu_custom_call.1} parent=47 // pred_check_branch
          %712 = sbr.rel (%p710) target = $region96
        $region95: #{tpu_custom_call.1} parent=47 // pred_region
          %p713 = scmp.lt.s32.totalorder %s39, 1
          %s714 = scalar_select %p713, %s39, 1
          %s715 = scalar_lea.vmem %s15, %s714
        $region96: #{tpu_custom_call.1} parent=47 // pred_fallthru
          _
        // Predicated region
        $region97: #{tpu_custom_call.1} parent=47 // pred_check
          %p716 = pneg %p467
        $region98: #{tpu_custom_call.1} parent=47 // pred_check_branch
          %718 = sbr.rel (%p716) target = $region100
        $region99: #{tpu_custom_call.1} parent=47 // pred_region
          %p719 = scmp.lt.s32.totalorder %s39, 1
          %s720 = scalar_select %p719, %s39, 1
          %s721 = scalar_lea.vmem %s16, %s720
        $region100: #{tpu_custom_call.1} parent=47 // pred_fallthru
          _
      $region48: #{tpu_custom_call.1} parent=5 // pred_fallthru
        _
      %p722 = scmp.le.s32.totalorder 1, %s30
      %p723 = scmp.lt.s32.totalorder %s30, 9
      %p724 = pnand %p722, %p723
      %p725 = pneg %p724
      // Predicated region
      $region101: #{tpu_custom_call.1} parent=5 // pred_check
        _
      $region102: #{tpu_custom_call.1} parent=5 // pred_check_branch
        %727 = sbr.rel (%p724) target = $region104
      $region103: #{tpu_custom_call.1} parent=5 // pred_region
        %s728 = ssub.s32 %s30, 1
        %s729 = smul.u32 8, %s41
        %p730 = scmp.lt.s32.totalorder %s40, 1
        %s731 = scalar_select %p730, %s40, 1
        %p732 = scmp.lt.s32.totalorder %s729, 15
        %s733 = scalar_select %p732, %s729, 15
        %s734 = smul.addr %s731, 16
        %s735 = sadd.s32 %s733, %s734
        %s736 = smul.addr %s735, 4
        %s737 = scalar_lea.vmem %s0, %s736
        %p738 = pneg %p77
        %p739 = pneg %p74
        %p740 = pneg %p98
        %p741 = pneg %p95
        %p742 = pneg %p119
        %p743 = pneg %p116
        %p744 = pneg %p140
        %p745 = pneg %p137
        %p746 = pneg %p161
        %p747 = pneg %p158
        %p748 = scmp.lt.s32.totalorder %s42, 1
        %s749 = scalar_select %p748, %s42, 1
        %s750 = smul.addr %s749, 6
        %s751 = smul.addr %s750, 4
        %s752 = scalar_lea.vmem %s5, %s751
        %p753 = pneg %p187
        %p754 = pneg %p184
        %p755 = scmp.lt.s32.totalorder %s42, 1
        %s756 = scalar_select %p755, %s42, 1
        %s757 = smul.addr %s756, 3
        %s758 = scalar_lea.vmem %s6, %s757
        %p759 = pneg %p213
        %p760 = pneg %p210
        %p761 = scmp.lt.s32.totalorder %s42, 1
        %s762 = scalar_select %p761, %s42, 1
        %s763 = smul.addr %s762, 2
        %s764 = smul.addr %s763, 4
        %s765 = scalar_lea.vmem %s7, %s764
        %p766 = pneg %p239
        %p767 = pneg %p236
        %p768 = scmp.lt.s32.totalorder %s42, 1
        %s769 = scalar_select %p768, %s42, 1
        %s770 = scalar_lea.vmem %s8, %s769
        %p771 = pneg %p265
        %p772 = pneg %p262
        %p773 = scmp.lt.s32.totalorder %s42, 1
        %s774 = scalar_select %p773, %s42, 1
        %s775 = scalar_lea.vmem %s9, %s774
        %p776 = pneg %p291
        %p777 = pneg %p288
        %p778 = scmp.lt.s32.totalorder %s42, 1
        %s779 = scalar_select %p778, %s42, 1
        %s780 = scalar_lea.vmem %s10, %s779
        %p781 = pneg %p317
        %p782 = pneg %p314
        %p783 = scmp.lt.s32.totalorder %s42, 1
        %s784 = scalar_select %p783, %s42, 1
        %s785 = smul.addr %s784, 2
        %s786 = smul.addr %s785, 4
        %s787 = scalar_lea.vmem %s11, %s786
        %p788 = pneg %p343
        %p789 = pneg %p340
        %p790 = scmp.lt.s32.totalorder %s42, 1
        %s791 = scalar_select %p790, %s42, 1
        %s792 = scalar_lea.vmem %s12, %s791
        %p793 = pneg %p369
        %p794 = pneg %p366
        %p795 = scmp.lt.s32.totalorder %s42, 1
        %s796 = scalar_select %p795, %s42, 1
        %s797 = smul.addr %s796, 8
        %s798 = smul.addr %s797, 4
        %s799 = scalar_lea.vmem %s13, %s798
        %p800 = pneg %p395
        %p801 = pneg %p392
        %p802 = scmp.lt.s32.totalorder %s42, 1
        %s803 = scalar_select %p802, %s42, 1
        %s804 = scalar_lea.vmem %s14, %s803
        %p805 = pneg %p421
        %p806 = pneg %p418
        %p807 = scmp.lt.s32.totalorder %s42, 1
        %s808 = scalar_select %p807, %s42, 1
        %s809 = scalar_lea.vmem %s15, %s808
        %p810 = pneg %p447
        %p811 = pneg %p444
        %p812 = scmp.lt.s32.totalorder %s42, 1
        %s813 = scalar_select %p812, %s42, 1
        %s814 = scalar_lea.vmem %s16, %s813
        %p815 = pneg %p473
        %p816 = pneg %p470
        %p817 = pneg %p494
        %p818 = pneg %p491
        %p819 = pneg %p515
        %p820 = pneg %p512
        %p821 = pneg %p536
        %p822 = pneg %p533
        %p823 = pneg %p557
        %p824 = pneg %p554
        %p825 = pneg %p585
        %p826 = pneg %p582
        %s827 = sand.u32 %s572, 1
        %s828 = scalar_lea.sflag [#allocation4], %s827
        %s829 = sand.u32 %s572, 1
        %s830 = smul.addr %s829, 8
        %s831 = scalar_lea.vmem [#allocation3], %s830
        %s832 = smul.u32 8, %s41
        %p833 = scmp.lt.s32.totalorder %s40, 1
        %s834 = scalar_select %p833, %s40, 1
        %p835 = scmp.lt.s32.totalorder %s832, 15
        %s836 = scalar_select %p835, %s832, 15
        %s837 = smul.addr %s834, 16
        %s838 = sadd.s32 %s836, %s837
        %s839 = smul.addr %s838, 4
        %s840 = scalar_lea.vmem %s0, %s839
        %s841 = smul.u32 8, %s41
        %p842 = scmp.lt.s32.totalorder %s42, 1
        %s843 = scalar_select %p842, %s42, 1
        %s844 = smul.addr %s843, 6
        %s845 = smul.addr %s844, 4
        %s846 = scalar_lea.vmem %s5, %s845
        %p847 = scmp.lt.s32.totalorder %s42, 1
        %s848 = scalar_select %p847, %s42, 1
        %s849 = smul.addr %s848, 3
        %s850 = scalar_lea.vmem %s6, %s849
        %p851 = scmp.lt.s32.totalorder %s42, 1
        %s852 = scalar_select %p851, %s42, 1
        %s853 = smul.addr %s852, 2
        %s854 = smul.addr %s853, 4
        %s855 = scalar_lea.vmem %s7, %s854
        %p856 = scmp.lt.s32.totalorder %s42, 1
        %s857 = scalar_select %p856, %s42, 1
        %s858 = scalar_lea.vmem %s8, %s857
        %p859 = scmp.lt.s32.totalorder %s42, 1
        %s860 = scalar_select %p859, %s42, 1
        %s861 = scalar_lea.vmem %s9, %s860
        %p862 = scmp.lt.s32.totalorder %s42, 1
        %s863 = scalar_select %p862, %s42, 1
        %s864 = scalar_lea.vmem %s10, %s863
        %p865 = scmp.lt.s32.totalorder %s42, 1
        %s866 = scalar_select %p865, %s42, 1
        %s867 = smul.addr %s866, 2
        %s868 = smul.addr %s867, 4
        %s869 = scalar_lea.vmem %s11, %s868
        %p870 = scmp.lt.s32.totalorder %s42, 1
        %s871 = scalar_select %p870, %s42, 1
        %s872 = scalar_lea.vmem %s12, %s871
        %p873 = scmp.lt.s32.totalorder %s42, 1
        %s874 = scalar_select %p873, %s42, 1
        %s875 = smul.addr %s874, 8
        %s876 = smul.addr %s875, 4
        %s877 = scalar_lea.vmem %s13, %s876
        %p878 = scmp.lt.s32.totalorder %s42, 1
        %s879 = scalar_select %p878, %s42, 1
        %s880 = scalar_lea.vmem %s14, %s879
        %p881 = scmp.lt.s32.totalorder %s42, 1
        %s882 = scalar_select %p881, %s42, 1
        %s883 = scalar_lea.vmem %s15, %s882
        %p884 = scmp.lt.s32.totalorder %s42, 1
        %s885 = scalar_select %p884, %s42, 1
        %s886 = scalar_lea.vmem %s16, %s885
        %p888 = scmp.eq.s32.totalorder %s42, 0
        // Predicated region
        $region105: #{tpu_custom_call.1} parent=103 // pred_check
          %p889 = pneg %p888
        $region106: #{tpu_custom_call.1} parent=103 // pred_check_branch
          %891 = sbr.rel (%p889) target = $region108
        $region107: #{tpu_custom_call.1} parent=103 // pred_region
          %v892 = vld [vmem:[%s840] sm:$0xf]
          %v893 = vld [vmem:[%s840 + $0x4] sm:$0xf]
          %v894 = vld [vmem:[%s840 + $0x8] sm:$0xf]
          %v895 = vld [vmem:[%s840 + $0xc] sm:$0xf]
          %v896 = vld [vmem:[%s840 + $0x10] sm:$0xf]
          %v897 = vld [vmem:[%s840 + $0x14] sm:$0xf]
          %v898 = vld [vmem:[%s840 + $0x18] sm:$0xf]
          %v899 = vld [vmem:[%s840 + $0x1c] sm:$0xf]
          %v900 = vld [vmem:[%s3] sm:$0x3]
          %v909 = vunpack.c.l.b16 %v892
          %v910 = vunpack.c.l.b16 %v893
          %v911 = vunpack.c.l.b16 %v894
          %v912 = vunpack.c.l.b16 %v895
          %v913 = vunpack.c.l.b16 %v896
          %v914 = vunpack.c.l.b16 %v897
          %v915 = vunpack.c.l.b16 %v898
          %v916 = vunpack.c.l.b16 %v899
          %v917 = vpack.c.b16 %v910, %v909
          %v918 = vpack.c.b16 %v912, %v911
          %v919 = vpack.c.b16 %v914, %v913
          %v920 = vpack.c.b16 %v916, %v915
          %vm921 = vcmask 31744
          %v923 = vsel %vm921, %v917, 0
          %v926 = vsel %vm921, %v918, 0
          %v929 = vsel %vm921, %v919, 0
          %v932 = vsel %vm921, %v920, 0
          %vm934 = vcmask 1041408
          %v936 = vsel %vm934, %v900, 0
          %938 = vmatpush.bf16.msra.mxu0 0
          %939 = vmatpush.bf16.msra.mxu0 0
          %940 = vmatpush.bf16.msra.mxu0 0
          %941 = vmatpush.bf16.msra.mxu0 0
          %942 = vmatpush.bf16.msra.mxu0 0
          %943 = vmatpush.bf16.msra.mxu0 0
          %944 = vmatpush.bf16.msra.mxu0 0
          %945 = vmatpush.bf16.msra.mxu0 %v936
          %946 = vmatmul.bf16.gmra.mxu0 %v923
          %v947 = vpop.f32.mrf.mxu0
          %v948 = vadd.f32 0.0, %v947
          %v949 = vpop.f32.mrf.mxu0
          %v950 = vadd.f32 0.0, %v949
          %951 = vmatmul.bf16.gmra.mxu0 %v926
          %v952 = vpop.f32.mrf.mxu0
          %v953 = vadd.f32 0.0, %v952
          %v954 = vpop.f32.mrf.mxu0
          %v955 = vadd.f32 0.0, %v954
          %956 = vmatmul.bf16.gmra.mxu0 %v929
          %v957 = vpop.f32.mrf.mxu0
          %v958 = vadd.f32 0.0, %v957
          %v959 = vpop.f32.mrf.mxu0
          %v960 = vadd.f32 0.0, %v959
          %961 = vmatmul.bf16.gmra.mxu0 %v932
          %v962 = vpop.f32.mrf.mxu0
          %v963 = vadd.f32 0.0, %v962
          %v964 = vpop.f32.mrf.mxu0
          %v965 = vadd.f32 0.0, %v964
          %966 = vdwg.mxu0
          %v967 = vld [vmem:[%s4] sm:$0x1]
          %v969 = vperm.slane %v967, 0
          %v971 = vadd.f32 %v948, %v969
          %v972 = vadd.f32 %v950, %v969
          %v973 = vadd.f32 %v953, %v969
          %v974 = vadd.f32 %v955, %v969
          %v975 = vadd.f32 %v958, %v969
          %v976 = vadd.f32 %v960, %v969
          %v977 = vadd.f32 %v963, %v969
          %v978 = vadd.f32 %v965, %v969
          %v979 = vld [vmem:[%s1 + $0x1] sm:$0xff]
          %v980 = vadd.f32 %v971, %v979
          %v981 = vadd.f32 %v972, %v979
          %v982 = vadd.f32 %v973, %v979
          %v983 = vadd.f32 %v974, %v979
          %v984 = vadd.f32 %v975, %v979
          %v985 = vadd.f32 %v976, %v979
          %v986 = vadd.f32 %v977, %v979
          %v987 = vadd.f32 %v978, %v979
          %vm988 = vcmask 130048
          %989 = vst.msk [vmem:[#allocation2 + $0x1] sm:$0xff] %vm988, %v980
          %990 = vst.msk [vmem:[#allocation2 + $0x11] sm:$0xff] %vm988, %v981
          %991 = vst.msk [vmem:[#allocation2 + $0x21] sm:$0xff] %vm988, %v982
          %992 = vst.msk [vmem:[#allocation2 + $0x31] sm:$0xff] %vm988, %v983
          %993 = vst.msk [vmem:[#allocation2 + $0x41] sm:$0xff] %vm988, %v984
          %994 = vst.msk [vmem:[#allocation2 + $0x51] sm:$0xff] %vm988, %v985
          %995 = vst.msk [vmem:[#allocation2 + $0x61] sm:$0xff] %vm988, %v986
          %996 = vst.msk [vmem:[#allocation2 + $0x71] sm:$0xff] %vm988, %v987
          %v997 = vld [vmem:[%s2] sm:$0x1]
          %v998 = vld [vmem:[%s1] sm:$0x1]
          %v999 = vadd.f32 %v997, %v998
          %vm1000 = vcmask 122880
          %1001 = vst.msk [vmem:[#allocation2] sm:$0x1] %vm1000, %v999
          %1002 = vst.msk [vmem:[#allocation2 + $0x10] sm:$0x1] %vm1000, %v999
          %1003 = vst.msk [vmem:[#allocation2 + $0x20] sm:$0x1] %vm1000, %v999
          %1004 = vst.msk [vmem:[#allocation2 + $0x30] sm:$0x1] %vm1000, %v999
          %1005 = vst.msk [vmem:[#allocation2 + $0x40] sm:$0x1] %vm1000, %v999
          %1006 = vst.msk [vmem:[#allocation2 + $0x50] sm:$0x1] %vm1000, %v999
          %1007 = vst.msk [vmem:[#allocation2 + $0x60] sm:$0x1] %vm1000, %v999
          %1008 = vst.msk [vmem:[#allocation2 + $0x70] sm:$0x1] %vm1000, %v999
        $region108: #{tpu_custom_call.1} parent=103 // pred_fallthru
          _
        %v1009 = vld [vmem:[#allocation2] sm:$0xff]
        %v1010 = vld [vmem:[#allocation2 + $0x8] sm:$0x1]
        %v1011 = vld [vmem:[#allocation2 + $0x10] sm:$0xff]
        %v1012 = vld [vmem:[#allocation2 + $0x18] sm:$0x1]
        %v1013 = vld [vmem:[#allocation2 + $0x20] sm:$0xff]
        %v1014 = vld [vmem:[#allocation2 + $0x28] sm:$0x1]
        %v1015 = vld [vmem:[#allocation2 + $0x30] sm:$0xff]
        %v1016 = vld [vmem:[#allocation2 + $0x38] sm:$0x1]
        %v1017 = vld [vmem:[#allocation2 + $0x40] sm:$0xff]
        %v1018 = vld [vmem:[#allocation2 + $0x48] sm:$0x1]
        %v1019 = vld [vmem:[#allocation2 + $0x50] sm:$0xff]
        %v1020 = vld [vmem:[#allocation2 + $0x58] sm:$0x1]
        %v1021 = vld [vmem:[#allocation2 + $0x60] sm:$0xff]
        %v1022 = vld [vmem:[#allocation2 + $0x68] sm:$0x1]
        %v1023 = vld [vmem:[#allocation2 + $0x70] sm:$0xff]
        %v1024 = vld [vmem:[#allocation2 + $0x78] sm:$0x1]
        %v1041 = vrot.slane %v1009, 1
        %v1042 = vrot.slane %v1009, 2
        %v1043 = vrot.slane %v1009, 3
        %v1044 = vrot.slane %v1009, 4
        %v1045 = vrot.slane %v1009, 5
        %v1046 = vrot.slane %v1009, 6
        %v1047 = vrot.slane %v1009, 7
        %v1048 = vrot.slane %v1011, 1
        %v1049 = vrot.slane %v1011, 2
        %v1050 = vrot.slane %v1011, 3
        %v1051 = vrot.slane %v1011, 4
        %v1052 = vrot.slane %v1011, 5
        %v1053 = vrot.slane %v1011, 6
        %v1054 = vrot.slane %v1011, 7
        %v1055 = vrot.slane %v1013, 1
        %v1056 = vrot.slane %v1013, 2
        %v1057 = vrot.slane %v1013, 3
        %v1058 = vrot.slane %v1013, 4
        %v1059 = vrot.slane %v1013, 5
        %v1060 = vrot.slane %v1013, 6
        %v1061 = vrot.slane %v1013, 7
        %v1062 = vrot.slane %v1015, 1
        %v1063 = vrot.slane %v1015, 2
        %v1064 = vrot.slane %v1015, 3
        %v1065 = vrot.slane %v1015, 4
        %v1066 = vrot.slane %v1015, 5
        %v1067 = vrot.slane %v1015, 6
        %v1068 = vrot.slane %v1015, 7
        %v1069 = vrot.slane %v1017, 1
        %v1070 = vrot.slane %v1017, 2
        %v1071 = vrot.slane %v1017, 3
        %v1072 = vrot.slane %v1017, 4
        %v1073 = vrot.slane %v1017, 5
        %v1074 = vrot.slane %v1017, 6
        %v1075 = vrot.slane %v1017, 7
        %v1076 = vrot.slane %v1019, 1
        %v1077 = vrot.slane %v1019, 2
        %v1078 = vrot.slane %v1019, 3
        %v1079 = vrot.slane %v1019, 4
        %v1080 = vrot.slane %v1019, 5
        %v1081 = vrot.slane %v1019, 6
        %v1082 = vrot.slane %v1019, 7
        %v1083 = vrot.slane %v1021, 1
        %v1084 = vrot.slane %v1021, 2
        %v1085 = vrot.slane %v1021, 3
        %v1086 = vrot.slane %v1021, 4
        %v1087 = vrot.slane %v1021, 5
        %v1088 = vrot.slane %v1021, 6
        %v1089 = vrot.slane %v1021, 7
        %v1090 = vrot.slane %v1023, 1
        %v1091 = vrot.slane %v1023, 2
        %v1092 = vrot.slane %v1023, 3
        %v1093 = vrot.slane %v1023, 4
        %v1094 = vrot.slane %v1023, 5
        %v1095 = vrot.slane %v1023, 6
        %v1096 = vrot.slane %v1023, 7
        %1153 = vst [vmem:[#allocation1] ss:$9 sm:$0xff] %v1009
        %s1154 = scalar_lea.vmem [#allocation1], 1
        %1155 = vst [vmem:[%s1154] ss:$9 sm:$0xff] %v1041
        %s1156 = scalar_lea.vmem [#allocation1], 2
        %1157 = vst [vmem:[%s1156] ss:$9 sm:$0xff] %v1042
        %s1158 = scalar_lea.vmem [#allocation1], 3
        %1159 = vst [vmem:[%s1158] ss:$9 sm:$0xff] %v1043
        %s1160 = scalar_lea.vmem [#allocation1], 4
        %1161 = vst [vmem:[%s1160] ss:$9 sm:$0xff] %v1044
        %s1162 = scalar_lea.vmem [#allocation1], 5
        %1163 = vst [vmem:[%s1162] ss:$9 sm:$0xff] %v1045
        %s1164 = scalar_lea.vmem [#allocation1], 6
        %1165 = vst [vmem:[%s1164] ss:$9 sm:$0xff] %v1046
        %s1166 = scalar_lea.vmem [#allocation1], 7
        %1167 = vst [vmem:[%s1166] ss:$9 sm:$0xff] %v1047
        %v1168 = vld [vmem:[#allocation1] sm:$0xff]
        %1169 = vst [vmem:[#allocation1] ss:$9 sm:$0xff] %v1010
        %1170 = vst [vmem:[%s1154] ss:$9 sm:$0xff] %v1011
        %1171 = vst [vmem:[%s1156] ss:$9 sm:$0xff] %v1048
        %1172 = vst [vmem:[%s1158] ss:$9 sm:$0xff] %v1049
        %1173 = vst [vmem:[%s1160] ss:$9 sm:$0xff] %v1050
        %1174 = vst [vmem:[%s1162] ss:$9 sm:$0xff] %v1051
        %1175 = vst [vmem:[%s1164] ss:$9 sm:$0xff] %v1052
        %1176 = vst [vmem:[%s1166] ss:$9 sm:$0xff] %v1053
        %v1177 = vld [vmem:[#allocation1] sm:$0xff]
        %1178 = vst [vmem:[#allocation1] ss:$9 sm:$0xff] %v1054
        %1179 = vst [vmem:[%s1154] ss:$9 sm:$0xff] %v1012
        %1180 = vst [vmem:[%s1156] ss:$9 sm:$0xff] %v1013
        %1181 = vst [vmem:[%s1158] ss:$9 sm:$0xff] %v1055
        %1182 = vst [vmem:[%s1160] ss:$9 sm:$0xff] %v1056
        %1183 = vst [vmem:[%s1162] ss:$9 sm:$0xff] %v1057
        %1184 = vst [vmem:[%s1164] ss:$9 sm:$0xff] %v1058
        %1185 = vst [vmem:[%s1166] ss:$9 sm:$0xff] %v1059
        %v1186 = vld [vmem:[#allocation1] sm:$0xff]
        %1187 = vst [vmem:[#allocation1] ss:$9 sm:$0xff] %v1060
        %1188 = vst [vmem:[%s1154] ss:$9 sm:$0xff] %v1061
        %1189 = vst [vmem:[%s1156] ss:$9 sm:$0xff] %v1014
        %1190 = vst [vmem:[%s1158] ss:$9 sm:$0xff] %v1015
        %1191 = vst [vmem:[%s1160] ss:$9 sm:$0xff] %v1062
        %1192 = vst [vmem:[%s1162] ss:$9 sm:$0xff] %v1063
        %1193 = vst [vmem:[%s1164] ss:$9 sm:$0xff] %v1064
        %1194 = vst [vmem:[%s1166] ss:$9 sm:$0xff] %v1065
        %v1195 = vld [vmem:[#allocation1] sm:$0xff]
        %1196 = vst [vmem:[#allocation1] ss:$9 sm:$0xff] %v1066
        %1197 = vst [vmem:[%s1154] ss:$9 sm:$0xff] %v1067
        %1198 = vst [vmem:[%s1156] ss:$9 sm:$0xff] %v1068
        %1199 = vst [vmem:[%s1158] ss:$9 sm:$0xff] %v1016
        %1200 = vst [vmem:[%s1160] ss:$9 sm:$0xff] %v1017
        %1201 = vst [vmem:[%s1162] ss:$9 sm:$0xff] %v1069
        %1202 = vst [vmem:[%s1164] ss:$9 sm:$0xff] %v1070
        %1203 = vst [vmem:[%s1166] ss:$9 sm:$0xff] %v1071
        %v1204 = vld [vmem:[#allocation1] sm:$0xff]
        %1205 = vst [vmem:[#allocation1] ss:$9 sm:$0xff] %v1072
        %1206 = vst [vmem:[%s1154] ss:$9 sm:$0xff] %v1073
        %1207 = vst [vmem:[%s1156] ss:$9 sm:$0xff] %v1074
        %1208 = vst [vmem:[%s1158] ss:$9 sm:$0xff] %v1075
        %1209 = vst [vmem:[%s1160] ss:$9 sm:$0xff] %v1018
        %1210 = vst [vmem:[%s1162] ss:$9 sm:$0xff] %v1019
        %1211 = vst [vmem:[%s1164] ss:$9 sm:$0xff] %v1076
        %1212 = vst [vmem:[%s1166] ss:$9 sm:$0xff] %v1077
        %v1213 = vld [vmem:[#allocation1] sm:$0xff]
        %1214 = vst [vmem:[#allocation1] ss:$9 sm:$0xff] %v1078
        %1215 = vst [vmem:[%s1154] ss:$9 sm:$0xff] %v1079
        %1216 = vst [vmem:[%s1156] ss:$9 sm:$0xff] %v1080
        %1217 = vst [vmem:[%s1158] ss:$9 sm:$0xff] %v1081
        %1218 = vst [vmem:[%s1160] ss:$9 sm:$0xff] %v1082
        %1219 = vst [vmem:[%s1162] ss:$9 sm:$0xff] %v1020
        %1220 = vst [vmem:[%s1164] ss:$9 sm:$0xff] %v1021
        %1221 = vst [vmem:[%s1166] ss:$9 sm:$0xff] %v1083
        %v1222 = vld [vmem:[#allocation1] sm:$0xff]
        %1223 = vst [vmem:[#allocation1] ss:$9 sm:$0xff] %v1084
        %1224 = vst [vmem:[%s1154] ss:$9 sm:$0xff] %v1085
        %1225 = vst [vmem:[%s1156] ss:$9 sm:$0xff] %v1086
        %1226 = vst [vmem:[%s1158] ss:$9 sm:$0xff] %v1087
        %1227 = vst [vmem:[%s1160] ss:$9 sm:$0xff] %v1088
        %1228 = vst [vmem:[%s1162] ss:$9 sm:$0xff] %v1089
        %1229 = vst [vmem:[%s1164] ss:$9 sm:$0xff] %v1022
        %1230 = vst [vmem:[%s1166] ss:$9 sm:$0xff] %v1023
        %v1231 = vld [vmem:[#allocation1] sm:$0xff]
        %1232 = vst [vmem:[#allocation1] ss:$9 sm:$0xff] %v1090
        %1233 = vst [vmem:[%s1154] ss:$9 sm:$0xff] %v1091
        %1234 = vst [vmem:[%s1156] ss:$9 sm:$0xff] %v1092
        %1235 = vst [vmem:[%s1158] ss:$9 sm:$0xff] %v1093
        %1236 = vst [vmem:[%s1160] ss:$9 sm:$0xff] %v1094
        %1237 = vst [vmem:[%s1162] ss:$9 sm:$0xff] %v1095
        %1238 = vst [vmem:[%s1164] ss:$9 sm:$0xff] %v1096
        %1239 = vst [vmem:[%s1166] ss:$9 sm:$0xff] %v1024
        %v1240 = vld [vmem:[#allocation1] sm:$0xff]
        %v1250 = vpack.c.bf16 %v1177, %v1168
        %v1251 = vpack.c.bf16 %v1195, %v1186
        %v1252 = vpack.c.bf16 %v1213, %v1204
        %v1253 = vpack.c.bf16 %v1231, %v1222
        %v1254 = vpack.c.bf16 %v1240, %v1240
        %v1255 = vld [vmem:[%s846] sm:$0xf]
        %v1256 = vld [vmem:[%s846 + $0x4] sm:$0xf]
        %v1257 = vld [vmem:[%s850] sm:$0x1]
        %v1259 = vperm.slane %v1257, 0
        %v1263 = vunpack.c.l.b16 %v1255
        %v1264 = vunpack.c.l.b16 %v1256
        %v1265 = vpack.c.b16 %v1264, %v1263
        %vm1267 = vcmask 130048
        %v1269 = vsel %vm1267, %v1250, 0
        %v1272 = vsel %vm1267, %v1251, 0
        %v1275 = vsel %vm1267, %v1252, 0
        %v1278 = vsel %vm1267, %v1253, 0
        %v1281 = vsel %vm1267, %v1254, 0
        %1283 = vmatpush.bf16.msra.mxu0 0
        %1284 = vmatpush.bf16.msra.mxu0 0
        %1285 = vmatpush.bf16.msra.mxu0 0
        %1286 = vmatpush.bf16.msra.mxu0 0
        %1287 = vmatpush.bf16.msra.mxu0 0
        %1288 = vmatpush.bf16.msra.mxu0 0
        %1289 = vmatpush.bf16.msra.mxu0 0
        %1290 = vmatpush.bf16.msra.mxu0 %v1265
        %1291 = vmatmul.bf16.gmra.mxu0 %v1269
        %v1292 = vpop.f32.mrf.mxu0
        %v1293 = vadd.f32 %v1259, %v1292
        %v1294 = vpop.f32.mrf.mxu0
        %v1295 = vadd.f32 %v1259, %v1294
        %1296 = vmatmul.bf16.gmra.mxu0 %v1272
        %v1297 = vpop.f32.mrf.mxu0
        %v1298 = vadd.f32 %v1259, %v1297
        %v1299 = vpop.f32.mrf.mxu0
        %v1300 = vadd.f32 %v1259, %v1299
        %1301 = vmatmul.bf16.gmra.mxu0 %v1275
        %v1302 = vpop.f32.mrf.mxu0
        %v1303 = vadd.f32 %v1259, %v1302
        %v1304 = vpop.f32.mrf.mxu0
        %v1305 = vadd.f32 %v1259, %v1304
        %1306 = vmatmul.bf16.gmra.mxu0 %v1278
        %v1307 = vpop.f32.mrf.mxu0
        %v1308 = vadd.f32 %v1259, %v1307
        %v1309 = vpop.f32.mrf.mxu0
        %v1310 = vadd.f32 %v1259, %v1309
        %1311 = vmatmul.bf16.gmra.mxu0 %v1281
        %v1312 = vpop.f32.mrf.mxu0
        %v1313 = vadd.f32 %v1259, %v1312
        %v1314 = vpop.f32.mrf.mxu0
        %1315 = vdwg.mxu0
        %s1316 = scalar_lea.vmem %s846, 8
        %v1317 = vld [vmem:[%s1316] sm:$0xf]
        %v1318 = vld [vmem:[%s1316 + $0x4] sm:$0xf]
        %s1319 = scalar_lea.vmem %s850, 1
        %v1320 = vld [vmem:[%s1319] sm:$0x1]
        %v1322 = vperm.slane %v1320, 0
        %v1326 = vunpack.c.l.b16 %v1317
        %v1327 = vunpack.c.l.b16 %v1318
        %v1328 = vpack.c.b16 %v1327, %v1326
        %1330 = vmatpush.bf16.msra.mxu0 0
        %1331 = vmatpush.bf16.msra.mxu0 0
        %1332 = vmatpush.bf16.msra.mxu0 0
        %1333 = vmatpush.bf16.msra.mxu0 0
        %1334 = vmatpush.bf16.msra.mxu0 0
        %1335 = vmatpush.bf16.msra.mxu0 0
        %1336 = vmatpush.bf16.msra.mxu0 0
        %1337 = vmatpush.bf16.msra.mxu0 %v1328
        %1338 = vmatmul.bf16.gmra.mxu0 %v1269
        %v1339 = vpop.f32.mrf.mxu0
        %v1340 = vadd.f32 %v1322, %v1339
        %v1341 = vpop.f32.mrf.mxu0
        %v1342 = vadd.f32 %v1322, %v1341
        %1343 = vmatmul.bf16.gmra.mxu0 %v1272
        %v1344 = vpop.f32.mrf.mxu0
        %v1345 = vadd.f32 %v1322, %v1344
        %v1346 = vpop.f32.mrf.mxu0
        %v1347 = vadd.f32 %v1322, %v1346
        %1348 = vmatmul.bf16.gmra.mxu0 %v1275
        %v1349 = vpop.f32.mrf.mxu0
        %v1350 = vadd.f32 %v1322, %v1349
        %v1351 = vpop.f32.mrf.mxu0
        %v1352 = vadd.f32 %v1322, %v1351
        %1353 = vmatmul.bf16.gmra.mxu0 %v1278
        %v1354 = vpop.f32.mrf.mxu0
        %v1355 = vadd.f32 %v1322, %v1354
        %v1356 = vpop.f32.mrf.mxu0
        %v1357 = vadd.f32 %v1322, %v1356
        %1358 = vmatmul.bf16.gmra.mxu0 %v1281
        %v1359 = vpop.f32.mrf.mxu0
        %v1360 = vadd.f32 %v1322, %v1359
        %v1361 = vpop.f32.mrf.mxu0
        %1362 = vdwg.mxu0
        %s1363 = scalar_lea.vmem %s846, 16
        %v1364 = vld [vmem:[%s1363] sm:$0xf]
        %v1365 = vld [vmem:[%s1363 + $0x4] sm:$0xf]
        %s1366 = scalar_lea.vmem %s850, 2
        %v1367 = vld [vmem:[%s1366] sm:$0x1]
        %v1369 = vperm.slane %v1367, 0
        %v1373 = vunpack.c.l.b16 %v1364
        %v1374 = vunpack.c.l.b16 %v1365
        %v1375 = vpack.c.b16 %v1374, %v1373
        %1377 = vmatpush.bf16.msra.mxu0 0
        %1378 = vmatpush.bf16.msra.mxu0 0
        %1379 = vmatpush.bf16.msra.mxu0 0
        %1380 = vmatpush.bf16.msra.mxu0 0
        %1381 = vmatpush.bf16.msra.mxu0 0
        %1382 = vmatpush.bf16.msra.mxu0 0
        %1383 = vmatpush.bf16.msra.mxu0 0
        %1384 = vmatpush.bf16.msra.mxu0 %v1375
        %1385 = vmatmul.bf16.gmra.mxu0 %v1269
        %v1386 = vpop.f32.mrf.mxu0
        %v1387 = vadd.f32 %v1369, %v1386
        %v1388 = vpop.f32.mrf.mxu0
        %v1389 = vadd.f32 %v1369, %v1388
        %1390 = vmatmul.bf16.gmra.mxu0 %v1272
        %v1391 = vpop.f32.mrf.mxu0
        %v1392 = vadd.f32 %v1369, %v1391
        %v1393 = vpop.f32.mrf.mxu0
        %v1394 = vadd.f32 %v1369, %v1393
        %1395 = vmatmul.bf16.gmra.mxu0 %v1275
        %v1396 = vpop.f32.mrf.mxu0
        %v1397 = vadd.f32 %v1369, %v1396
        %v1398 = vpop.f32.mrf.mxu0
        %v1399 = vadd.f32 %v1369, %v1398
        %1400 = vmatmul.bf16.gmra.mxu0 %v1278
        %v1401 = vpop.f32.mrf.mxu0
        %v1402 = vadd.f32 %v1369, %v1401
        %v1403 = vpop.f32.mrf.mxu0
        %v1404 = vadd.f32 %v1369, %v1403
        %1405 = vmatmul.bf16.gmra.mxu0 %v1281
        %v1406 = vpop.f32.mrf.mxu0
        %v1407 = vadd.f32 %v1369, %v1406
        %v1408 = vpop.f32.mrf.mxu0
        %1409 = vdwg.mxu0
        %v1419 = vrot.slane %v1293, 1
        %v1420 = vrot.slane %v1293, 2
        %v1421 = vrot.slane %v1293, 3
        %v1422 = vrot.slane %v1293, 4
        %v1423 = vrot.slane %v1293, 5
        %v1424 = vrot.slane %v1293, 6
        %v1425 = vrot.slane %v1293, 7
        %v1426 = vrot.slane %v1295, 1
        %v1427 = vrot.slane %v1295, 2
        %v1428 = vrot.slane %v1295, 3
        %v1429 = vrot.slane %v1295, 4
        %v1430 = vrot.slane %v1295, 5
        %v1431 = vrot.slane %v1295, 6
        %v1432 = vrot.slane %v1295, 7
        %v1433 = vrot.slane %v1298, 1
        %v1434 = vrot.slane %v1298, 2
        %v1435 = vrot.slane %v1298, 3
        %v1436 = vrot.slane %v1298, 4
        %v1437 = vrot.slane %v1298, 5
        %v1438 = vrot.slane %v1298, 6
        %v1439 = vrot.slane %v1298, 7
        %v1440 = vrot.slane %v1300, 1
        %v1441 = vrot.slane %v1300, 2
        %v1442 = vrot.slane %v1300, 3
        %v1443 = vrot.slane %v1300, 4
        %v1444 = vrot.slane %v1300, 5
        %v1445 = vrot.slane %v1300, 6
        %v1446 = vrot.slane %v1300, 7
        %v1447 = vrot.slane %v1303, 1
        %v1448 = vrot.slane %v1303, 2
        %v1449 = vrot.slane %v1303, 3
        %v1450 = vrot.slane %v1303, 4
        %v1451 = vrot.slane %v1303, 5
        %v1452 = vrot.slane %v1303, 6
        %v1453 = vrot.slane %v1303, 7
        %v1454 = vrot.slane %v1305, 1
        %v1455 = vrot.slane %v1305, 2
        %v1456 = vrot.slane %v1305, 3
        %v1457 = vrot.slane %v1305, 4
        %v1458 = vrot.slane %v1305, 5
        %v1459 = vrot.slane %v1305, 6
        %v1460 = vrot.slane %v1305, 7
        %v1461 = vrot.slane %v1308, 1
        %v1462 = vrot.slane %v1308, 2
        %v1463 = vrot.slane %v1308, 3
        %v1464 = vrot.slane %v1308, 4
        %v1465 = vrot.slane %v1308, 5
        %v1466 = vrot.slane %v1308, 6
        %v1467 = vrot.slane %v1308, 7
        %v1468 = vrot.slane %v1310, 1
        %v1469 = vrot.slane %v1310, 2
        %v1470 = vrot.slane %v1310, 3
        %v1471 = vrot.slane %v1310, 4
        %v1472 = vrot.slane %v1310, 5
        %v1473 = vrot.slane %v1310, 6
        %v1474 = vrot.slane %v1310, 7
        %v1475 = vrot.slane %v1313, 1
        %v1476 = vrot.slane %v1313, 2
        %v1477 = vrot.slane %v1313, 3
        %v1478 = vrot.slane %v1313, 4
        %v1479 = vrot.slane %v1313, 5
        %v1480 = vrot.slane %v1313, 6
        %v1481 = vrot.slane %v1313, 7
        %1482 = vst [vmem:[#allocation1] ss:$9 sm:$0xff] %v1293
        %s1483 = scalar_lea.vmem [#allocation1], 1
        %1484 = vst [vmem:[%s1483] ss:$9 sm:$0xff] %v1419
        %s1485 = scalar_lea.vmem [#allocation1], 2
        %1486 = vst [vmem:[%s1485] ss:$9 sm:$0xff] %v1420
        %s1487 = scalar_lea.vmem [#allocation1], 3
        %1488 = vst [vmem:[%s1487] ss:$9 sm:$0xff] %v1421
        %s1489 = scalar_lea.vmem [#allocation1], 4
        %1490 = vst [vmem:[%s1489] ss:$9 sm:$0xff] %v1422
        %s1491 = scalar_lea.vmem [#allocation1], 5
        %1492 = vst [vmem:[%s1491] ss:$9 sm:$0xff] %v1423
        %s1493 = scalar_lea.vmem [#allocation1], 6
        %1494 = vst [vmem:[%s1493] ss:$9 sm:$0xff] %v1424
        %s1495 = scalar_lea.vmem [#allocation1], 7
        %1496 = vst [vmem:[%s1495] ss:$9 sm:$0xff] %v1425
        %v1497 = vld [vmem:[#allocation1] sm:$0xff]
        %1498 = vst [vmem:[#allocation1] ss:$9 sm:$0xff] %v1295
        %v1499 = vld [vmem:[#allocation1] sm:$0xff]
        %1500 = vst [vmem:[#allocation1] ss:$9 sm:$0xff] %v1426
        %1501 = vst [vmem:[%s1483] ss:$9 sm:$0xff] %v1427
        %1502 = vst [vmem:[%s1485] ss:$9 sm:$0xff] %v1428
        %1503 = vst [vmem:[%s1487] ss:$9 sm:$0xff] %v1429
        %1504 = vst [vmem:[%s1489] ss:$9 sm:$0xff] %v1430
        %1505 = vst [vmem:[%s1491] ss:$9 sm:$0xff] %v1431
        %1506 = vst [vmem:[%s1493] ss:$9 sm:$0xff] %v1432
        %1507 = vst [vmem:[%s1495] ss:$9 sm:$0xff] %v1298
        %v1508 = vld [vmem:[#allocation1] sm:$0xff]
        %1509 = vst [vmem:[#allocation1] ss:$9 sm:$0xff] %v1433
        %v1510 = vld [vmem:[#allocation1] sm:$0xff]
        %1511 = vst [vmem:[#allocation1] ss:$9 sm:$0xff] %v1434
        %1512 = vst [vmem:[%s1483] ss:$9 sm:$0xff] %v1435
        %1513 = vst [vmem:[%s1485] ss:$9 sm:$0xff] %v1436
        %1514 = vst [vmem:[%s1487] ss:$9 sm:$0xff] %v1437
        %1515 = vst [vmem:[%s1489] ss:$9 sm:$0xff] %v1438
        %1516 = vst [vmem:[%s1491] ss:$9 sm:$0xff] %v1439
        %1517 = vst [vmem:[%s1493] ss:$9 sm:$0xff] %v1300
        %1518 = vst [vmem:[%s1495] ss:$9 sm:$0xff] %v1440
        %v1519 = vld [vmem:[#allocation1] sm:$0xff]
        %1520 = vst [vmem:[#allocation1] ss:$9 sm:$0xff] %v1441
        %v1521 = vld [vmem:[#allocation1] sm:$0xff]
        %1522 = vst [vmem:[#allocation1] ss:$9 sm:$0xff] %v1442
        %1523 = vst [vmem:[%s1483] ss:$9 sm:$0xff] %v1443
        %1524 = vst [vmem:[%s1485] ss:$9 sm:$0xff] %v1444
        %1525 = vst [vmem:[%s1487] ss:$9 sm:$0xff] %v1445
        %1526 = vst [vmem:[%s1489] ss:$9 sm:$0xff] %v1446
        %1527 = vst [vmem:[%s1491] ss:$9 sm:$0xff] %v1303
        %1528 = vst [vmem:[%s1493] ss:$9 sm:$0xff] %v1447
        %1529 = vst [vmem:[%s1495] ss:$9 sm:$0xff] %v1448
        %v1530 = vld [vmem:[#allocation1] sm:$0xff]
        %1531 = vst [vmem:[#allocation1] ss:$9 sm:$0xff] %v1449
        %v1532 = vld [vmem:[#allocation1] sm:$0xff]
        %1533 = vst [vmem:[#allocation1] ss:$9 sm:$0xff] %v1450
        %1534 = vst [vmem:[%s1483] ss:$9 sm:$0xff] %v1451
        %1535 = vst [vmem:[%s1485] ss:$9 sm:$0xff] %v1452
        %1536 = vst [vmem:[%s1487] ss:$9 sm:$0xff] %v1453
        %1537 = vst [vmem:[%s1489] ss:$9 sm:$0xff] %v1305
        %1538 = vst [vmem:[%s1491] ss:$9 sm:$0xff] %v1454
        %1539 = vst [vmem:[%s1493] ss:$9 sm:$0xff] %v1455
        %1540 = vst [vmem:[%s1495] ss:$9 sm:$0xff] %v1456
        %v1541 = vld [vmem:[#allocation1] sm:$0xff]
        %1542 = vst [vmem:[#allocation1] ss:$9 sm:$0xff] %v1457
        %v1543 = vld [vmem:[#allocation1] sm:$0xff]
        %1544 = vst [vmem:[#allocation1] ss:$9 sm:$0xff] %v1458
        %1545 = vst [vmem:[%s1483] ss:$9 sm:$0xff] %v1459
        %1546 = vst [vmem:[%s1485] ss:$9 sm:$0xff] %v1460
        %1547 = vst [vmem:[%s1487] ss:$9 sm:$0xff] %v1308
        %1548 = vst [vmem:[%s1489] ss:$9 sm:$0xff] %v1461
        %1549 = vst [vmem:[%s1491] ss:$9 sm:$0xff] %v1462
        %1550 = vst [vmem:[%s1493] ss:$9 sm:$0xff] %v1463
        %1551 = vst [vmem:[%s1495] ss:$9 sm:$0xff] %v1464
        %v1552 = vld [vmem:[#allocation1] sm:$0xff]
        %1553 = vst [vmem:[#allocation1] ss:$9 sm:$0xff] %v1465
        %v1554 = vld [vmem:[#allocation1] sm:$0xff]
        %1555 = vst [vmem:[#allocation1] ss:$9 sm:$0xff] %v1466
        %1556 = vst [vmem:[%s1483] ss:$9 sm:$0xff] %v1467
        %1557 = vst [vmem:[%s1485] ss:$9 sm:$0xff] %v1310
        %1558 = vst [vmem:[%s1487] ss:$9 sm:$0xff] %v1468
        %1559 = vst [vmem:[%s1489] ss:$9 sm:$0xff] %v1469
        %1560 = vst [vmem:[%s1491] ss:$9 sm:$0xff] %v1470
        %1561 = vst [vmem:[%s1493] ss:$9 sm:$0xff] %v1471
        %1562 = vst [vmem:[%s1495] ss:$9 sm:$0xff] %v1472
        %v1563 = vld [vmem:[#allocation1] sm:$0xff]
        %1564 = vst [vmem:[#allocation1] ss:$9 sm:$0xff] %v1473
        %v1565 = vld [vmem:[#allocation1] sm:$0xff]
        %1566 = vst [vmem:[#allocation1] ss:$9 sm:$0xff] %v1474
        %1567 = vst [vmem:[%s1483] ss:$9 sm:$0xff] %v1313
        %1568 = vst [vmem:[%s1485] ss:$9 sm:$0xff] %v1475
        %1569 = vst [vmem:[%s1487] ss:$9 sm:$0xff] %v1476
        %1570 = vst [vmem:[%s1489] ss:$9 sm:$0xff] %v1477
        %1571 = vst [vmem:[%s1491] ss:$9 sm:$0xff] %v1478
        %1572 = vst [vmem:[%s1493] ss:$9 sm:$0xff] %v1479
        %1573 = vst [vmem:[%s1495] ss:$9 sm:$0xff] %v1480
        %v1574 = vld [vmem:[#allocation1] sm:$0xff]
        %1575 = vst [vmem:[#allocation1] ss:$9 sm:$0xff] %v1481
        %v1576 = vld [vmem:[#allocation1] sm:$0xff]
        %v1593 = vpack.c.bf16 %v1497, %v1497
        %v1594 = vpack.c.bf16 %v1499, %v1499
        %v1595 = vpack.c.bf16 %v1508, %v1508
        %v1596 = vpack.c.bf16 %v1510, %v1510
        %v1597 = vpack.c.bf16 %v1519, %v1519
        %v1598 = vpack.c.bf16 %v1521, %v1521
        %v1599 = vpack.c.bf16 %v1530, %v1530
        %v1600 = vpack.c.bf16 %v1532, %v1532
        %v1601 = vpack.c.bf16 %v1541, %v1541
        %v1602 = vpack.c.bf16 %v1543, %v1543
        %v1603 = vpack.c.bf16 %v1552, %v1552
        %v1604 = vpack.c.bf16 %v1554, %v1554
        %v1605 = vpack.c.bf16 %v1563, %v1563
        %v1606 = vpack.c.bf16 %v1565, %v1565
        %v1607 = vpack.c.bf16 %v1574, %v1574
        %v1608 = vpack.c.bf16 %v1576, %v1576
        %v1618 = vrot.slane %v1340, 1
        %v1619 = vrot.slane %v1340, 2
        %v1620 = vrot.slane %v1340, 3
        %v1621 = vrot.slane %v1340, 4
        %v1622 = vrot.slane %v1340, 5
        %v1623 = vrot.slane %v1340, 6
        %v1624 = vrot.slane %v1340, 7
        %v1625 = vrot.slane %v1342, 1
        %v1626 = vrot.slane %v1342, 2
        %v1627 = vrot.slane %v1342, 3
        %v1628 = vrot.slane %v1342, 4
        %v1629 = vrot.slane %v1342, 5
        %v1630 = vrot.slane %v1342, 6
        %v1631 = vrot.slane %v1342, 7
        %v1632 = vrot.slane %v1345, 1
        %v1633 = vrot.slane %v1345, 2
        %v1634 = vrot.slane %v1345, 3
        %v1635 = vrot.slane %v1345, 4
        %v1636 = vrot.slane %v1345, 5
        %v1637 = vrot.slane %v1345, 6
        %v1638 = vrot.slane %v1345, 7
        %v1639 = vrot.slane %v1347, 1
        %v1640 = vrot.slane %v1347, 2
        %v1641 = vrot.slane %v1347, 3
        %v1642 = vrot.slane %v1347, 4
        %v1643 = vrot.slane %v1347, 5
        %v1644 = vrot.slane %v1347, 6
        %v1645 = vrot.slane %v1347, 7
        %v1646 = vrot.slane %v1350, 1
        %v1647 = vrot.slane %v1350, 2
        %v1648 = vrot.slane %v1350, 3
        %v1649 = vrot.slane %v1350, 4
        %v1650 = vrot.slane %v1350, 5
        %v1651 = vrot.slane %v1350, 6
        %v1652 = vrot.slane %v1350, 7
        %v1653 = vrot.slane %v1352, 1
        %v1654 = vrot.slane %v1352, 2
        %v1655 = vrot.slane %v1352, 3
        %v1656 = vrot.slane %v1352, 4
        %v1657 = vrot.slane %v1352, 5
        %v1658 = vrot.slane %v1352, 6
        %v1659 = vrot.slane %v1352, 7
        %v1660 = vrot.slane %v1355, 1
        %v1661 = vrot.slane %v1355, 2
        %v1662 = vrot.slane %v1355, 3
        %v1663 = vrot.slane %v1355, 4
        %v1664 = vrot.slane %v1355, 5
        %v1665 = vrot.slane %v1355, 6
        %v1666 = vrot.slane %v1355, 7
        %v1667 = vrot.slane %v1357, 1
        %v1668 = vrot.slane %v1357, 2
        %v1669 = vrot.slane %v1357, 3
        %v1670 = vrot.slane %v1357, 4
        %v1671 = vrot.slane %v1357, 5
        %v1672 = vrot.slane %v1357, 6
        %v1673 = vrot.slane %v1357, 7
        %v1674 = vrot.slane %v1360, 1
        %v1675 = vrot.slane %v1360, 2
        %v1676 = vrot.slane %v1360, 3
        %v1677 = vrot.slane %v1360, 4
        %v1678 = vrot.slane %v1360, 5
        %v1679 = vrot.slane %v1360, 6
        %v1680 = vrot.slane %v1360, 7
        %1681 = vst [vmem:[#allocation1] ss:$9 sm:$0xff] %v1340
        %s1682 = scalar_lea.vmem [#allocation1], 1
        %1683 = vst [vmem:[%s1682] ss:$9 sm:$0xff] %v1618
        %s1684 = scalar_lea.vmem [#allocation1], 2
        %1685 = vst [vmem:[%s1684] ss:$9 sm:$0xff] %v1619
        %s1686 = scalar_lea.vmem [#allocation1], 3
        %1687 = vst [vmem:[%s1686] ss:$9 sm:$0xff] %v1620
        %s1688 = scalar_lea.vmem [#allocation1], 4
        %1689 = vst [vmem:[%s1688] ss:$9 sm:$0xff] %v1621
        %s1690 = scalar_lea.vmem [#allocation1], 5
        %1691 = vst [vmem:[%s1690] ss:$9 sm:$0xff] %v1622
        %s1692 = scalar_lea.vmem [#allocation1], 6
        %1693 = vst [vmem:[%s1692] ss:$9 sm:$0xff] %v1623
        %s1694 = scalar_lea.vmem [#allocation1], 7
        %1695 = vst [vmem:[%s1694] ss:$9 sm:$0xff] %v1624
        %v1696 = vld [vmem:[#allocation1] sm:$0xff]
        %1697 = vst [vmem:[#allocation1] ss:$9 sm:$0xff] %v1342
        %v1698 = vld [vmem:[#allocation1] sm:$0xff]
        %1699 = vst [vmem:[#allocation1] ss:$9 sm:$0xff] %v1625
        %1700 = vst [vmem:[%s1682] ss:$9 sm:$0xff] %v1626
        %1701 = vst [vmem:[%s1684] ss:$9 sm:$0xff] %v1627
        %1702 = vst [vmem:[%s1686] ss:$9 sm:$0xff] %v1628
        %1703 = vst [vmem:[%s1688] ss:$9 sm:$0xff] %v1629
        %1704 = vst [vmem:[%s1690] ss:$9 sm:$0xff] %v1630
        %1705 = vst [vmem:[%s1692] ss:$9 sm:$0xff] %v1631
        %1706 = vst [vmem:[%s1694] ss:$9 sm:$0xff] %v1345
        %v1707 = vld [vmem:[#allocation1] sm:$0xff]
        %1708 = vst [vmem:[#allocation1] ss:$9 sm:$0xff] %v1632
        %v1709 = vld [vmem:[#allocation1] sm:$0xff]
        %1710 = vst [vmem:[#allocation1] ss:$9 sm:$0xff] %v1633
        %1711 = vst [vmem:[%s1682] ss:$9 sm:$0xff] %v1634
        %1712 = vst [vmem:[%s1684] ss:$9 sm:$0xff] %v1635
        %1713 = vst [vmem:[%s1686] ss:$9 sm:$0xff] %v1636
        %1714 = vst [vmem:[%s1688] ss:$9 sm:$0xff] %v1637
        %1715 = vst [vmem:[%s1690] ss:$9 sm:$0xff] %v1638
        %1716 = vst [vmem:[%s1692] ss:$9 sm:$0xff] %v1347
        %1717 = vst [vmem:[%s1694] ss:$9 sm:$0xff] %v1639
        %v1718 = vld [vmem:[#allocation1] sm:$0xff]
        %1719 = vst [vmem:[#allocation1] ss:$9 sm:$0xff] %v1640
        %v1720 = vld [vmem:[#allocation1] sm:$0xff]
        %1721 = vst [vmem:[#allocation1] ss:$9 sm:$0xff] %v1641
        %1722 = vst [vmem:[%s1682] ss:$9 sm:$0xff] %v1642
        %1723 = vst [vmem:[%s1684] ss:$9 sm:$0xff] %v1643
        %1724 = vst [vmem:[%s1686] ss:$9 sm:$0xff] %v1644
        %1725 = vst [vmem:[%s1688] ss:$9 sm:$0xff] %v1645
        %1726 = vst [vmem:[%s1690] ss:$9 sm:$0xff] %v1350
        %1727 = vst [vmem:[%s1692] ss:$9 sm:$0xff] %v1646
        %1728 = vst [vmem:[%s1694] ss:$9 sm:$0xff] %v1647
        %v1729 = vld [vmem:[#allocation1] sm:$0xff]
        %1730 = vst [vmem:[#allocation1] ss:$9 sm:$0xff] %v1648
        %v1731 = vld [vmem:[#allocation1] sm:$0xff]
        %1732 = vst [vmem:[#allocation1] ss:$9 sm:$0xff] %v1649
        %1733 = vst [vmem:[%s1682] ss:$9 sm:$0xff] %v1650
        %1734 = vst [vmem:[%s1684] ss:$9 sm:$0xff] %v1651
        %1735 = vst [vmem:[%s1686] ss:$9 sm:$0xff] %v1652
        %1736 = vst [vmem:[%s1688] ss:$9 sm:$0xff] %v1352
        %1737 = vst [vmem:[%s1690] ss:$9 sm:$0xff] %v1653
        %1738 = vst [vmem:[%s1692] ss:$9 sm:$0xff] %v1654
        %1739 = vst [vmem:[%s1694] ss:$9 sm:$0xff] %v1655
        %v1740 = vld [vmem:[#allocation1] sm:$0xff]
        %1741 = vst [vmem:[#allocation1] ss:$9 sm:$0xff] %v1656
        %v1742 = vld [vmem:[#allocation1] sm:$0xff]
        %1743 = vst [vmem:[#allocation1] ss:$9 sm:$0xff] %v1657
        %1744 = vst [vmem:[%s1682] ss:$9 sm:$0xff] %v1658
        %1745 = vst [vmem:[%s1684] ss:$9 sm:$0xff] %v1659
        %1746 = vst [vmem:[%s1686] ss:$9 sm:$0xff] %v1355
        %1747 = vst [vmem:[%s1688] ss:$9 sm:$0xff] %v1660
        %1748 = vst [vmem:[%s1690] ss:$9 sm:$0xff] %v1661
        %1749 = vst [vmem:[%s1692] ss:$9 sm:$0xff] %v1662
        %1750 = vst [vmem:[%s1694] ss:$9 sm:$0xff] %v1663
        %v1751 = vld [vmem:[#allocation1] sm:$0xff]
        %1752 = vst [vmem:[#allocation1] ss:$9 sm:$0xff] %v1664
        %v1753 = vld [vmem:[#allocation1] sm:$0xff]
        %1754 = vst [vmem:[#allocation1] ss:$9 sm:$0xff] %v1665
        %1755 = vst [vmem:[%s1682] ss:$9 sm:$0xff] %v1666
        %1756 = vst [vmem:[%s1684] ss:$9 sm:$0xff] %v1357
        %1757 = vst [vmem:[%s1686] ss:$9 sm:$0xff] %v1667
        %1758 = vst [vmem:[%s1688] ss:$9 sm:$0xff] %v1668
        %1759 = vst [vmem:[%s1690] ss:$9 sm:$0xff] %v1669
        %1760 = vst [vmem:[%s1692] ss:$9 sm:$0xff] %v1670
        %1761 = vst [vmem:[%s1694] ss:$9 sm:$0xff] %v1671
        %v1762 = vld [vmem:[#allocation1] sm:$0xff]
        %1763 = vst [vmem:[#allocation1] ss:$9 sm:$0xff] %v1672
        %v1764 = vld [vmem:[#allocation1] sm:$0xff]
        %1765 = vst [vmem:[#allocation1] ss:$9 sm:$0xff] %v1673
        %1766 = vst [vmem:[%s1682] ss:$9 sm:$0xff] %v1360
        %1767 = vst [vmem:[%s1684] ss:$9 sm:$0xff] %v1674
        %1768 = vst [vmem:[%s1686] ss:$9 sm:$0xff] %v1675
        %1769 = vst [vmem:[%s1688] ss:$9 sm:$0xff] %v1676
        %1770 = vst [vmem:[%s1690] ss:$9 sm:$0xff] %v1677
        %1771 = vst [vmem:[%s1692] ss:$9 sm:$0xff] %v1678
        %1772 = vst [vmem:[%s1694] ss:$9 sm:$0xff] %v1679
        %v1773 = vld [vmem:[#allocation1] sm:$0xff]
        %1774 = vst [vmem:[#allocation1] ss:$9 sm:$0xff] %v1680
        %v1775 = vld [vmem:[#allocation1] sm:$0xff]
        %v1792 = vpack.c.bf16 %v1696, %v1696
        %v1793 = vpack.c.bf16 %v1698, %v1698
        %v1794 = vpack.c.bf16 %v1707, %v1707
        %v1795 = vpack.c.bf16 %v1709, %v1709
        %v1796 = vpack.c.bf16 %v1718, %v1718
        %v1797 = vpack.c.bf16 %v1720, %v1720
        %v1798 = vpack.c.bf16 %v1729, %v1729
        %v1799 = vpack.c.bf16 %v1731, %v1731
        %v1800 = vpack.c.bf16 %v1740, %v1740
        %v1801 = vpack.c.bf16 %v1742, %v1742
        %v1802 = vpack.c.bf16 %v1751, %v1751
        %v1803 = vpack.c.bf16 %v1753, %v1753
        %v1804 = vpack.c.bf16 %v1762, %v1762
        %v1805 = vpack.c.bf16 %v1764, %v1764
        %v1806 = vpack.c.bf16 %v1773, %v1773
        %v1807 = vpack.c.bf16 %v1775, %v1775
        %v1817 = vrot.slane %v1387, 1
        %v1818 = vrot.slane %v1387, 2
        %v1819 = vrot.slane %v1387, 3
        %v1820 = vrot.slane %v1387, 4
        %v1821 = vrot.slane %v1387, 5
        %v1822 = vrot.slane %v1387, 6
        %v1823 = vrot.slane %v1387, 7
        %v1824 = vrot.slane %v1389, 1
        %v1825 = vrot.slane %v1389, 2
        %v1826 = vrot.slane %v1389, 3
        %v1827 = vrot.slane %v1389, 4
        %v1828 = vrot.slane %v1389, 5
        %v1829 = vrot.slane %v1389, 6
        %v1830 = vrot.slane %v1389, 7
        %v1831 = vrot.slane %v1392, 1
        %v1832 = vrot.slane %v1392, 2
        %v1833 = vrot.slane %v1392, 3
        %v1834 = vrot.slane %v1392, 4
        %v1835 = vrot.slane %v1392, 5
        %v1836 = vrot.slane %v1392, 6
        %v1837 = vrot.slane %v1392, 7
        %v1838 = vrot.slane %v1394, 1
        %v1839 = vrot.slane %v1394, 2
        %v1840 = vrot.slane %v1394, 3
        %v1841 = vrot.slane %v1394, 4
        %v1842 = vrot.slane %v1394, 5
        %v1843 = vrot.slane %v1394, 6
        %v1844 = vrot.slane %v1394, 7
        %v1845 = vrot.slane %v1397, 1
        %v1846 = vrot.slane %v1397, 2
        %v1847 = vrot.slane %v1397, 3
        %v1848 = vrot.slane %v1397, 4
        %v1849 = vrot.slane %v1397, 5
        %v1850 = vrot.slane %v1397, 6
        %v1851 = vrot.slane %v1397, 7
        %v1852 = vrot.slane %v1399, 1
        %v1853 = vrot.slane %v1399, 2
        %v1854 = vrot.slane %v1399, 3
        %v1855 = vrot.slane %v1399, 4
        %v1856 = vrot.slane %v1399, 5
        %v1857 = vrot.slane %v1399, 6
        %v1858 = vrot.slane %v1399, 7
        %v1859 = vrot.slane %v1402, 1
        %v1860 = vrot.slane %v1402, 2
        %v1861 = vrot.slane %v1402, 3
        %v1862 = vrot.slane %v1402, 4
        %v1863 = vrot.slane %v1402, 5
        %v1864 = vrot.slane %v1402, 6
        %v1865 = vrot.slane %v1402, 7
        %v1866 = vrot.slane %v1404, 1
        %v1867 = vrot.slane %v1404, 2
        %v1868 = vrot.slane %v1404, 3
        %v1869 = vrot.slane %v1404, 4
        %v1870 = vrot.slane %v1404, 5
        %v1871 = vrot.slane %v1404, 6
        %v1872 = vrot.slane %v1404, 7
        %v1873 = vrot.slane %v1407, 1
        %v1874 = vrot.slane %v1407, 2
        %v1875 = vrot.slane %v1407, 3
        %v1876 = vrot.slane %v1407, 4
        %v1877 = vrot.slane %v1407, 5
        %v1878 = vrot.slane %v1407, 6
        %v1879 = vrot.slane %v1407, 7
        %1880 = vst [vmem:[#allocation1] ss:$9 sm:$0xff] %v1387
        %s1881 = scalar_lea.vmem [#allocation1], 1
        %1882 = vst [vmem:[%s1881] ss:$9 sm:$0xff] %v1817
        %s1883 = scalar_lea.vmem [#allocation1], 2
        %1884 = vst [vmem:[%s1883] ss:$9 sm:$0xff] %v1818
        %s1885 = scalar_lea.vmem [#allocation1], 3
        %1886 = vst [vmem:[%s1885] ss:$9 sm:$0xff] %v1819
        %s1887 = scalar_lea.vmem [#allocation1], 4
        %1888 = vst [vmem:[%s1887] ss:$9 sm:$0xff] %v1820
        %s1889 = scalar_lea.vmem [#allocation1], 5
        %1890 = vst [vmem:[%s1889] ss:$9 sm:$0xff] %v1821
        %s1891 = scalar_lea.vmem [#allocation1], 6
        %1892 = vst [vmem:[%s1891] ss:$9 sm:$0xff] %v1822
        %s1893 = scalar_lea.vmem [#allocation1], 7
        %1894 = vst [vmem:[%s1893] ss:$9 sm:$0xff] %v1823
        %v1895 = vld [vmem:[#allocation1] sm:$0xff]
        %1896 = vst [vmem:[#allocation1] ss:$9 sm:$0xff] %v1389
        %v1897 = vld [vmem:[#allocation1] sm:$0xff]
        %1898 = vst [vmem:[#allocation1] ss:$9 sm:$0xff] %v1824
        %1899 = vst [vmem:[%s1881] ss:$9 sm:$0xff] %v1825
        %1900 = vst [vmem:[%s1883] ss:$9 sm:$0xff] %v1826
        %1901 = vst [vmem:[%s1885] ss:$9 sm:$0xff] %v1827
        %1902 = vst [vmem:[%s1887] ss:$9 sm:$0xff] %v1828
        %1903 = vst [vmem:[%s1889] ss:$9 sm:$0xff] %v1829
        %1904 = vst [vmem:[%s1891] ss:$9 sm:$0xff] %v1830
        %1905 = vst [vmem:[%s1893] ss:$9 sm:$0xff] %v1392
        %v1906 = vld [vmem:[#allocation1] sm:$0xff]
        %1907 = vst [vmem:[#allocation1] ss:$9 sm:$0xff] %v1831
        %v1908 = vld [vmem:[#allocation1] sm:$0xff]
        %1909 = vst [vmem:[#allocation1] ss:$9 sm:$0xff] %v1832
        %1910 = vst [vmem:[%s1881] ss:$9 sm:$0xff] %v1833
        %1911 = vst [vmem:[%s1883] ss:$9 sm:$0xff] %v1834
        %1912 = vst [vmem:[%s1885] ss:$9 sm:$0xff] %v1835
        %1913 = vst [vmem:[%s1887] ss:$9 sm:$0xff] %v1836
        %1914 = vst [vmem:[%s1889] ss:$9 sm:$0xff] %v1837
        %1915 = vst [vmem:[%s1891] ss:$9 sm:$0xff] %v1394
        %1916 = vst [vmem:[%s1893] ss:$9 sm:$0xff] %v1838
        %v1917 = vld [vmem:[#allocation1] sm:$0xff]
        %1918 = vst [vmem:[#allocation1] ss:$9 sm:$0xff] %v1839
        %v1919 = vld [vmem:[#allocation1] sm:$0xff]
        %1920 = vst [vmem:[#allocation1] ss:$9 sm:$0xff] %v1840
        %1921 = vst [vmem:[%s1881] ss:$9 sm:$0xff] %v1841
        %1922 = vst [vmem:[%s1883] ss:$9 sm:$0xff] %v1842
        %1923 = vst [vmem:[%s1885] ss:$9 sm:$0xff] %v1843
        %1924 = vst [vmem:[%s1887] ss:$9 sm:$0xff] %v1844
        %1925 = vst [vmem:[%s1889] ss:$9 sm:$0xff] %v1397
        %1926 = vst [vmem:[%s1891] ss:$9 sm:$0xff] %v1845
        %1927 = vst [vmem:[%s1893] ss:$9 sm:$0xff] %v1846
        %v1928 = vld [vmem:[#allocation1] sm:$0xff]
        %1929 = vst [vmem:[#allocation1] ss:$9 sm:$0xff] %v1847
        %v1930 = vld [vmem:[#allocation1] sm:$0xff]
        %1931 = vst [vmem:[#allocation1] ss:$9 sm:$0xff] %v1848
        %1932 = vst [vmem:[%s1881] ss:$9 sm:$0xff] %v1849
        %1933 = vst [vmem:[%s1883] ss:$9 sm:$0xff] %v1850
        %1934 = vst [vmem:[%s1885] ss:$9 sm:$0xff] %v1851
        %1935 = vst [vmem:[%s1887] ss:$9 sm:$0xff] %v1399
        %1936 = vst [vmem:[%s1889] ss:$9 sm:$0xff] %v1852
        %1937 = vst [vmem:[%s1891] ss:$9 sm:$0xff] %v1853
        %1938 = vst [vmem:[%s1893] ss:$9 sm:$0xff] %v1854
        %v1939 = vld [vmem:[#allocation1] sm:$0xff]
        %1940 = vst [vmem:[#allocation1] ss:$9 sm:$0xff] %v1855
        %v1941 = vld [vmem:[#allocation1] sm:$0xff]
        %1942 = vst [vmem:[#allocation1] ss:$9 sm:$0xff] %v1856
        %1943 = vst [vmem:[%s1881] ss:$9 sm:$0xff] %v1857
        %1944 = vst [vmem:[%s1883] ss:$9 sm:$0xff] %v1858
        %1945 = vst [vmem:[%s1885] ss:$9 sm:$0xff] %v1402
        %1946 = vst [vmem:[%s1887] ss:$9 sm:$0xff] %v1859
        %1947 = vst [vmem:[%s1889] ss:$9 sm:$0xff] %v1860
        %1948 = vst [vmem:[%s1891] ss:$9 sm:$0xff] %v1861
        %1949 = vst [vmem:[%s1893] ss:$9 sm:$0xff] %v1862
        %v1950 = vld [vmem:[#allocation1] sm:$0xff]
        %1951 = vst [vmem:[#allocation1] ss:$9 sm:$0xff] %v1863
        %v1952 = vld [vmem:[#allocation1] sm:$0xff]
        %1953 = vst [vmem:[#allocation1] ss:$9 sm:$0xff] %v1864
        %1954 = vst [vmem:[%s1881] ss:$9 sm:$0xff] %v1865
        %1955 = vst [vmem:[%s1883] ss:$9 sm:$0xff] %v1404
        %1956 = vst [vmem:[%s1885] ss:$9 sm:$0xff] %v1866
        %1957 = vst [vmem:[%s1887] ss:$9 sm:$0xff] %v1867
        %1958 = vst [vmem:[%s1889] ss:$9 sm:$0xff] %v1868
        %1959 = vst [vmem:[%s1891] ss:$9 sm:$0xff] %v1869
        %1960 = vst [vmem:[%s1893] ss:$9 sm:$0xff] %v1870
        %v1961 = vld [vmem:[#allocation1] sm:$0xff]
        %1962 = vst [vmem:[#allocation1] ss:$9 sm:$0xff] %v1871
        %v1963 = vld [vmem:[#allocation1] sm:$0xff]
        %1964 = vst [vmem:[#allocation1] ss:$9 sm:$0xff] %v1872
        %1965 = vst [vmem:[%s1881] ss:$9 sm:$0xff] %v1407
        %1966 = vst [vmem:[%s1883] ss:$9 sm:$0xff] %v1873
        %1967 = vst [vmem:[%s1885] ss:$9 sm:$0xff] %v1874
        %1968 = vst [vmem:[%s1887] ss:$9 sm:$0xff] %v1875
        %1969 = vst [vmem:[%s1889] ss:$9 sm:$0xff] %v1876
        %1970 = vst [vmem:[%s1891] ss:$9 sm:$0xff] %v1877
        %1971 = vst [vmem:[%s1893] ss:$9 sm:$0xff] %v1878
        %v1972 = vld [vmem:[#allocation1] sm:$0xff]
        %1973 = vst [vmem:[#allocation1] ss:$9 sm:$0xff] %v1879
        %v1974 = vld [vmem:[#allocation1] sm:$0xff]
        %v1991 = vpack.c.bf16 %v1895, %v1895
        %v1992 = vpack.c.bf16 %v1897, %v1897
        %v1993 = vpack.c.bf16 %v1906, %v1906
        %v1994 = vpack.c.bf16 %v1908, %v1908
        %v1995 = vpack.c.bf16 %v1917, %v1917
        %v1996 = vpack.c.bf16 %v1919, %v1919
        %v1997 = vpack.c.bf16 %v1928, %v1928
        %v1998 = vpack.c.bf16 %v1930, %v1930
        %v1999 = vpack.c.bf16 %v1939, %v1939
        %v2000 = vpack.c.bf16 %v1941, %v1941
        %v2001 = vpack.c.bf16 %v1950, %v1950
        %v2002 = vpack.c.bf16 %v1952, %v1952
        %v2003 = vpack.c.bf16 %v1961, %v1961
        %v2004 = vpack.c.bf16 %v1963, %v1963
        %v2005 = vpack.c.bf16 %v1972, %v1972
        %v2006 = vpack.c.bf16 %v1974, %v1974
        %v2009 = vunpack.c.l.b16 %v1593
        %v2010 = vunpack.c.l.b16 %v1594
        %v2011 = vpack.c.b16 %v2010, %v2009
        %v2014 = vunpack.c.l.b16 %v1792
        %v2015 = vunpack.c.l.b16 %v1793
        %v2016 = vpack.c.b16 %v2015, %v2014
        %v2018 = vsel %vm1267, %v2011, 0
        %v2021 = vsel %vm1267, %v2016, 0
        %2023 = vmatpush.bf16.xpose.msra.mxu0 0
        %2024 = vmatpush.bf16.xpose.msra.mxu0 0
        %2025 = vmatpush.bf16.xpose.msra.mxu0 0
        %2026 = vmatpush.bf16.xpose.msra.mxu0 0
        %2027 = vmatpush.bf16.xpose.msra.mxu0 0
        %2028 = vmatpush.bf16.xpose.msra.mxu0 0
        %2029 = vmatpush.bf16.xpose.msra.mxu0 0
        %2030 = vmatpush.bf16.xpose.msra.mxu0 %v2021
        %2031 = vmatmul.bf16.gmra.mxu0 %v2018
        %v2032 = vpop.f32.mrf.mxu0
        %v2033 = vadd.f32 0.0, %v2032
        %v2034 = vpop.f32.mrf.mxu0
        %v2035 = vadd.f32 0.0, %v2034
        %2036 = vdwg.mxu0
        %v2039 = vunpack.c.l.b16 %v1595
        %v2040 = vunpack.c.l.b16 %v1596
        %v2041 = vpack.c.b16 %v2040, %v2039
        %v2044 = vunpack.c.l.b16 %v1794
        %v2045 = vunpack.c.l.b16 %v1795
        %v2046 = vpack.c.b16 %v2045, %v2044
        %v2048 = vsel %vm1267, %v2041, 0
        %v2051 = vsel %vm1267, %v2046, 0
        %2053 = vmatpush.bf16.xpose.msra.mxu0 0
        %2054 = vmatpush.bf16.xpose.msra.mxu0 0
        %2055 = vmatpush.bf16.xpose.msra.mxu0 0
        %2056 = vmatpush.bf16.xpose.msra.mxu0 0
        %2057 = vmatpush.bf16.xpose.msra.mxu0 0
        %2058 = vmatpush.bf16.xpose.msra.mxu0 0
        %2059 = vmatpush.bf16.xpose.msra.mxu0 0
        %2060 = vmatpush.bf16.xpose.msra.mxu0 %v2051
        %2061 = vmatmul.bf16.gmra.mxu0 %v2048
        %v2062 = vpop.f32.mrf.mxu0
        %v2063 = vadd.f32 0.0, %v2062
        %v2064 = vpop.f32.mrf.mxu0
        %v2065 = vadd.f32 0.0, %v2064
        %2066 = vdwg.mxu0
        %v2069 = vunpack.c.l.b16 %v1597
        %v2070 = vunpack.c.l.b16 %v1598
        %v2071 = vpack.c.b16 %v2070, %v2069
        %v2074 = vunpack.c.l.b16 %v1796
        %v2075 = vunpack.c.l.b16 %v1797
        %v2076 = vpack.c.b16 %v2075, %v2074
        %v2078 = vsel %vm1267, %v2071, 0
        %v2081 = vsel %vm1267, %v2076, 0
        %2083 = vmatpush.bf16.xpose.msra.mxu0 0
        %2084 = vmatpush.bf16.xpose.msra.mxu0 0
        %2085 = vmatpush.bf16.xpose.msra.mxu0 0
        %2086 = vmatpush.bf16.xpose.msra.mxu0 0
        %2087 = vmatpush.bf16.xpose.msra.mxu0 0
        %2088 = vmatpush.bf16.xpose.msra.mxu0 0
        %2089 = vmatpush.bf16.xpose.msra.mxu0 0
        %2090 = vmatpush.bf16.xpose.msra.mxu0 %v2081
        %2091 = vmatmul.bf16.gmra.mxu0 %v2078
        %v2092 = vpop.f32.mrf.mxu0
        %v2093 = vadd.f32 0.0, %v2092
        %v2094 = vpop.f32.mrf.mxu0
        %v2095 = vadd.f32 0.0, %v2094
        %2096 = vdwg.mxu0
        %v2099 = vunpack.c.l.b16 %v1599
        %v2100 = vunpack.c.l.b16 %v1600
        %v2101 = vpack.c.b16 %v2100, %v2099
        %v2104 = vunpack.c.l.b16 %v1798
        %v2105 = vunpack.c.l.b16 %v1799
        %v2106 = vpack.c.b16 %v2105, %v2104
        %v2108 = vsel %vm1267, %v2101, 0
        %v2111 = vsel %vm1267, %v2106, 0
        %2113 = vmatpush.bf16.xpose.msra.mxu0 0
        %2114 = vmatpush.bf16.xpose.msra.mxu0 0
        %2115 = vmatpush.bf16.xpose.msra.mxu0 0
        %2116 = vmatpush.bf16.xpose.msra.mxu0 0
        %2117 = vmatpush.bf16.xpose.msra.mxu0 0
        %2118 = vmatpush.bf16.xpose.msra.mxu0 0
        %2119 = vmatpush.bf16.xpose.msra.mxu0 0
        %2120 = vmatpush.bf16.xpose.msra.mxu0 %v2111
        %2121 = vmatmul.bf16.gmra.mxu0 %v2108
        %v2122 = vpop.f32.mrf.mxu0
        %v2123 = vadd.f32 0.0, %v2122
        %v2124 = vpop.f32.mrf.mxu0
        %v2125 = vadd.f32 0.0, %v2124
        %2126 = vdwg.mxu0
        %v2129 = vunpack.c.l.b16 %v1601
        %v2130 = vunpack.c.l.b16 %v1602
        %v2131 = vpack.c.b16 %v2130, %v2129
        %v2134 = vunpack.c.l.b16 %v1800
        %v2135 = vunpack.c.l.b16 %v1801
        %v2136 = vpack.c.b16 %v2135, %v2134
        %v2138 = vsel %vm1267, %v2131, 0
        %v2141 = vsel %vm1267, %v2136, 0
        %2143 = vmatpush.bf16.xpose.msra.mxu0 0
        %2144 = vmatpush.bf16.xpose.msra.mxu0 0
        %2145 = vmatpush.bf16.xpose.msra.mxu0 0
        %2146 = vmatpush.bf16.xpose.msra.mxu0 0
        %2147 = vmatpush.bf16.xpose.msra.mxu0 0
        %2148 = vmatpush.bf16.xpose.msra.mxu0 0
        %2149 = vmatpush.bf16.xpose.msra.mxu0 0
        %2150 = vmatpush.bf16.xpose.msra.mxu0 %v2141
        %2151 = vmatmul.bf16.gmra.mxu0 %v2138
        %v2152 = vpop.f32.mrf.mxu0
        %v2153 = vadd.f32 0.0, %v2152
        %v2154 = vpop.f32.mrf.mxu0
        %v2155 = vadd.f32 0.0, %v2154
        %2156 = vdwg.mxu0
        %v2159 = vunpack.c.l.b16 %v1603
        %v2160 = vunpack.c.l.b16 %v1604
        %v2161 = vpack.c.b16 %v2160, %v2159
        %v2164 = vunpack.c.l.b16 %v1802
        %v2165 = vunpack.c.l.b16 %v1803
        %v2166 = vpack.c.b16 %v2165, %v2164
        %v2168 = vsel %vm1267, %v2161, 0
        %v2171 = vsel %vm1267, %v2166, 0
        %2173 = vmatpush.bf16.xpose.msra.mxu0 0
        %2174 = vmatpush.bf16.xpose.msra.mxu0 0
        %2175 = vmatpush.bf16.xpose.msra.mxu0 0
        %2176 = vmatpush.bf16.xpose.msra.mxu0 0
        %2177 = vmatpush.bf16.xpose.msra.mxu0 0
        %2178 = vmatpush.bf16.xpose.msra.mxu0 0
        %2179 = vmatpush.bf16.xpose.msra.mxu0 0
        %2180 = vmatpush.bf16.xpose.msra.mxu0 %v2171
        %2181 = vmatmul.bf16.gmra.mxu0 %v2168
        %v2182 = vpop.f32.mrf.mxu0
        %v2183 = vadd.f32 0.0, %v2182
        %v2184 = vpop.f32.mrf.mxu0
        %v2185 = vadd.f32 0.0, %v2184
        %2186 = vdwg.mxu0
        %v2189 = vunpack.c.l.b16 %v1605
        %v2190 = vunpack.c.l.b16 %v1606
        %v2191 = vpack.c.b16 %v2190, %v2189
        %v2194 = vunpack.c.l.b16 %v1804
        %v2195 = vunpack.c.l.b16 %v1805
        %v2196 = vpack.c.b16 %v2195, %v2194
        %v2198 = vsel %vm1267, %v2191, 0
        %v2201 = vsel %vm1267, %v2196, 0
        %2203 = vmatpush.bf16.xpose.msra.mxu0 0
        %2204 = vmatpush.bf16.xpose.msra.mxu0 0
        %2205 = vmatpush.bf16.xpose.msra.mxu0 0
        %2206 = vmatpush.bf16.xpose.msra.mxu0 0
        %2207 = vmatpush.bf16.xpose.msra.mxu0 0
        %2208 = vmatpush.bf16.xpose.msra.mxu0 0
        %2209 = vmatpush.bf16.xpose.msra.mxu0 0
        %2210 = vmatpush.bf16.xpose.msra.mxu0 %v2201
        %2211 = vmatmul.bf16.gmra.mxu0 %v2198
        %v2212 = vpop.f32.mrf.mxu0
        %v2213 = vadd.f32 0.0, %v2212
        %v2214 = vpop.f32.mrf.mxu0
        %v2215 = vadd.f32 0.0, %v2214
        %2216 = vdwg.mxu0
        %v2219 = vunpack.c.l.b16 %v1607
        %v2220 = vunpack.c.l.b16 %v1608
        %v2221 = vpack.c.b16 %v2220, %v2219
        %v2224 = vunpack.c.l.b16 %v1806
        %v2225 = vunpack.c.l.b16 %v1807
        %v2226 = vpack.c.b16 %v2225, %v2224
        %v2228 = vsel %vm1267, %v2221, 0
        %v2231 = vsel %vm1267, %v2226, 0
        %2233 = vmatpush.bf16.xpose.msra.mxu0 0
        %2234 = vmatpush.bf16.xpose.msra.mxu0 0
        %2235 = vmatpush.bf16.xpose.msra.mxu0 0
        %2236 = vmatpush.bf16.xpose.msra.mxu0 0
        %2237 = vmatpush.bf16.xpose.msra.mxu0 0
        %2238 = vmatpush.bf16.xpose.msra.mxu0 0
        %2239 = vmatpush.bf16.xpose.msra.mxu0 0
        %2240 = vmatpush.bf16.xpose.msra.mxu0 %v2231
        %2241 = vmatmul.bf16.gmra.mxu0 %v2228
        %v2242 = vpop.f32.mrf.mxu0
        %v2243 = vadd.f32 0.0, %v2242
        %v2244 = vpop.f32.mrf.mxu0
        %v2245 = vadd.f32 0.0, %v2244
        %2246 = vdwg.mxu0
        %vm2247 = vcmask 72704
        %v2248 = vsel %vm2247, %v2033, -inf
        %2249 = vmax.xlane.f32.xlu0 %v2248
        %v2250 = vpop.xlane.xlu0 %2249
        %vm2251 = vcmask 65536
        %v2252 = vsel %vm2251, %v2035, -inf
        %2253 = vmax.xlane.f32.xlu0 %v2252
        %v2254 = vpop.xlane.xlu0 %2253
        %v2255 = vsel %vm2247, %v2063, -inf
        %2256 = vmax.xlane.f32.xlu0 %v2255
        %v2257 = vpop.xlane.xlu0 %2256
        %v2258 = vsel %vm2251, %v2065, -inf
        %2259 = vmax.xlane.f32.xlu0 %v2258
        %v2260 = vpop.xlane.xlu0 %2259
        %v2261 = vsel %vm2247, %v2093, -inf
        %2262 = vmax.xlane.f32.xlu0 %v2261
        %v2263 = vpop.xlane.xlu0 %2262
        %v2264 = vsel %vm2251, %v2095, -inf
        %2265 = vmax.xlane.f32.xlu0 %v2264
        %v2266 = vpop.xlane.xlu0 %2265
        %v2267 = vsel %vm2247, %v2123, -inf
        %2268 = vmax.xlane.f32.xlu0 %v2267
        %v2269 = vpop.xlane.xlu0 %2268
        %v2270 = vsel %vm2251, %v2125, -inf
        %2271 = vmax.xlane.f32.xlu0 %v2270
        %v2272 = vpop.xlane.xlu0 %2271
        %v2273 = vsel %vm2247, %v2153, -inf
        %2274 = vmax.xlane.f32.xlu0 %v2273
        %v2275 = vpop.xlane.xlu0 %2274
        %v2276 = vsel %vm2251, %v2155, -inf
        %2277 = vmax.xlane.f32.xlu0 %v2276
        %v2278 = vpop.xlane.xlu0 %2277
        %v2279 = vsel %vm2247, %v2183, -inf
        %2280 = vmax.xlane.f32.xlu0 %v2279
        %v2281 = vpop.xlane.xlu0 %2280
        %v2282 = vsel %vm2251, %v2185, -inf
        %2283 = vmax.xlane.f32.xlu0 %v2282
        %v2284 = vpop.xlane.xlu0 %2283
        %v2285 = vsel %vm2247, %v2213, -inf
        %2286 = vmax.xlane.f32.xlu0 %v2285
        %v2287 = vpop.xlane.xlu0 %2286
        %v2288 = vsel %vm2251, %v2215, -inf
        %2289 = vmax.xlane.f32.xlu0 %v2288
        %v2290 = vpop.xlane.xlu0 %2289
        %v2291 = vsel %vm2247, %v2243, -inf
        %2292 = vmax.xlane.f32.xlu0 %v2291
        %v2293 = vpop.xlane.xlu0 %2292
        %v2294 = vsel %vm2251, %v2245, -inf
        %2295 = vmax.xlane.f32.xlu0 %v2294
        %v2296 = vpop.xlane.xlu0 %2295
        %v2297 = vsub.f32 %v2033, %v2250
        %v2298 = vsub.f32 %v2035, %v2254
        %v2299 = vsub.f32 %v2063, %v2257
        %v2300 = vsub.f32 %v2065, %v2260
        %v2301 = vsub.f32 %v2093, %v2263
        %v2302 = vsub.f32 %v2095, %v2266
        %v2303 = vsub.f32 %v2123, %v2269
        %v2304 = vsub.f32 %v2125, %v2272
        %v2305 = vsub.f32 %v2153, %v2275
        %v2306 = vsub.f32 %v2155, %v2278
        %v2307 = vsub.f32 %v2183, %v2281
        %v2308 = vsub.f32 %v2185, %v2284
        %v2309 = vsub.f32 %v2213, %v2287
        %v2310 = vsub.f32 %v2215, %v2290
        %v2311 = vsub.f32 %v2243, %v2293
        %v2312 = vsub.f32 %v2245, %v2296
        %v2313 = vmul.f32 %v2297, 1.442695
        %v2314 = vpow.pop %v2313
        %v2315 = vmul.f32 %v2298, 1.442695
        %v2316 = vpow.pop %v2315
        %v2317 = vmul.f32 %v2299, 1.442695
        %v2318 = vpow.pop %v2317
        %v2319 = vmul.f32 %v2300, 1.442695
        %v2320 = vpow.pop %v2319
        %v2321 = vmul.f32 %v2301, 1.442695
        %v2322 = vpow.pop %v2321
        %v2323 = vmul.f32 %v2302, 1.442695
        %v2324 = vpow.pop %v2323
        %v2325 = vmul.f32 %v2303, 1.442695
        %v2326 = vpow.pop %v2325
        %v2327 = vmul.f32 %v2304, 1.442695
        %v2328 = vpow.pop %v2327
        %v2329 = vmul.f32 %v2305, 1.442695
        %v2330 = vpow.pop %v2329
        %v2331 = vmul.f32 %v2306, 1.442695
        %v2332 = vpow.pop %v2331
        %v2333 = vmul.f32 %v2307, 1.442695
        %v2334 = vpow.pop %v2333
        %v2335 = vmul.f32 %v2308, 1.442695
        %v2336 = vpow.pop %v2335
        %v2337 = vmul.f32 %v2309, 1.442695
        %v2338 = vpow.pop %v2337
        %v2339 = vmul.f32 %v2310, 1.442695
        %v2340 = vpow.pop %v2339
        %v2341 = vmul.f32 %v2311, 1.442695
        %v2342 = vpow.pop %v2341
        %v2343 = vmul.f32 %v2312, 1.442695
        %v2344 = vpow.pop %v2343
        %v2345 = vsel %vm2247, %v2314, 0.0
        %2346 = vadd.xlane.f32.xlu0 %v2345
        %v2347 = vpop.xlane.xlu0 %2346
        %v2348 = vsel %vm2251, %v2316, 0.0
        %2349 = vadd.xlane.f32.xlu0 %v2348
        %v2350 = vpop.xlane.xlu0 %2349
        %v2351 = vsel %vm2247, %v2318, 0.0
        %2352 = vadd.xlane.f32.xlu0 %v2351
        %v2353 = vpop.xlane.xlu0 %2352
        %v2354 = vsel %vm2251, %v2320, 0.0
        %2355 = vadd.xlane.f32.xlu0 %v2354
        %v2356 = vpop.xlane.xlu0 %2355
        %v2357 = vsel %vm2247, %v2322, 0.0
        %2358 = vadd.xlane.f32.xlu0 %v2357
        %v2359 = vpop.xlane.xlu0 %2358
        %v2360 = vsel %vm2251, %v2324, 0.0
        %2361 = vadd.xlane.f32.xlu0 %v2360
        %v2362 = vpop.xlane.xlu0 %2361
        %v2363 = vsel %vm2247, %v2326, 0.0
        %2364 = vadd.xlane.f32.xlu0 %v2363
        %v2365 = vpop.xlane.xlu0 %2364
        %v2366 = vsel %vm2251, %v2328, 0.0
        %2367 = vadd.xlane.f32.xlu0 %v2366
        %v2368 = vpop.xlane.xlu0 %2367
        %v2369 = vsel %vm2247, %v2330, 0.0
        %2370 = vadd.xlane.f32.xlu0 %v2369
        %v2371 = vpop.xlane.xlu0 %2370
        %v2372 = vsel %vm2251, %v2332, 0.0
        %2373 = vadd.xlane.f32.xlu0 %v2372
        %v2374 = vpop.xlane.xlu0 %2373
        %v2375 = vsel %vm2247, %v2334, 0.0
        %2376 = vadd.xlane.f32.xlu0 %v2375
        %v2377 = vpop.xlane.xlu0 %2376
        %v2378 = vsel %vm2251, %v2336, 0.0
        %2379 = vadd.xlane.f32.xlu0 %v2378
        %v2380 = vpop.xlane.xlu0 %2379
        %v2381 = vsel %vm2247, %v2338, 0.0
        %2382 = vadd.xlane.f32.xlu0 %v2381
        %v2383 = vpop.xlane.xlu0 %2382
        %v2384 = vsel %vm2251, %v2340, 0.0
        %2385 = vadd.xlane.f32.xlu0 %v2384
        %v2386 = vpop.xlane.xlu0 %2385
        %v2387 = vsel %vm2247, %v2342, 0.0
        %2388 = vadd.xlane.f32.xlu0 %v2387
        %v2389 = vpop.xlane.xlu0 %2388
        %v2390 = vsel %vm2251, %v2344, 0.0
        %2391 = vadd.xlane.f32.xlu0 %v2390
        %v2392 = vpop.xlane.xlu0 %2391
        %v2393 = vrcp.pop %v2347
        %v2394 = vrcp.pop %v2350
        %v2395 = vrcp.pop %v2353
        %v2396 = vrcp.pop %v2356
        %v2397 = vrcp.pop %v2359
        %v2398 = vrcp.pop %v2362
        %v2399 = vrcp.pop %v2365
        %v2400 = vrcp.pop %v2368
        %v2401 = vrcp.pop %v2371
        %v2402 = vrcp.pop %v2374
        %v2403 = vrcp.pop %v2377
        %v2404 = vrcp.pop %v2380
        %v2405 = vrcp.pop %v2383
        %v2406 = vrcp.pop %v2386
        %v2407 = vrcp.pop %v2389
        %v2408 = vrcp.pop %v2392
        %v2409 = vmul.f32 %v2314, %v2393
        %v2410 = vmul.f32 %v2316, %v2394
        %v2411 = vmul.f32 %v2318, %v2395
        %v2412 = vmul.f32 %v2320, %v2396
        %v2413 = vmul.f32 %v2322, %v2397
        %v2414 = vmul.f32 %v2324, %v2398
        %v2415 = vmul.f32 %v2326, %v2399
        %v2416 = vmul.f32 %v2328, %v2400
        %v2417 = vmul.f32 %v2330, %v2401
        %v2418 = vmul.f32 %v2332, %v2402
        %v2419 = vmul.f32 %v2334, %v2403
        %v2420 = vmul.f32 %v2336, %v2404
        %v2421 = vmul.f32 %v2338, %v2405
        %v2422 = vmul.f32 %v2340, %v2406
        %v2423 = vmul.f32 %v2342, %v2407
        %v2424 = vmul.f32 %v2344, %v2408
        %v2425 = vpack.c.bf16 %v2409, %v2409
        %v2426 = vpack.c.bf16 %v2410, %v2410
        %v2427 = vpack.c.bf16 %v2411, %v2411
        %v2428 = vpack.c.bf16 %v2412, %v2412
        %v2429 = vpack.c.bf16 %v2413, %v2413
        %v2430 = vpack.c.bf16 %v2414, %v2414
        %v2431 = vpack.c.bf16 %v2415, %v2415
        %v2432 = vpack.c.bf16 %v2416, %v2416
        %v2433 = vpack.c.bf16 %v2417, %v2417
        %v2434 = vpack.c.bf16 %v2418, %v2418
        %v2435 = vpack.c.bf16 %v2419, %v2419
        %v2436 = vpack.c.bf16 %v2420, %v2420
        %v2437 = vpack.c.bf16 %v2421, %v2421
        %v2438 = vpack.c.bf16 %v2422, %v2422
        %v2439 = vpack.c.bf16 %v2423, %v2423
        %v2440 = vpack.c.bf16 %v2424, %v2424
        %v2443 = vunpack.c.l.b16 %v2425
        %v2444 = vunpack.c.l.b16 %v2426
        %v2445 = vpack.c.b16 %v2444, %v2443
        %v2448 = vunpack.c.l.b16 %v1991
        %v2449 = vunpack.c.l.b16 %v1992
        %v2450 = vpack.c.b16 %v2449, %v2448
        %v2452 = vsel %vm2247, %v2445, 0
        %vm2454 = vcmask 1043456
        %vm2455 = vcmask 1044480
        %v2456 = vsel %vm2454, 4294967295, 65535
        %v2457 = vsel %vm2455, %v2456, 0
        %v2459 = vand.u32 %v2450, %v2457
        %2461 = vmatpush.bf16.msra.mxu0 0
        %2462 = vmatpush.bf16.msra.mxu0 0
        %2463 = vmatpush.bf16.msra.mxu0 0
        %2464 = vmatpush.bf16.msra.mxu0 0
        %2465 = vmatpush.bf16.msra.mxu0 0
        %2466 = vmatpush.bf16.msra.mxu0 0
        %2467 = vmatpush.bf16.msra.mxu0 0
        %2468 = vmatpush.bf16.msra.mxu0 %v2459
        %2469 = vmatmul.bf16.gmra.mxu0 %v2452
        %v2470 = vpop.f32.mrf.mxu0
        %v2471 = vadd.f32 0.0, %v2470
        %v2472 = vpop.f32.mrf.mxu0
        %v2473 = vadd.f32 0.0, %v2472
        %2474 = vdwg.mxu0
        %v2477 = vunpack.c.l.b16 %v2427
        %v2478 = vunpack.c.l.b16 %v2428
        %v2479 = vpack.c.b16 %v2478, %v2477
        %v2482 = vunpack.c.l.b16 %v1993
        %v2483 = vunpack.c.l.b16 %v1994
        %v2484 = vpack.c.b16 %v2483, %v2482
        %v2486 = vsel %vm2247, %v2479, 0
        %v2489 = vand.u32 %v2484, %v2457
        %2491 = vmatpush.bf16.msra.mxu0 0
        %2492 = vmatpush.bf16.msra.mxu0 0
        %2493 = vmatpush.bf16.msra.mxu0 0
        %2494 = vmatpush.bf16.msra.mxu0 0
        %2495 = vmatpush.bf16.msra.mxu0 0
        %2496 = vmatpush.bf16.msra.mxu0 0
        %2497 = vmatpush.bf16.msra.mxu0 0
        %2498 = vmatpush.bf16.msra.mxu0 %v2489
        %2499 = vmatmul.bf16.gmra.mxu0 %v2486
        %v2500 = vpop.f32.mrf.mxu0
        %v2501 = vadd.f32 0.0, %v2500
        %v2502 = vpop.f32.mrf.mxu0
        %v2503 = vadd.f32 0.0, %v2502
        %2504 = vdwg.mxu0
        %v2507 = vunpack.c.l.b16 %v2429
        %v2508 = vunpack.c.l.b16 %v2430
        %v2509 = vpack.c.b16 %v2508, %v2507
        %v2512 = vunpack.c.l.b16 %v1995
        %v2513 = vunpack.c.l.b16 %v1996
        %v2514 = vpack.c.b16 %v2513, %v2512
        %v2516 = vsel %vm2247, %v2509, 0
        %v2519 = vand.u32 %v2514, %v2457
        %2521 = vmatpush.bf16.msra.mxu0 0
        %2522 = vmatpush.bf16.msra.mxu0 0
        %2523 = vmatpush.bf16.msra.mxu0 0
        %2524 = vmatpush.bf16.msra.mxu0 0
        %2525 = vmatpush.bf16.msra.mxu0 0
        %2526 = vmatpush.bf16.msra.mxu0 0
        %2527 = vmatpush.bf16.msra.mxu0 0
        %2528 = vmatpush.bf16.msra.mxu0 %v2519
        %2529 = vmatmul.bf16.gmra.mxu0 %v2516
        %v2530 = vpop.f32.mrf.mxu0
        %v2531 = vadd.f32 0.0, %v2530
        %v2532 = vpop.f32.mrf.mxu0
        %v2533 = vadd.f32 0.0, %v2532
        %2534 = vdwg.mxu0
        %v2537 = vunpack.c.l.b16 %v2431
        %v2538 = vunpack.c.l.b16 %v2432
        %v2539 = vpack.c.b16 %v2538, %v2537
        %v2542 = vunpack.c.l.b16 %v1997
        %v2543 = vunpack.c.l.b16 %v1998
        %v2544 = vpack.c.b16 %v2543, %v2542
        %v2546 = vsel %vm2247, %v2539, 0
        %v2549 = vand.u32 %v2544, %v2457
        %2551 = vmatpush.bf16.msra.mxu0 0
        %2552 = vmatpush.bf16.msra.mxu0 0
        %2553 = vmatpush.bf16.msra.mxu0 0
        %2554 = vmatpush.bf16.msra.mxu0 0
        %2555 = vmatpush.bf16.msra.mxu0 0
        %2556 = vmatpush.bf16.msra.mxu0 0
        %2557 = vmatpush.bf16.msra.mxu0 0
        %2558 = vmatpush.bf16.msra.mxu0 %v2549
        %2559 = vmatmul.bf16.gmra.mxu0 %v2546
        %v2560 = vpop.f32.mrf.mxu0
        %v2561 = vadd.f32 0.0, %v2560
        %v2562 = vpop.f32.mrf.mxu0
        %v2563 = vadd.f32 0.0, %v2562
        %2564 = vdwg.mxu0
        %v2567 = vunpack.c.l.b16 %v2433
        %v2568 = vunpack.c.l.b16 %v2434
        %v2569 = vpack.c.b16 %v2568, %v2567
        %v2572 = vunpack.c.l.b16 %v1999
        %v2573 = vunpack.c.l.b16 %v2000
        %v2574 = vpack.c.b16 %v2573, %v2572
        %v2576 = vsel %vm2247, %v2569, 0
        %v2579 = vand.u32 %v2574, %v2457
        %2581 = vmatpush.bf16.msra.mxu0 0
        %2582 = vmatpush.bf16.msra.mxu0 0
        %2583 = vmatpush.bf16.msra.mxu0 0
        %2584 = vmatpush.bf16.msra.mxu0 0
        %2585 = vmatpush.bf16.msra.mxu0 0
        %2586 = vmatpush.bf16.msra.mxu0 0
        %2587 = vmatpush.bf16.msra.mxu0 0
        %2588 = vmatpush.bf16.msra.mxu0 %v2579
        %2589 = vmatmul.bf16.gmra.mxu0 %v2576
        %v2590 = vpop.f32.mrf.mxu0
        %v2591 = vadd.f32 0.0, %v2590
        %v2592 = vpop.f32.mrf.mxu0
        %v2593 = vadd.f32 0.0, %v2592
        %2594 = vdwg.mxu0
        %v2597 = vunpack.c.l.b16 %v2435
        %v2598 = vunpack.c.l.b16 %v2436
        %v2599 = vpack.c.b16 %v2598, %v2597
        %v2602 = vunpack.c.l.b16 %v2001
        %v2603 = vunpack.c.l.b16 %v2002
        %v2604 = vpack.c.b16 %v2603, %v2602
        %v2606 = vsel %vm2247, %v2599, 0
        %v2609 = vand.u32 %v2604, %v2457
        %2611 = vmatpush.bf16.msra.mxu0 0
        %2612 = vmatpush.bf16.msra.mxu0 0
        %2613 = vmatpush.bf16.msra.mxu0 0
        %2614 = vmatpush.bf16.msra.mxu0 0
        %2615 = vmatpush.bf16.msra.mxu0 0
        %2616 = vmatpush.bf16.msra.mxu0 0
        %2617 = vmatpush.bf16.msra.mxu0 0
        %2618 = vmatpush.bf16.msra.mxu0 %v2609
        %2619 = vmatmul.bf16.gmra.mxu0 %v2606
        %v2620 = vpop.f32.mrf.mxu0
        %v2621 = vadd.f32 0.0, %v2620
        %v2622 = vpop.f32.mrf.mxu0
        %v2623 = vadd.f32 0.0, %v2622
        %2624 = vdwg.mxu0
        %v2627 = vunpack.c.l.b16 %v2437
        %v2628 = vunpack.c.l.b16 %v2438
        %v2629 = vpack.c.b16 %v2628, %v2627
        %v2632 = vunpack.c.l.b16 %v2003
        %v2633 = vunpack.c.l.b16 %v2004
        %v2634 = vpack.c.b16 %v2633, %v2632
        %v2636 = vsel %vm2247, %v2629, 0
        %v2639 = vand.u32 %v2634, %v2457
        %2641 = vmatpush.bf16.msra.mxu0 0
        %2642 = vmatpush.bf16.msra.mxu0 0
        %2643 = vmatpush.bf16.msra.mxu0 0
        %2644 = vmatpush.bf16.msra.mxu0 0
        %2645 = vmatpush.bf16.msra.mxu0 0
        %2646 = vmatpush.bf16.msra.mxu0 0
        %2647 = vmatpush.bf16.msra.mxu0 0
        %2648 = vmatpush.bf16.msra.mxu0 %v2639
        %2649 = vmatmul.bf16.gmra.mxu0 %v2636
        %v2650 = vpop.f32.mrf.mxu0
        %v2651 = vadd.f32 0.0, %v2650
        %v2652 = vpop.f32.mrf.mxu0
        %v2653 = vadd.f32 0.0, %v2652
        %2654 = vdwg.mxu0
        %v2657 = vunpack.c.l.b16 %v2439
        %v2658 = vunpack.c.l.b16 %v2440
        %v2659 = vpack.c.b16 %v2658, %v2657
        %v2662 = vunpack.c.l.b16 %v2005
        %v2663 = vunpack.c.l.b16 %v2006
        %v2664 = vpack.c.b16 %v2663, %v2662
        %v2666 = vsel %vm2247, %v2659, 0
        %v2669 = vand.u32 %v2664, %v2457
        %2671 = vmatpush.bf16.msra.mxu0 0
        %2672 = vmatpush.bf16.msra.mxu0 0
        %2673 = vmatpush.bf16.msra.mxu0 0
        %2674 = vmatpush.bf16.msra.mxu0 0
        %2675 = vmatpush.bf16.msra.mxu0 0
        %2676 = vmatpush.bf16.msra.mxu0 0
        %2677 = vmatpush.bf16.msra.mxu0 0
        %2678 = vmatpush.bf16.msra.mxu0 %v2669
        %2679 = vmatmul.bf16.gmra.mxu0 %v2666
        %v2680 = vpop.f32.mrf.mxu0
        %v2681 = vadd.f32 0.0, %v2680
        %v2682 = vpop.f32.mrf.mxu0
        %v2683 = vadd.f32 0.0, %v2682
        %2684 = vdwg.mxu0
        %v2701 = vrot.slane %v2471, 1
        %v2702 = vrot.slane %v2471, 2
        %v2703 = vrot.slane %v2471, 3
        %v2704 = vrot.slane %v2471, 4
        %v2705 = vrot.slane %v2471, 5
        %v2706 = vrot.slane %v2471, 6
        %v2707 = vrot.slane %v2471, 7
        %v2708 = vrot.slane %v2501, 1
        %v2709 = vrot.slane %v2501, 2
        %v2710 = vrot.slane %v2501, 3
        %v2711 = vrot.slane %v2501, 4
        %v2712 = vrot.slane %v2501, 5
        %v2713 = vrot.slane %v2501, 6
        %v2714 = vrot.slane %v2501, 7
        %v2715 = vrot.slane %v2531, 1
        %v2716 = vrot.slane %v2531, 2
        %v2717 = vrot.slane %v2531, 3
        %v2718 = vrot.slane %v2531, 4
        %v2719 = vrot.slane %v2531, 5
        %v2720 = vrot.slane %v2531, 6
        %v2721 = vrot.slane %v2531, 7
        %v2722 = vrot.slane %v2561, 1
        %v2723 = vrot.slane %v2561, 2
        %v2724 = vrot.slane %v2561, 3
        %v2725 = vrot.slane %v2561, 4
        %v2726 = vrot.slane %v2561, 5
        %v2727 = vrot.slane %v2561, 6
        %v2728 = vrot.slane %v2561, 7
        %v2729 = vrot.slane %v2591, 1
        %v2730 = vrot.slane %v2591, 2
        %v2731 = vrot.slane %v2591, 3
        %v2732 = vrot.slane %v2591, 4
        %v2733 = vrot.slane %v2591, 5
        %v2734 = vrot.slane %v2591, 6
        %v2735 = vrot.slane %v2591, 7
        %v2736 = vrot.slane %v2621, 1
        %v2737 = vrot.slane %v2621, 2
        %v2738 = vrot.slane %v2621, 3
        %v2739 = vrot.slane %v2621, 4
        %v2740 = vrot.slane %v2621, 5
        %v2741 = vrot.slane %v2621, 6
        %v2742 = vrot.slane %v2621, 7
        %v2743 = vrot.slane %v2651, 1
        %v2744 = vrot.slane %v2651, 2
        %v2745 = vrot.slane %v2651, 3
        %v2746 = vrot.slane %v2651, 4
        %v2747 = vrot.slane %v2651, 5
        %v2748 = vrot.slane %v2651, 6
        %v2749 = vrot.slane %v2651, 7
        %v2750 = vrot.slane %v2681, 1
        %v2751 = vrot.slane %v2681, 2
        %v2752 = vrot.slane %v2681, 3
        %v2753 = vrot.slane %v2681, 4
        %v2754 = vrot.slane %v2681, 5
        %v2755 = vrot.slane %v2681, 6
        %v2756 = vrot.slane %v2681, 7
        %2757 = vst [vmem:[#allocation1] ss:$9 sm:$0xff] %v2471
        %s2758 = scalar_lea.vmem [#allocation1], 1
        %2759 = vst [vmem:[%s2758] ss:$9 sm:$0xff] %v2701
        %s2760 = scalar_lea.vmem [#allocation1], 2
        %2761 = vst [vmem:[%s2760] ss:$9 sm:$0xff] %v2702
        %s2762 = scalar_lea.vmem [#allocation1], 3
        %2763 = vst [vmem:[%s2762] ss:$9 sm:$0xff] %v2703
        %s2764 = scalar_lea.vmem [#allocation1], 4
        %2765 = vst [vmem:[%s2764] ss:$9 sm:$0xff] %v2704
        %s2766 = scalar_lea.vmem [#allocation1], 5
        %2767 = vst [vmem:[%s2766] ss:$9 sm:$0xff] %v2705
        %s2768 = scalar_lea.vmem [#allocation1], 6
        %2769 = vst [vmem:[%s2768] ss:$9 sm:$0xff] %v2706
        %s2770 = scalar_lea.vmem [#allocation1], 7
        %2771 = vst [vmem:[%s2770] ss:$9 sm:$0xff] %v2707
        %v2772 = vld [vmem:[#allocation1] sm:$0xff]
        %2773 = vst [vmem:[#allocation1] ss:$9 sm:$0xff] %v2473
        %2774 = vst [vmem:[%s2758] ss:$9 sm:$0xff] %v2501
        %2775 = vst [vmem:[%s2760] ss:$9 sm:$0xff] %v2708
        %2776 = vst [vmem:[%s2762] ss:$9 sm:$0xff] %v2709
        %2777 = vst [vmem:[%s2764] ss:$9 sm:$0xff] %v2710
        %2778 = vst [vmem:[%s2766] ss:$9 sm:$0xff] %v2711
        %2779 = vst [vmem:[%s2768] ss:$9 sm:$0xff] %v2712
        %2780 = vst [vmem:[%s2770] ss:$9 sm:$0xff] %v2713
        %v2781 = vld [vmem:[#allocation1] sm:$0xff]
        %2782 = vst [vmem:[#allocation1] ss:$9 sm:$0xff] %v2714
        %2783 = vst [vmem:[%s2758] ss:$9 sm:$0xff] %v2503
        %2784 = vst [vmem:[%s2760] ss:$9 sm:$0xff] %v2531
        %2785 = vst [vmem:[%s2762] ss:$9 sm:$0xff] %v2715
        %2786 = vst [vmem:[%s2764] ss:$9 sm:$0xff] %v2716
        %2787 = vst [vmem:[%s2766] ss:$9 sm:$0xff] %v2717
        %2788 = vst [vmem:[%s2768] ss:$9 sm:$0xff] %v2718
        %2789 = vst [vmem:[%s2770] ss:$9 sm:$0xff] %v2719
        %v2790 = vld [vmem:[#allocation1] sm:$0xff]
        %2791 = vst [vmem:[#allocation1] ss:$9 sm:$0xff] %v2720
        %2792 = vst [vmem:[%s2758] ss:$9 sm:$0xff] %v2721
        %2793 = vst [vmem:[%s2760] ss:$9 sm:$0xff] %v2533
        %2794 = vst [vmem:[%s2762] ss:$9 sm:$0xff] %v2561
        %2795 = vst [vmem:[%s2764] ss:$9 sm:$0xff] %v2722
        %2796 = vst [vmem:[%s2766] ss:$9 sm:$0xff] %v2723
        %2797 = vst [vmem:[%s2768] ss:$9 sm:$0xff] %v2724
        %2798 = vst [vmem:[%s2770] ss:$9 sm:$0xff] %v2725
        %v2799 = vld [vmem:[#allocation1] sm:$0xff]
        %2800 = vst [vmem:[#allocation1] ss:$9 sm:$0xff] %v2726
        %2801 = vst [vmem:[%s2758] ss:$9 sm:$0xff] %v2727
        %2802 = vst [vmem:[%s2760] ss:$9 sm:$0xff] %v2728
        %2803 = vst [vmem:[%s2762] ss:$9 sm:$0xff] %v2563
        %2804 = vst [vmem:[%s2764] ss:$9 sm:$0xff] %v2591
        %2805 = vst [vmem:[%s2766] ss:$9 sm:$0xff] %v2729
        %2806 = vst [vmem:[%s2768] ss:$9 sm:$0xff] %v2730
        %2807 = vst [vmem:[%s2770] ss:$9 sm:$0xff] %v2731
        %v2808 = vld [vmem:[#allocation1] sm:$0xff]
        %2809 = vst [vmem:[#allocation1] ss:$9 sm:$0xff] %v2732
        %2810 = vst [vmem:[%s2758] ss:$9 sm:$0xff] %v2733
        %2811 = vst [vmem:[%s2760] ss:$9 sm:$0xff] %v2734
        %2812 = vst [vmem:[%s2762] ss:$9 sm:$0xff] %v2735
        %2813 = vst [vmem:[%s2764] ss:$9 sm:$0xff] %v2593
        %2814 = vst [vmem:[%s2766] ss:$9 sm:$0xff] %v2621
        %2815 = vst [vmem:[%s2768] ss:$9 sm:$0xff] %v2736
        %2816 = vst [vmem:[%s2770] ss:$9 sm:$0xff] %v2737
        %v2817 = vld [vmem:[#allocation1] sm:$0xff]
        %2818 = vst [vmem:[#allocation1] ss:$9 sm:$0xff] %v2738
        %2819 = vst [vmem:[%s2758] ss:$9 sm:$0xff] %v2739
        %2820 = vst [vmem:[%s2760] ss:$9 sm:$0xff] %v2740
        %2821 = vst [vmem:[%s2762] ss:$9 sm:$0xff] %v2741
        %2822 = vst [vmem:[%s2764] ss:$9 sm:$0xff] %v2742
        %2823 = vst [vmem:[%s2766] ss:$9 sm:$0xff] %v2623
        %2824 = vst [vmem:[%s2768] ss:$9 sm:$0xff] %v2651
        %2825 = vst [vmem:[%s2770] ss:$9 sm:$0xff] %v2743
        %v2826 = vld [vmem:[#allocation1] sm:$0xff]
        %2827 = vst [vmem:[#allocation1] ss:$9 sm:$0xff] %v2744
        %2828 = vst [vmem:[%s2758] ss:$9 sm:$0xff] %v2745
        %2829 = vst [vmem:[%s2760] ss:$9 sm:$0xff] %v2746
        %2830 = vst [vmem:[%s2762] ss:$9 sm:$0xff] %v2747
        %2831 = vst [vmem:[%s2764] ss:$9 sm:$0xff] %v2748
        %2832 = vst [vmem:[%s2766] ss:$9 sm:$0xff] %v2749
        %2833 = vst [vmem:[%s2768] ss:$9 sm:$0xff] %v2653
        %2834 = vst [vmem:[%s2770] ss:$9 sm:$0xff] %v2681
        %v2835 = vld [vmem:[#allocation1] sm:$0xff]
        %2836 = vst [vmem:[#allocation1] ss:$9 sm:$0xff] %v2750
        %2837 = vst [vmem:[%s2758] ss:$9 sm:$0xff] %v2751
        %2838 = vst [vmem:[%s2760] ss:$9 sm:$0xff] %v2752
        %2839 = vst [vmem:[%s2762] ss:$9 sm:$0xff] %v2753
        %2840 = vst [vmem:[%s2764] ss:$9 sm:$0xff] %v2754
        %2841 = vst [vmem:[%s2766] ss:$9 sm:$0xff] %v2755
        %2842 = vst [vmem:[%s2768] ss:$9 sm:$0xff] %v2756
        %2843 = vst [vmem:[%s2770] ss:$9 sm:$0xff] %v2683
        %v2844 = vld [vmem:[#allocation1] sm:$0xff]
        %v2854 = vpack.c.bf16 %v2781, %v2772
        %v2855 = vpack.c.bf16 %v2799, %v2790
        %v2856 = vpack.c.bf16 %v2817, %v2808
        %v2857 = vpack.c.bf16 %v2835, %v2826
        %v2858 = vpack.c.bf16 %v2844, %v2844
        %v2859 = vld [vmem:[%s855] sm:$0xf]
        %v2860 = vld [vmem:[%s855 + $0x4] sm:$0xf]
        %v2861 = vld [vmem:[%s858] sm:$0x1]
        %v2863 = vperm.slane %v2861, 0
        %v2867 = vunpack.c.l.b16 %v2859
        %v2868 = vunpack.c.l.b16 %v2860
        %v2869 = vpack.c.b16 %v2868, %v2867
        %v2872 = vsel %vm1267, %v2854, 0
        %v2875 = vsel %vm1267, %v2855, 0
        %v2878 = vsel %vm1267, %v2856, 0
        %v2881 = vsel %vm1267, %v2857, 0
        %v2884 = vsel %vm1267, %v2858, 0
        %2886 = vmatpush.bf16.msra.mxu0 0
        %2887 = vmatpush.bf16.msra.mxu0 0
        %2888 = vmatpush.bf16.msra.mxu0 0
        %2889 = vmatpush.bf16.msra.mxu0 0
        %2890 = vmatpush.bf16.msra.mxu0 0
        %2891 = vmatpush.bf16.msra.mxu0 0
        %2892 = vmatpush.bf16.msra.mxu0 0
        %2893 = vmatpush.bf16.msra.mxu0 %v2869
        %2894 = vmatmul.bf16.gmra.mxu0 %v2872
        %v2895 = vpop.f32.mrf.mxu0
        %v2896 = vadd.f32 %v2863, %v2895
        %v2897 = vpop.f32.mrf.mxu0
        %v2898 = vadd.f32 %v2863, %v2897
        %2899 = vmatmul.bf16.gmra.mxu0 %v2875
        %v2900 = vpop.f32.mrf.mxu0
        %v2901 = vadd.f32 %v2863, %v2900
        %v2902 = vpop.f32.mrf.mxu0
        %v2903 = vadd.f32 %v2863, %v2902
        %2904 = vmatmul.bf16.gmra.mxu0 %v2878
        %v2905 = vpop.f32.mrf.mxu0
        %v2906 = vadd.f32 %v2863, %v2905
        %v2907 = vpop.f32.mrf.mxu0
        %v2908 = vadd.f32 %v2863, %v2907
        %2909 = vmatmul.bf16.gmra.mxu0 %v2881
        %v2910 = vpop.f32.mrf.mxu0
        %v2911 = vadd.f32 %v2863, %v2910
        %v2912 = vpop.f32.mrf.mxu0
        %v2913 = vadd.f32 %v2863, %v2912
        %2914 = vmatmul.bf16.gmra.mxu0 %v2884
        %v2915 = vpop.f32.mrf.mxu0
        %v2916 = vadd.f32 %v2863, %v2915
        %v2917 = vpop.f32.mrf.mxu0
        %2918 = vdwg.mxu0
        %v2928 = vrot.slane %v2896, 1
        %v2929 = vrot.slane %v2896, 2
        %v2930 = vrot.slane %v2896, 3
        %v2931 = vrot.slane %v2896, 4
        %v2932 = vrot.slane %v2896, 5
        %v2933 = vrot.slane %v2896, 6
        %v2934 = vrot.slane %v2896, 7
        %v2935 = vrot.slane %v2898, 1
        %v2936 = vrot.slane %v2898, 2
        %v2937 = vrot.slane %v2898, 3
        %v2938 = vrot.slane %v2898, 4
        %v2939 = vrot.slane %v2898, 5
        %v2940 = vrot.slane %v2898, 6
        %v2941 = vrot.slane %v2898, 7
        %v2942 = vrot.slane %v2901, 1
        %v2943 = vrot.slane %v2901, 2
        %v2944 = vrot.slane %v2901, 3
        %v2945 = vrot.slane %v2901, 4
        %v2946 = vrot.slane %v2901, 5
        %v2947 = vrot.slane %v2901, 6
        %v2948 = vrot.slane %v2901, 7
        %v2949 = vrot.slane %v2903, 1
        %v2950 = vrot.slane %v2903, 2
        %v2951 = vrot.slane %v2903, 3
        %v2952 = vrot.slane %v2903, 4
        %v2953 = vrot.slane %v2903, 5
        %v2954 = vrot.slane %v2903, 6
        %v2955 = vrot.slane %v2903, 7
        %v2956 = vrot.slane %v2906, 1
        %v2957 = vrot.slane %v2906, 2
        %v2958 = vrot.slane %v2906, 3
        %v2959 = vrot.slane %v2906, 4
        %v2960 = vrot.slane %v2906, 5
        %v2961 = vrot.slane %v2906, 6
        %v2962 = vrot.slane %v2906, 7
        %v2963 = vrot.slane %v2908, 1
        %v2964 = vrot.slane %v2908, 2
        %v2965 = vrot.slane %v2908, 3
        %v2966 = vrot.slane %v2908, 4
        %v2967 = vrot.slane %v2908, 5
        %v2968 = vrot.slane %v2908, 6
        %v2969 = vrot.slane %v2908, 7
        %v2970 = vrot.slane %v2911, 1
        %v2971 = vrot.slane %v2911, 2
        %v2972 = vrot.slane %v2911, 3
        %v2973 = vrot.slane %v2911, 4
        %v2974 = vrot.slane %v2911, 5
        %v2975 = vrot.slane %v2911, 6
        %v2976 = vrot.slane %v2911, 7
        %v2977 = vrot.slane %v2913, 1
        %v2978 = vrot.slane %v2913, 2
        %v2979 = vrot.slane %v2913, 3
        %v2980 = vrot.slane %v2913, 4
        %v2981 = vrot.slane %v2913, 5
        %v2982 = vrot.slane %v2913, 6
        %v2983 = vrot.slane %v2913, 7
        %v2984 = vrot.slane %v2916, 1
        %v2985 = vrot.slane %v2916, 2
        %v2986 = vrot.slane %v2916, 3
        %v2987 = vrot.slane %v2916, 4
        %v2988 = vrot.slane %v2916, 5
        %v2989 = vrot.slane %v2916, 6
        %v2990 = vrot.slane %v2916, 7
        %v3054 = vadd.f32 %v1009, %v2896
        %v3055 = vadd.f32 %v1041, %v2928
        %v3056 = vadd.f32 %v1042, %v2929
        %v3057 = vadd.f32 %v1043, %v2930
        %v3058 = vadd.f32 %v1044, %v2931
        %v3059 = vadd.f32 %v1045, %v2932
        %v3060 = vadd.f32 %v1046, %v2933
        %v3061 = vadd.f32 %v1047, %v2934
        %v3062 = vadd.f32 %v1010, %v2898
        %v3063 = vadd.f32 %v1011, %v2935
        %v3064 = vadd.f32 %v1048, %v2936
        %v3065 = vadd.f32 %v1049, %v2937
        %v3066 = vadd.f32 %v1050, %v2938
        %v3067 = vadd.f32 %v1051, %v2939
        %v3068 = vadd.f32 %v1052, %v2940
        %v3069 = vadd.f32 %v1053, %v2941
        %v3070 = vadd.f32 %v1054, %v2901
        %v3071 = vadd.f32 %v1012, %v2942
        %v3072 = vadd.f32 %v1013, %v2943
        %v3073 = vadd.f32 %v1055, %v2944
        %v3074 = vadd.f32 %v1056, %v2945
        %v3075 = vadd.f32 %v1057, %v2946
        %v3076 = vadd.f32 %v1058, %v2947
        %v3077 = vadd.f32 %v1059, %v2948
        %v3078 = vadd.f32 %v1060, %v2903
        %v3079 = vadd.f32 %v1061, %v2949
        %v3080 = vadd.f32 %v1014, %v2950
        %v3081 = vadd.f32 %v1015, %v2951
        %v3082 = vadd.f32 %v1062, %v2952
        %v3083 = vadd.f32 %v1063, %v2953
        %v3084 = vadd.f32 %v1064, %v2954
        %v3085 = vadd.f32 %v1065, %v2955
        %v3086 = vadd.f32 %v1066, %v2906
        %v3087 = vadd.f32 %v1067, %v2956
        %v3088 = vadd.f32 %v1068, %v2957
        %v3089 = vadd.f32 %v1016, %v2958
        %v3090 = vadd.f32 %v1017, %v2959
        %v3091 = vadd.f32 %v1069, %v2960
        %v3092 = vadd.f32 %v1070, %v2961
        %v3093 = vadd.f32 %v1071, %v2962
        %v3094 = vadd.f32 %v1072, %v2908
        %v3095 = vadd.f32 %v1073, %v2963
        %v3096 = vadd.f32 %v1074, %v2964
        %v3097 = vadd.f32 %v1075, %v2965
        %v3098 = vadd.f32 %v1018, %v2966
        %v3099 = vadd.f32 %v1019, %v2967
        %v3100 = vadd.f32 %v1076, %v2968
        %v3101 = vadd.f32 %v1077, %v2969
        %v3102 = vadd.f32 %v1078, %v2911
        %v3103 = vadd.f32 %v1079, %v2970
        %v3104 = vadd.f32 %v1080, %v2971
        %v3105 = vadd.f32 %v1081, %v2972
        %v3106 = vadd.f32 %v1082, %v2973
        %v3107 = vadd.f32 %v1020, %v2974
        %v3108 = vadd.f32 %v1021, %v2975
        %v3109 = vadd.f32 %v1083, %v2976
        %v3110 = vadd.f32 %v1084, %v2913
        %v3111 = vadd.f32 %v1085, %v2977
        %v3112 = vadd.f32 %v1086, %v2978
        %v3113 = vadd.f32 %v1087, %v2979
        %v3114 = vadd.f32 %v1088, %v2980
        %v3115 = vadd.f32 %v1089, %v2981
        %v3116 = vadd.f32 %v1022, %v2982
        %v3117 = vadd.f32 %v1023, %v2983
        %v3118 = vadd.f32 %v1090, %v2916
        %v3119 = vadd.f32 %v1091, %v2984
        %v3120 = vadd.f32 %v1092, %v2985
        %v3121 = vadd.f32 %v1093, %v2986
        %v3122 = vadd.f32 %v1094, %v2987
        %v3123 = vadd.f32 %v1095, %v2988
        %v3124 = vadd.f32 %v1096, %v2989
        %v3125 = vadd.f32 %v1024, %v2990
        %v3126 = vld [vmem:[%s861] sm:$0x1]
        %v3127 = vld [vmem:[%s864] sm:$0x1]
        %3200 = vst [vmem:[#allocation1] ss:$9 sm:$0xff] %v3054
        %s3201 = scalar_lea.vmem [#allocation1], 1
        %3202 = vst [vmem:[%s3201] ss:$9 sm:$0xff] %v3055
        %s3203 = scalar_lea.vmem [#allocation1], 2
        %3204 = vst [vmem:[%s3203] ss:$9 sm:$0xff] %v3056
        %s3205 = scalar_lea.vmem [#allocation1], 3
        %3206 = vst [vmem:[%s3205] ss:$9 sm:$0xff] %v3057
        %s3207 = scalar_lea.vmem [#allocation1], 4
        %3208 = vst [vmem:[%s3207] ss:$9 sm:$0xff] %v3058
        %s3209 = scalar_lea.vmem [#allocation1], 5
        %3210 = vst [vmem:[%s3209] ss:$9 sm:$0xff] %v3059
        %s3211 = scalar_lea.vmem [#allocation1], 6
        %3212 = vst [vmem:[%s3211] ss:$9 sm:$0xff] %v3060
        %s3213 = scalar_lea.vmem [#allocation1], 7
        %3214 = vst [vmem:[%s3213] ss:$9 sm:$0xff] %v3061
        %v3215 = vld [vmem:[#allocation1] sm:$0xff]
        %3216 = vst [vmem:[#allocation1] ss:$9 sm:$0xff] %v3062
        %3217 = vst [vmem:[%s3201] ss:$9 sm:$0xff] %v3063
        %3218 = vst [vmem:[%s3203] ss:$9 sm:$0xff] %v3064
        %3219 = vst [vmem:[%s3205] ss:$9 sm:$0xff] %v3065
        %3220 = vst [vmem:[%s3207] ss:$9 sm:$0xff] %v3066
        %3221 = vst [vmem:[%s3209] ss:$9 sm:$0xff] %v3067
        %3222 = vst [vmem:[%s3211] ss:$9 sm:$0xff] %v3068
        %3223 = vst [vmem:[%s3213] ss:$9 sm:$0xff] %v3069
        %v3224 = vld [vmem:[#allocation1] sm:$0xff]
        %3225 = vst [vmem:[#allocation1] ss:$9 sm:$0xff] %v3070
        %3226 = vst [vmem:[%s3201] ss:$9 sm:$0xff] %v3071
        %3227 = vst [vmem:[%s3203] ss:$9 sm:$0xff] %v3072
        %3228 = vst [vmem:[%s3205] ss:$9 sm:$0xff] %v3073
        %3229 = vst [vmem:[%s3207] ss:$9 sm:$0xff] %v3074
        %3230 = vst [vmem:[%s3209] ss:$9 sm:$0xff] %v3075
        %3231 = vst [vmem:[%s3211] ss:$9 sm:$0xff] %v3076
        %3232 = vst [vmem:[%s3213] ss:$9 sm:$0xff] %v3077
        %v3233 = vld [vmem:[#allocation1] sm:$0xff]
        %3234 = vst [vmem:[#allocation1] ss:$9 sm:$0xff] %v3078
        %3235 = vst [vmem:[%s3201] ss:$9 sm:$0xff] %v3079
        %3236 = vst [vmem:[%s3203] ss:$9 sm:$0xff] %v3080
        %3237 = vst [vmem:[%s3205] ss:$9 sm:$0xff] %v3081
        %3238 = vst [vmem:[%s3207] ss:$9 sm:$0xff] %v3082
        %3239 = vst [vmem:[%s3209] ss:$9 sm:$0xff] %v3083
        %3240 = vst [vmem:[%s3211] ss:$9 sm:$0xff] %v3084
        %3241 = vst [vmem:[%s3213] ss:$9 sm:$0xff] %v3085
        %v3242 = vld [vmem:[#allocation1] sm:$0xff]
        %3243 = vst [vmem:[#allocation1] ss:$9 sm:$0xff] %v3086
        %3244 = vst [vmem:[%s3201] ss:$9 sm:$0xff] %v3087
        %3245 = vst [vmem:[%s3203] ss:$9 sm:$0xff] %v3088
        %3246 = vst [vmem:[%s3205] ss:$9 sm:$0xff] %v3089
        %3247 = vst [vmem:[%s3207] ss:$9 sm:$0xff] %v3090
        %3248 = vst [vmem:[%s3209] ss:$9 sm:$0xff] %v3091
        %3249 = vst [vmem:[%s3211] ss:$9 sm:$0xff] %v3092
        %3250 = vst [vmem:[%s3213] ss:$9 sm:$0xff] %v3093
        %v3251 = vld [vmem:[#allocation1] sm:$0xff]
        %3252 = vst [vmem:[#allocation1] ss:$9 sm:$0xff] %v3094
        %3253 = vst [vmem:[%s3201] ss:$9 sm:$0xff] %v3095
        %3254 = vst [vmem:[%s3203] ss:$9 sm:$0xff] %v3096
        %3255 = vst [vmem:[%s3205] ss:$9 sm:$0xff] %v3097
        %3256 = vst [vmem:[%s3207] ss:$9 sm:$0xff] %v3098
        %3257 = vst [vmem:[%s3209] ss:$9 sm:$0xff] %v3099
        %3258 = vst [vmem:[%s3211] ss:$9 sm:$0xff] %v3100
        %3259 = vst [vmem:[%s3213] ss:$9 sm:$0xff] %v3101
        %v3260 = vld [vmem:[#allocation1] sm:$0xff]
        %3261 = vst [vmem:[#allocation1] ss:$9 sm:$0xff] %v3102
        %3262 = vst [vmem:[%s3201] ss:$9 sm:$0xff] %v3103
        %3263 = vst [vmem:[%s3203] ss:$9 sm:$0xff] %v3104
        %3264 = vst [vmem:[%s3205] ss:$9 sm:$0xff] %v3105
        %3265 = vst [vmem:[%s3207] ss:$9 sm:$0xff] %v3106
        %3266 = vst [vmem:[%s3209] ss:$9 sm:$0xff] %v3107
        %3267 = vst [vmem:[%s3211] ss:$9 sm:$0xff] %v3108
        %3268 = vst [vmem:[%s3213] ss:$9 sm:$0xff] %v3109
        %v3269 = vld [vmem:[#allocation1] sm:$0xff]
        %3270 = vst [vmem:[#allocation1] ss:$9 sm:$0xff] %v3110
        %3271 = vst [vmem:[%s3201] ss:$9 sm:$0xff] %v3111
        %3272 = vst [vmem:[%s3203] ss:$9 sm:$0xff] %v3112
        %3273 = vst [vmem:[%s3205] ss:$9 sm:$0xff] %v3113
        %3274 = vst [vmem:[%s3207] ss:$9 sm:$0xff] %v3114
        %3275 = vst [vmem:[%s3209] ss:$9 sm:$0xff] %v3115
        %3276 = vst [vmem:[%s3211] ss:$9 sm:$0xff] %v3116
        %3277 = vst [vmem:[%s3213] ss:$9 sm:$0xff] %v3117
        %v3278 = vld [vmem:[#allocation1] sm:$0xff]
        %3279 = vst [vmem:[#allocation1] ss:$9 sm:$0xff] %v3118
        %3280 = vst [vmem:[%s3201] ss:$9 sm:$0xff] %v3119
        %3281 = vst [vmem:[%s3203] ss:$9 sm:$0xff] %v3120
        %3282 = vst [vmem:[%s3205] ss:$9 sm:$0xff] %v3121
        %3283 = vst [vmem:[%s3207] ss:$9 sm:$0xff] %v3122
        %3284 = vst [vmem:[%s3209] ss:$9 sm:$0xff] %v3123
        %3285 = vst [vmem:[%s3211] ss:$9 sm:$0xff] %v3124
        %3286 = vst [vmem:[%s3213] ss:$9 sm:$0xff] %v3125
        %v3287 = vld [vmem:[#allocation1] sm:$0xff]
        %v3297 = vsel %vm1267, %v3215, 0.0
        %3298 = vadd.xlane.f32.xlu0 %v3297
        %v3299 = vpop.xlane.xlu0 %3298
        %v3300 = vsel %vm1267, %v3224, 0.0
        %3301 = vadd.xlane.f32.xlu0 %v3300
        %v3302 = vpop.xlane.xlu0 %3301
        %v3303 = vsel %vm1267, %v3233, 0.0
        %3304 = vadd.xlane.f32.xlu0 %v3303
        %v3305 = vpop.xlane.xlu0 %3304
        %v3306 = vsel %vm1267, %v3242, 0.0
        %3307 = vadd.xlane.f32.xlu0 %v3306
        %v3308 = vpop.xlane.xlu0 %3307
        %v3309 = vsel %vm1267, %v3251, 0.0
        %3310 = vadd.xlane.f32.xlu0 %v3309
        %v3311 = vpop.xlane.xlu0 %3310
        %v3312 = vsel %vm1267, %v3260, 0.0
        %3313 = vadd.xlane.f32.xlu0 %v3312
        %v3314 = vpop.xlane.xlu0 %3313
        %v3315 = vsel %vm1267, %v3269, 0.0
        %3316 = vadd.xlane.f32.xlu0 %v3315
        %v3317 = vpop.xlane.xlu0 %3316
        %v3318 = vsel %vm1267, %v3278, 0.0
        %3319 = vadd.xlane.f32.xlu0 %v3318
        %v3320 = vpop.xlane.xlu0 %3319
        %v3321 = vsel %vm1267, %v3287, 0.0
        %3322 = vadd.xlane.f32.xlu0 %v3321
        %v3323 = vpop.xlane.xlu0 %3322
        %v3324 = vrcp.pop 16.0
        %v3325 = vmul.f32 16.0, %v3324
        %v3326 = vsub.f32 1.0, %v3325
        %v3327 = vmul.f32 %v3324, %v3326
        %v3328 = vadd.f32 %v3324, %v3327
        %vm3329 = vweird.f32 %v3324
        %v3330 = vsel %vm3329, %v3324, %v3328
        %v3331 = vmul.f32 %v3299, %v3330
        %v3332 = vmul.f32 %v3302, %v3330
        %v3333 = vmul.f32 %v3305, %v3330
        %v3334 = vmul.f32 %v3308, %v3330
        %v3335 = vmul.f32 %v3311, %v3330
        %v3336 = vmul.f32 %v3314, %v3330
        %v3337 = vmul.f32 %v3317, %v3330
        %v3338 = vmul.f32 %v3320, %v3330
        %v3339 = vmul.f32 %v3323, %v3330
        %v3349 = vperm.slane %v3331, 0
        %v3350 = vperm.slane %v3331, 1
        %v3351 = vperm.slane %v3331, 2
        %v3352 = vperm.slane %v3331, 3
        %v3353 = vperm.slane %v3331, 4
        %v3354 = vperm.slane %v3331, 5
        %v3355 = vperm.slane %v3331, 6
        %v3356 = vperm.slane %v3331, 7
        %v3357 = vperm.slane %v3332, 0
        %v3358 = vperm.slane %v3332, 1
        %v3359 = vperm.slane %v3332, 2
        %v3360 = vperm.slane %v3332, 3
        %v3361 = vperm.slane %v3332, 4
        %v3362 = vperm.slane %v3332, 5
        %v3363 = vperm.slane %v3332, 6
        %v3364 = vperm.slane %v3332, 7
        %v3365 = vperm.slane %v3333, 0
        %v3366 = vperm.slane %v3333, 1
        %v3367 = vperm.slane %v3333, 2
        %v3368 = vperm.slane %v3333, 3
        %v3369 = vperm.slane %v3333, 4
        %v3370 = vperm.slane %v3333, 5
        %v3371 = vperm.slane %v3333, 6
        %v3372 = vperm.slane %v3333, 7
        %v3373 = vperm.slane %v3334, 0
        %v3374 = vperm.slane %v3334, 1
        %v3375 = vperm.slane %v3334, 2
        %v3376 = vperm.slane %v3334, 3
        %v3377 = vperm.slane %v3334, 4
        %v3378 = vperm.slane %v3334, 5
        %v3379 = vperm.slane %v3334, 6
        %v3380 = vperm.slane %v3334, 7
        %v3381 = vperm.slane %v3335, 0
        %v3382 = vperm.slane %v3335, 1
        %v3383 = vperm.slane %v3335, 2
        %v3384 = vperm.slane %v3335, 3
        %v3385 = vperm.slane %v3335, 4
        %v3386 = vperm.slane %v3335, 5
        %v3387 = vperm.slane %v3335, 6
        %v3388 = vperm.slane %v3335, 7
        %v3389 = vperm.slane %v3336, 0
        %v3390 = vperm.slane %v3336, 1
        %v3391 = vperm.slane %v3336, 2
        %v3392 = vperm.slane %v3336, 3
        %v3393 = vperm.slane %v3336, 4
        %v3394 = vperm.slane %v3336, 5
        %v3395 = vperm.slane %v3336, 6
        %v3396 = vperm.slane %v3336, 7
        %v3397 = vperm.slane %v3337, 0
        %v3398 = vperm.slane %v3337, 1
        %v3399 = vperm.slane %v3337, 2
        %v3400 = vperm.slane %v3337, 3
        %v3401 = vperm.slane %v3337, 4
        %v3402 = vperm.slane %v3337, 5
        %v3403 = vperm.slane %v3337, 6
        %v3404 = vperm.slane %v3337, 7
        %v3405 = vperm.slane %v3338, 0
        %v3406 = vperm.slane %v3338, 1
        %v3407 = vperm.slane %v3338, 2
        %v3408 = vperm.slane %v3338, 3
        %v3409 = vperm.slane %v3338, 4
        %v3410 = vperm.slane %v3338, 5
        %v3411 = vperm.slane %v3338, 6
        %v3412 = vperm.slane %v3338, 7
        %v3413 = vperm.slane %v3339, 0
        %v3414 = vperm.slane %v3339, 1
        %v3415 = vperm.slane %v3339, 2
        %v3416 = vperm.slane %v3339, 3
        %v3417 = vperm.slane %v3339, 4
        %v3418 = vperm.slane %v3339, 5
        %v3419 = vperm.slane %v3339, 6
        %v3420 = vperm.slane %v3339, 7
        %v3493 = vsub.f32 %v3054, %v3349
        %v3494 = vsub.f32 %v3055, %v3350
        %v3495 = vsub.f32 %v3056, %v3351
        %v3496 = vsub.f32 %v3057, %v3352
        %v3497 = vsub.f32 %v3058, %v3353
        %v3498 = vsub.f32 %v3059, %v3354
        %v3499 = vsub.f32 %v3060, %v3355
        %v3500 = vsub.f32 %v3061, %v3356
        %v3501 = vsub.f32 %v3062, %v3357
        %v3502 = vsub.f32 %v3063, %v3358
        %v3503 = vsub.f32 %v3064, %v3359
        %v3504 = vsub.f32 %v3065, %v3360
        %v3505 = vsub.f32 %v3066, %v3361
        %v3506 = vsub.f32 %v3067, %v3362
        %v3507 = vsub.f32 %v3068, %v3363
        %v3508 = vsub.f32 %v3069, %v3364
        %v3509 = vsub.f32 %v3070, %v3365
        %v3510 = vsub.f32 %v3071, %v3366
        %v3511 = vsub.f32 %v3072, %v3367
        %v3512 = vsub.f32 %v3073, %v3368
        %v3513 = vsub.f32 %v3074, %v3369
        %v3514 = vsub.f32 %v3075, %v3370
        %v3515 = vsub.f32 %v3076, %v3371
        %v3516 = vsub.f32 %v3077, %v3372
        %v3517 = vsub.f32 %v3078, %v3373
        %v3518 = vsub.f32 %v3079, %v3374
        %v3519 = vsub.f32 %v3080, %v3375
        %v3520 = vsub.f32 %v3081, %v3376
        %v3521 = vsub.f32 %v3082, %v3377
        %v3522 = vsub.f32 %v3083, %v3378
        %v3523 = vsub.f32 %v3084, %v3379
        %v3524 = vsub.f32 %v3085, %v3380
        %v3525 = vsub.f32 %v3086, %v3381
        %v3526 = vsub.f32 %v3087, %v3382
        %v3527 = vsub.f32 %v3088, %v3383
        %v3528 = vsub.f32 %v3089, %v3384
        %v3529 = vsub.f32 %v3090, %v3385
        %v3530 = vsub.f32 %v3091, %v3386
        %v3531 = vsub.f32 %v3092, %v3387
        %v3532 = vsub.f32 %v3093, %v3388
        %v3533 = vsub.f32 %v3094, %v3389
        %v3534 = vsub.f32 %v3095, %v3390
        %v3535 = vsub.f32 %v3096, %v3391
        %v3536 = vsub.f32 %v3097, %v3392
        %v3537 = vsub.f32 %v3098, %v3393
        %v3538 = vsub.f32 %v3099, %v3394
        %v3539 = vsub.f32 %v3100, %v3395
        %v3540 = vsub.f32 %v3101, %v3396
        %v3541 = vsub.f32 %v3102, %v3397
        %v3542 = vsub.f32 %v3103, %v3398
        %v3543 = vsub.f32 %v3104, %v3399
        %v3544 = vsub.f32 %v3105, %v3400
        %v3545 = vsub.f32 %v3106, %v3401
        %v3546 = vsub.f32 %v3107, %v3402
        %v3547 = vsub.f32 %v3108, %v3403
        %v3548 = vsub.f32 %v3109, %v3404
        %v3549 = vsub.f32 %v3110, %v3405
        %v3550 = vsub.f32 %v3111, %v3406
        %v3551 = vsub.f32 %v3112, %v3407
        %v3552 = vsub.f32 %v3113, %v3408
        %v3553 = vsub.f32 %v3114, %v3409
        %v3554 = vsub.f32 %v3115, %v3410
        %v3555 = vsub.f32 %v3116, %v3411
        %v3556 = vsub.f32 %v3117, %v3412
        %v3557 = vsub.f32 %v3118, %v3413
        %v3558 = vsub.f32 %v3119, %v3414
        %v3559 = vsub.f32 %v3120, %v3415
        %v3560 = vsub.f32 %v3121, %v3416
        %v3561 = vsub.f32 %v3122, %v3417
        %v3562 = vsub.f32 %v3123, %v3418
        %v3563 = vsub.f32 %v3124, %v3419
        %v3564 = vsub.f32 %v3125, %v3420
        %v3565 = vmul.f32 %v3493, %v3493
        %v3566 = vmul.f32 %v3494, %v3494
        %v3567 = vmul.f32 %v3495, %v3495
        %v3568 = vmul.f32 %v3496, %v3496
        %v3569 = vmul.f32 %v3497, %v3497
        %v3570 = vmul.f32 %v3498, %v3498
        %v3571 = vmul.f32 %v3499, %v3499
        %v3572 = vmul.f32 %v3500, %v3500
        %v3573 = vmul.f32 %v3501, %v3501
        %v3574 = vmul.f32 %v3502, %v3502
        %v3575 = vmul.f32 %v3503, %v3503
        %v3576 = vmul.f32 %v3504, %v3504
        %v3577 = vmul.f32 %v3505, %v3505
        %v3578 = vmul.f32 %v3506, %v3506
        %v3579 = vmul.f32 %v3507, %v3507
        %v3580 = vmul.f32 %v3508, %v3508
        %v3581 = vmul.f32 %v3509, %v3509
        %v3582 = vmul.f32 %v3510, %v3510
        %v3583 = vmul.f32 %v3511, %v3511
        %v3584 = vmul.f32 %v3512, %v3512
        %v3585 = vmul.f32 %v3513, %v3513
        %v3586 = vmul.f32 %v3514, %v3514
        %v3587 = vmul.f32 %v3515, %v3515
        %v3588 = vmul.f32 %v3516, %v3516
        %v3589 = vmul.f32 %v3517, %v3517
        %v3590 = vmul.f32 %v3518, %v3518
        %v3591 = vmul.f32 %v3519, %v3519
        %v3592 = vmul.f32 %v3520, %v3520
        %v3593 = vmul.f32 %v3521, %v3521
        %v3594 = vmul.f32 %v3522, %v3522
        %v3595 = vmul.f32 %v3523, %v3523
        %v3596 = vmul.f32 %v3524, %v3524
        %v3597 = vmul.f32 %v3525, %v3525
        %v3598 = vmul.f32 %v3526, %v3526
        %v3599 = vmul.f32 %v3527, %v3527
        %v3600 = vmul.f32 %v3528, %v3528
        %v3601 = vmul.f32 %v3529, %v3529
        %v3602 = vmul.f32 %v3530, %v3530
        %v3603 = vmul.f32 %v3531, %v3531
        %v3604 = vmul.f32 %v3532, %v3532
        %v3605 = vmul.f32 %v3533, %v3533
        %v3606 = vmul.f32 %v3534, %v3534
        %v3607 = vmul.f32 %v3535, %v3535
        %v3608 = vmul.f32 %v3536, %v3536
        %v3609 = vmul.f32 %v3537, %v3537
        %v3610 = vmul.f32 %v3538, %v3538
        %v3611 = vmul.f32 %v3539, %v3539
        %v3612 = vmul.f32 %v3540, %v3540
        %v3613 = vmul.f32 %v3541, %v3541
        %v3614 = vmul.f32 %v3542, %v3542
        %v3615 = vmul.f32 %v3543, %v3543
        %v3616 = vmul.f32 %v3544, %v3544
        %v3617 = vmul.f32 %v3545, %v3545
        %v3618 = vmul.f32 %v3546, %v3546
        %v3619 = vmul.f32 %v3547, %v3547
        %v3620 = vmul.f32 %v3548, %v3548
        %v3621 = vmul.f32 %v3549, %v3549
        %v3622 = vmul.f32 %v3550, %v3550
        %v3623 = vmul.f32 %v3551, %v3551
        %v3624 = vmul.f32 %v3552, %v3552
        %v3625 = vmul.f32 %v3553, %v3553
        %v3626 = vmul.f32 %v3554, %v3554
        %v3627 = vmul.f32 %v3555, %v3555
        %v3628 = vmul.f32 %v3556, %v3556
        %v3629 = vmul.f32 %v3557, %v3557
        %v3630 = vmul.f32 %v3558, %v3558
        %v3631 = vmul.f32 %v3559, %v3559
        %v3632 = vmul.f32 %v3560, %v3560
        %v3633 = vmul.f32 %v3561, %v3561
        %v3634 = vmul.f32 %v3562, %v3562
        %v3635 = vmul.f32 %v3563, %v3563
        %v3636 = vmul.f32 %v3564, %v3564
        %3709 = vst [vmem:[#allocation1] ss:$9 sm:$0xff] %v3565
        %s3710 = scalar_lea.vmem [#allocation1], 1
        %3711 = vst [vmem:[%s3710] ss:$9 sm:$0xff] %v3566
        %s3712 = scalar_lea.vmem [#allocation1], 2
        %3713 = vst [vmem:[%s3712] ss:$9 sm:$0xff] %v3567
        %s3714 = scalar_lea.vmem [#allocation1], 3
        %3715 = vst [vmem:[%s3714] ss:$9 sm:$0xff] %v3568
        %s3716 = scalar_lea.vmem [#allocation1], 4
        %3717 = vst [vmem:[%s3716] ss:$9 sm:$0xff] %v3569
        %s3718 = scalar_lea.vmem [#allocation1], 5
        %3719 = vst [vmem:[%s3718] ss:$9 sm:$0xff] %v3570
        %s3720 = scalar_lea.vmem [#allocation1], 6
        %3721 = vst [vmem:[%s3720] ss:$9 sm:$0xff] %v3571
        %s3722 = scalar_lea.vmem [#allocation1], 7
        %3723 = vst [vmem:[%s3722] ss:$9 sm:$0xff] %v3572
        %v3724 = vld [vmem:[#allocation1] sm:$0xff]
        %3725 = vst [vmem:[#allocation1] ss:$9 sm:$0xff] %v3573
        %3726 = vst [vmem:[%s3710] ss:$9 sm:$0xff] %v3574
        %3727 = vst [vmem:[%s3712] ss:$9 sm:$0xff] %v3575
        %3728 = vst [vmem:[%s3714] ss:$9 sm:$0xff] %v3576
        %3729 = vst [vmem:[%s3716] ss:$9 sm:$0xff] %v3577
        %3730 = vst [vmem:[%s3718] ss:$9 sm:$0xff] %v3578
        %3731 = vst [vmem:[%s3720] ss:$9 sm:$0xff] %v3579
        %3732 = vst [vmem:[%s3722] ss:$9 sm:$0xff] %v3580
        %v3733 = vld [vmem:[#allocation1] sm:$0xff]
        %3734 = vst [vmem:[#allocation1] ss:$9 sm:$0xff] %v3581
        %3735 = vst [vmem:[%s3710] ss:$9 sm:$0xff] %v3582
        %3736 = vst [vmem:[%s3712] ss:$9 sm:$0xff] %v3583
        %3737 = vst [vmem:[%s3714] ss:$9 sm:$0xff] %v3584
        %3738 = vst [vmem:[%s3716] ss:$9 sm:$0xff] %v3585
        %3739 = vst [vmem:[%s3718] ss:$9 sm:$0xff] %v3586
        %3740 = vst [vmem:[%s3720] ss:$9 sm:$0xff] %v3587
        %3741 = vst [vmem:[%s3722] ss:$9 sm:$0xff] %v3588
        %v3742 = vld [vmem:[#allocation1] sm:$0xff]
        %3743 = vst [vmem:[#allocation1] ss:$9 sm:$0xff] %v3589
        %3744 = vst [vmem:[%s3710] ss:$9 sm:$0xff] %v3590
        %3745 = vst [vmem:[%s3712] ss:$9 sm:$0xff] %v3591
        %3746 = vst [vmem:[%s3714] ss:$9 sm:$0xff] %v3592
        %3747 = vst [vmem:[%s3716] ss:$9 sm:$0xff] %v3593
        %3748 = vst [vmem:[%s3718] ss:$9 sm:$0xff] %v3594
        %3749 = vst [vmem:[%s3720] ss:$9 sm:$0xff] %v3595
        %3750 = vst [vmem:[%s3722] ss:$9 sm:$0xff] %v3596
        %v3751 = vld [vmem:[#allocation1] sm:$0xff]
        %3752 = vst [vmem:[#allocation1] ss:$9 sm:$0xff] %v3597
        %3753 = vst [vmem:[%s3710] ss:$9 sm:$0xff] %v3598
        %3754 = vst [vmem:[%s3712] ss:$9 sm:$0xff] %v3599
        %3755 = vst [vmem:[%s3714] ss:$9 sm:$0xff] %v3600
        %3756 = vst [vmem:[%s3716] ss:$9 sm:$0xff] %v3601
        %3757 = vst [vmem:[%s3718] ss:$9 sm:$0xff] %v3602
        %3758 = vst [vmem:[%s3720] ss:$9 sm:$0xff] %v3603
        %3759 = vst [vmem:[%s3722] ss:$9 sm:$0xff] %v3604
        %v3760 = vld [vmem:[#allocation1] sm:$0xff]
        %3761 = vst [vmem:[#allocation1] ss:$9 sm:$0xff] %v3605
        %3762 = vst [vmem:[%s3710] ss:$9 sm:$0xff] %v3606
        %3763 = vst [vmem:[%s3712] ss:$9 sm:$0xff] %v3607
        %3764 = vst [vmem:[%s3714] ss:$9 sm:$0xff] %v3608
        %3765 = vst [vmem:[%s3716] ss:$9 sm:$0xff] %v3609
        %3766 = vst [vmem:[%s3718] ss:$9 sm:$0xff] %v3610
        %3767 = vst [vmem:[%s3720] ss:$9 sm:$0xff] %v3611
        %3768 = vst [vmem:[%s3722] ss:$9 sm:$0xff] %v3612
        %v3769 = vld [vmem:[#allocation1] sm:$0xff]
        %3770 = vst [vmem:[#allocation1] ss:$9 sm:$0xff] %v3613
        %3771 = vst [vmem:[%s3710] ss:$9 sm:$0xff] %v3614
        %3772 = vst [vmem:[%s3712] ss:$9 sm:$0xff] %v3615
        %3773 = vst [vmem:[%s3714] ss:$9 sm:$0xff] %v3616
        %3774 = vst [vmem:[%s3716] ss:$9 sm:$0xff] %v3617
        %3775 = vst [vmem:[%s3718] ss:$9 sm:$0xff] %v3618
        %3776 = vst [vmem:[%s3720] ss:$9 sm:$0xff] %v3619
        %3777 = vst [vmem:[%s3722] ss:$9 sm:$0xff] %v3620
        %v3778 = vld [vmem:[#allocation1] sm:$0xff]
        %3779 = vst [vmem:[#allocation1] ss:$9 sm:$0xff] %v3621
        %3780 = vst [vmem:[%s3710] ss:$9 sm:$0xff] %v3622
        %3781 = vst [vmem:[%s3712] ss:$9 sm:$0xff] %v3623
        %3782 = vst [vmem:[%s3714] ss:$9 sm:$0xff] %v3624
        %3783 = vst [vmem:[%s3716] ss:$9 sm:$0xff] %v3625
        %3784 = vst [vmem:[%s3718] ss:$9 sm:$0xff] %v3626
        %3785 = vst [vmem:[%s3720] ss:$9 sm:$0xff] %v3627
        %3786 = vst [vmem:[%s3722] ss:$9 sm:$0xff] %v3628
        %v3787 = vld [vmem:[#allocation1] sm:$0xff]
        %3788 = vst [vmem:[#allocation1] ss:$9 sm:$0xff] %v3629
        %3789 = vst [vmem:[%s3710] ss:$9 sm:$0xff] %v3630
        %3790 = vst [vmem:[%s3712] ss:$9 sm:$0xff] %v3631
        %3791 = vst [vmem:[%s3714] ss:$9 sm:$0xff] %v3632
        %3792 = vst [vmem:[%s3716] ss:$9 sm:$0xff] %v3633
        %3793 = vst [vmem:[%s3718] ss:$9 sm:$0xff] %v3634
        %3794 = vst [vmem:[%s3720] ss:$9 sm:$0xff] %v3635
        %3795 = vst [vmem:[%s3722] ss:$9 sm:$0xff] %v3636
        %v3796 = vld [vmem:[#allocation1] sm:$0xff]
        %v3806 = vsel %vm1267, %v3724, 0.0
        %3807 = vadd.xlane.f32.xlu0 %v3806
        %v3808 = vpop.xlane.xlu0 %3807
        %v3809 = vsel %vm1267, %v3733, 0.0
        %3810 = vadd.xlane.f32.xlu0 %v3809
        %v3811 = vpop.xlane.xlu0 %3810
        %v3812 = vsel %vm1267, %v3742, 0.0
        %3813 = vadd.xlane.f32.xlu0 %v3812
        %v3814 = vpop.xlane.xlu0 %3813
        %v3815 = vsel %vm1267, %v3751, 0.0
        %3816 = vadd.xlane.f32.xlu0 %v3815
        %v3817 = vpop.xlane.xlu0 %3816
        %v3818 = vsel %vm1267, %v3760, 0.0
        %3819 = vadd.xlane.f32.xlu0 %v3818
        %v3820 = vpop.xlane.xlu0 %3819
        %v3821 = vsel %vm1267, %v3769, 0.0
        %3822 = vadd.xlane.f32.xlu0 %v3821
        %v3823 = vpop.xlane.xlu0 %3822
        %v3824 = vsel %vm1267, %v3778, 0.0
        %3825 = vadd.xlane.f32.xlu0 %v3824
        %v3826 = vpop.xlane.xlu0 %3825
        %v3827 = vsel %vm1267, %v3787, 0.0
        %3828 = vadd.xlane.f32.xlu0 %v3827
        %v3829 = vpop.xlane.xlu0 %3828
        %v3830 = vsel %vm1267, %v3796, 0.0
        %3831 = vadd.xlane.f32.xlu0 %v3830
        %v3832 = vpop.xlane.xlu0 %3831
        %v3833 = vmul.f32 %v3808, %v3330
        %v3834 = vmul.f32 %v3811, %v3330
        %v3835 = vmul.f32 %v3814, %v3330
        %v3836 = vmul.f32 %v3817, %v3330
        %v3837 = vmul.f32 %v3820, %v3330
        %v3838 = vmul.f32 %v3823, %v3330
        %v3839 = vmul.f32 %v3826, %v3330
        %v3840 = vmul.f32 %v3829, %v3330
        %v3841 = vmul.f32 %v3832, %v3330
        %v3842 = vadd.f32 %v3833, 1e-05
        %v3843 = vadd.f32 %v3834, 1e-05
        %v3844 = vadd.f32 %v3835, 1e-05
        %v3845 = vadd.f32 %v3836, 1e-05
        %v3846 = vadd.f32 %v3837, 1e-05
        %v3847 = vadd.f32 %v3838, 1e-05
        %v3848 = vadd.f32 %v3839, 1e-05
        %v3849 = vadd.f32 %v3840, 1e-05
        %v3850 = vadd.f32 %v3841, 1e-05
        %v3851 = vrsqrt.pop %v3842
        %v3852 = vmul.f32 %v3851, %v3842
        %v3853 = vmul.f32 %v3852, %v3851
        %v3854 = vmul.f32 0.5, %v3853
        %v3855 = vsub.f32 1.5, %v3854
        %v3856 = vmul.f32 %v3851, %v3855
        %vm3857 = vweird.f32 %v3842
        %vm3858 = vweird.f32 %v3851
        %vm3859 = vmor %vm3857, %vm3858
        %v3860 = vsel %vm3859, %v3851, %v3856
        %v3861 = vrsqrt.pop %v3843
        %v3862 = vmul.f32 %v3861, %v3843
        %v3863 = vmul.f32 %v3862, %v3861
        %v3864 = vmul.f32 0.5, %v3863
        %v3865 = vsub.f32 1.5, %v3864
        %v3866 = vmul.f32 %v3861, %v3865
        %vm3867 = vweird.f32 %v3843
        %vm3868 = vweird.f32 %v3861
        %vm3869 = vmor %vm3867, %vm3868
        %v3870 = vsel %vm3869, %v3861, %v3866
        %v3871 = vrsqrt.pop %v3844
        %v3872 = vmul.f32 %v3871, %v3844
        %v3873 = vmul.f32 %v3872, %v3871
        %v3874 = vmul.f32 0.5, %v3873
        %v3875 = vsub.f32 1.5, %v3874
        %v3876 = vmul.f32 %v3871, %v3875
        %vm3877 = vweird.f32 %v3844
        %vm3878 = vweird.f32 %v3871
        %vm3879 = vmor %vm3877, %vm3878
        %v3880 = vsel %vm3879, %v3871, %v3876
        %v3881 = vrsqrt.pop %v3845
        %v3882 = vmul.f32 %v3881, %v3845
        %v3883 = vmul.f32 %v3882, %v3881
        %v3884 = vmul.f32 0.5, %v3883
        %v3885 = vsub.f32 1.5, %v3884
        %v3886 = vmul.f32 %v3881, %v3885
        %vm3887 = vweird.f32 %v3845
        %vm3888 = vweird.f32 %v3881
        %vm3889 = vmor %vm3887, %vm3888
        %v3890 = vsel %vm3889, %v3881, %v3886
        %v3891 = vrsqrt.pop %v3846
        %v3892 = vmul.f32 %v3891, %v3846
        %v3893 = vmul.f32 %v3892, %v3891
        %v3894 = vmul.f32 0.5, %v3893
        %v3895 = vsub.f32 1.5, %v3894
        %v3896 = vmul.f32 %v3891, %v3895
        %vm3897 = vweird.f32 %v3846
        %vm3898 = vweird.f32 %v3891
        %vm3899 = vmor %vm3897, %vm3898
        %v3900 = vsel %vm3899, %v3891, %v3896
        %v3901 = vrsqrt.pop %v3847
        %v3902 = vmul.f32 %v3901, %v3847
        %v3903 = vmul.f32 %v3902, %v3901
        %v3904 = vmul.f32 0.5, %v3903
        %v3905 = vsub.f32 1.5, %v3904
        %v3906 = vmul.f32 %v3901, %v3905
        %vm3907 = vweird.f32 %v3847
        %vm3908 = vweird.f32 %v3901
        %vm3909 = vmor %vm3907, %vm3908
        %v3910 = vsel %vm3909, %v3901, %v3906
        %v3911 = vrsqrt.pop %v3848
        %v3912 = vmul.f32 %v3911, %v3848
        %v3913 = vmul.f32 %v3912, %v3911
        %v3914 = vmul.f32 0.5, %v3913
        %v3915 = vsub.f32 1.5, %v3914
        %v3916 = vmul.f32 %v3911, %v3915
        %vm3917 = vweird.f32 %v3848
        %vm3918 = vweird.f32 %v3911
        %vm3919 = vmor %vm3917, %vm3918
        %v3920 = vsel %vm3919, %v3911, %v3916
        %v3921 = vrsqrt.pop %v3849
        %v3922 = vmul.f32 %v3921, %v3849
        %v3923 = vmul.f32 %v3922, %v3921
        %v3924 = vmul.f32 0.5, %v3923
        %v3925 = vsub.f32 1.5, %v3924
        %v3926 = vmul.f32 %v3921, %v3925
        %vm3927 = vweird.f32 %v3849
        %vm3928 = vweird.f32 %v3921
        %vm3929 = vmor %vm3927, %vm3928
        %v3930 = vsel %vm3929, %v3921, %v3926
        %v3931 = vrsqrt.pop %v3850
        %v3932 = vmul.f32 %v3931, %v3850
        %v3933 = vmul.f32 %v3932, %v3931
        %v3934 = vmul.f32 0.5, %v3933
        %v3935 = vsub.f32 1.5, %v3934
        %v3936 = vmul.f32 %v3931, %v3935
        %vm3937 = vweird.f32 %v3850
        %vm3938 = vweird.f32 %v3931
        %vm3939 = vmor %vm3937, %vm3938
        %v3940 = vsel %vm3939, %v3931, %v3936
        %v3950 = vperm.slane %v3860, 0
        %v3951 = vperm.slane %v3860, 1
        %v3952 = vperm.slane %v3860, 2
        %v3953 = vperm.slane %v3860, 3
        %v3954 = vperm.slane %v3860, 4
        %v3955 = vperm.slane %v3860, 5
        %v3956 = vperm.slane %v3860, 6
        %v3957 = vperm.slane %v3860, 7
        %v3958 = vperm.slane %v3870, 0
        %v3959 = vperm.slane %v3870, 1
        %v3960 = vperm.slane %v3870, 2
        %v3961 = vperm.slane %v3870, 3
        %v3962 = vperm.slane %v3870, 4
        %v3963 = vperm.slane %v3870, 5
        %v3964 = vperm.slane %v3870, 6
        %v3965 = vperm.slane %v3870, 7
        %v3966 = vperm.slane %v3880, 0
        %v3967 = vperm.slane %v3880, 1
        %v3968 = vperm.slane %v3880, 2
        %v3969 = vperm.slane %v3880, 3
        %v3970 = vperm.slane %v3880, 4
        %v3971 = vperm.slane %v3880, 5
        %v3972 = vperm.slane %v3880, 6
        %v3973 = vperm.slane %v3880, 7
        %v3974 = vperm.slane %v3890, 0
        %v3975 = vperm.slane %v3890, 1
        %v3976 = vperm.slane %v3890, 2
        %v3977 = vperm.slane %v3890, 3
        %v3978 = vperm.slane %v3890, 4
        %v3979 = vperm.slane %v3890, 5
        %v3980 = vperm.slane %v3890, 6
        %v3981 = vperm.slane %v3890, 7
        %v3982 = vperm.slane %v3900, 0
        %v3983 = vperm.slane %v3900, 1
        %v3984 = vperm.slane %v3900, 2
        %v3985 = vperm.slane %v3900, 3
        %v3986 = vperm.slane %v3900, 4
        %v3987 = vperm.slane %v3900, 5
        %v3988 = vperm.slane %v3900, 6
        %v3989 = vperm.slane %v3900, 7
        %v3990 = vperm.slane %v3910, 0
        %v3991 = vperm.slane %v3910, 1
        %v3992 = vperm.slane %v3910, 2
        %v3993 = vperm.slane %v3910, 3
        %v3994 = vperm.slane %v3910, 4
        %v3995 = vperm.slane %v3910, 5
        %v3996 = vperm.slane %v3910, 6
        %v3997 = vperm.slane %v3910, 7
        %v3998 = vperm.slane %v3920, 0
        %v3999 = vperm.slane %v3920, 1
        %v4000 = vperm.slane %v3920, 2
        %v4001 = vperm.slane %v3920, 3
        %v4002 = vperm.slane %v3920, 4
        %v4003 = vperm.slane %v3920, 5
        %v4004 = vperm.slane %v3920, 6
        %v4005 = vperm.slane %v3920, 7
        %v4006 = vperm.slane %v3930, 0
        %v4007 = vperm.slane %v3930, 1
        %v4008 = vperm.slane %v3930, 2
        %v4009 = vperm.slane %v3930, 3
        %v4010 = vperm.slane %v3930, 4
        %v4011 = vperm.slane %v3930, 5
        %v4012 = vperm.slane %v3930, 6
        %v4013 = vperm.slane %v3930, 7
        %v4014 = vperm.slane %v3940, 0
        %v4015 = vperm.slane %v3940, 1
        %v4016 = vperm.slane %v3940, 2
        %v4017 = vperm.slane %v3940, 3
        %v4018 = vperm.slane %v3940, 4
        %v4019 = vperm.slane %v3940, 5
        %v4020 = vperm.slane %v3940, 6
        %v4021 = vperm.slane %v3940, 7
        %v4094 = vmul.f32 %v3493, %v3950
        %v4095 = vmul.f32 %v3494, %v3951
        %v4096 = vmul.f32 %v3495, %v3952
        %v4097 = vmul.f32 %v3496, %v3953
        %v4098 = vmul.f32 %v3497, %v3954
        %v4099 = vmul.f32 %v3498, %v3955
        %v4100 = vmul.f32 %v3499, %v3956
        %v4101 = vmul.f32 %v3500, %v3957
        %v4102 = vmul.f32 %v3501, %v3958
        %v4103 = vmul.f32 %v3502, %v3959
        %v4104 = vmul.f32 %v3503, %v3960
        %v4105 = vmul.f32 %v3504, %v3961
        %v4106 = vmul.f32 %v3505, %v3962
        %v4107 = vmul.f32 %v3506, %v3963
        %v4108 = vmul.f32 %v3507, %v3964
        %v4109 = vmul.f32 %v3508, %v3965
        %v4110 = vmul.f32 %v3509, %v3966
        %v4111 = vmul.f32 %v3510, %v3967
        %v4112 = vmul.f32 %v3511, %v3968
        %v4113 = vmul.f32 %v3512, %v3969
        %v4114 = vmul.f32 %v3513, %v3970
        %v4115 = vmul.f32 %v3514, %v3971
        %v4116 = vmul.f32 %v3515, %v3972
        %v4117 = vmul.f32 %v3516, %v3973
        %v4118 = vmul.f32 %v3517, %v3974
        %v4119 = vmul.f32 %v3518, %v3975
        %v4120 = vmul.f32 %v3519, %v3976
        %v4121 = vmul.f32 %v3520, %v3977
        %v4122 = vmul.f32 %v3521, %v3978
        %v4123 = vmul.f32 %v3522, %v3979
        %v4124 = vmul.f32 %v3523, %v3980
        %v4125 = vmul.f32 %v3524, %v3981
        %v4126 = vmul.f32 %v3525, %v3982
        %v4127 = vmul.f32 %v3526, %v3983
        %v4128 = vmul.f32 %v3527, %v3984
        %v4129 = vmul.f32 %v3528, %v3985
        %v4130 = vmul.f32 %v3529, %v3986
        %v4131 = vmul.f32 %v3530, %v3987
        %v4132 = vmul.f32 %v3531, %v3988
        %v4133 = vmul.f32 %v3532, %v3989
        %v4134 = vmul.f32 %v3533, %v3990
        %v4135 = vmul.f32 %v3534, %v3991
        %v4136 = vmul.f32 %v3535, %v3992
        %v4137 = vmul.f32 %v3536, %v3993
        %v4138 = vmul.f32 %v3537, %v3994
        %v4139 = vmul.f32 %v3538, %v3995
        %v4140 = vmul.f32 %v3539, %v3996
        %v4141 = vmul.f32 %v3540, %v3997
        %v4142 = vmul.f32 %v3541, %v3998
        %v4143 = vmul.f32 %v3542, %v3999
        %v4144 = vmul.f32 %v3543, %v4000
        %v4145 = vmul.f32 %v3544, %v4001
        %v4146 = vmul.f32 %v3545, %v4002
        %v4147 = vmul.f32 %v3546, %v4003
        %v4148 = vmul.f32 %v3547, %v4004
        %v4149 = vmul.f32 %v3548, %v4005
        %v4150 = vmul.f32 %v3549, %v4006
        %v4151 = vmul.f32 %v3550, %v4007
        %v4152 = vmul.f32 %v3551, %v4008
        %v4153 = vmul.f32 %v3552, %v4009
        %v4154 = vmul.f32 %v3553, %v4010
        %v4155 = vmul.f32 %v3554, %v4011
        %v4156 = vmul.f32 %v3555, %v4012
        %v4157 = vmul.f32 %v3556, %v4013
        %v4158 = vmul.f32 %v3557, %v4014
        %v4159 = vmul.f32 %v3558, %v4015
        %v4160 = vmul.f32 %v3559, %v4016
        %v4161 = vmul.f32 %v3560, %v4017
        %v4162 = vmul.f32 %v3561, %v4018
        %v4163 = vmul.f32 %v3562, %v4019
        %v4164 = vmul.f32 %v3563, %v4020
        %v4165 = vmul.f32 %v3564, %v4021
        %v4167 = vperm.slane %v3126, 0
        %v4169 = vrot.slane %v4167, 1
        %v4170 = vrot.slane %v4167, 2
        %v4171 = vrot.slane %v4167, 3
        %v4172 = vrot.slane %v4167, 4
        %v4173 = vrot.slane %v4167, 5
        %v4174 = vrot.slane %v4167, 6
        %v4175 = vrot.slane %v4167, 7
        %v4183 = vmul.f32 %v4094, %v4167
        %v4184 = vmul.f32 %v4095, %v4169
        %v4185 = vmul.f32 %v4096, %v4170
        %v4186 = vmul.f32 %v4097, %v4171
        %v4187 = vmul.f32 %v4098, %v4172
        %v4188 = vmul.f32 %v4099, %v4173
        %v4189 = vmul.f32 %v4100, %v4174
        %v4190 = vmul.f32 %v4101, %v4175
        %v4191 = vmul.f32 %v4102, %v4167
        %v4192 = vmul.f32 %v4103, %v4169
        %v4193 = vmul.f32 %v4104, %v4170
        %v4194 = vmul.f32 %v4105, %v4171
        %v4195 = vmul.f32 %v4106, %v4172
        %v4196 = vmul.f32 %v4107, %v4173
        %v4197 = vmul.f32 %v4108, %v4174
        %v4198 = vmul.f32 %v4109, %v4175
        %v4199 = vmul.f32 %v4110, %v4167
        %v4200 = vmul.f32 %v4111, %v4169
        %v4201 = vmul.f32 %v4112, %v4170
        %v4202 = vmul.f32 %v4113, %v4171
        %v4203 = vmul.f32 %v4114, %v4172
        %v4204 = vmul.f32 %v4115, %v4173
        %v4205 = vmul.f32 %v4116, %v4174
        %v4206 = vmul.f32 %v4117, %v4175
        %v4207 = vmul.f32 %v4118, %v4167
        %v4208 = vmul.f32 %v4119, %v4169
        %v4209 = vmul.f32 %v4120, %v4170
        %v4210 = vmul.f32 %v4121, %v4171
        %v4211 = vmul.f32 %v4122, %v4172
        %v4212 = vmul.f32 %v4123, %v4173
        %v4213 = vmul.f32 %v4124, %v4174
        %v4214 = vmul.f32 %v4125, %v4175
        %v4215 = vmul.f32 %v4126, %v4167
        %v4216 = vmul.f32 %v4127, %v4169
        %v4217 = vmul.f32 %v4128, %v4170
        %v4218 = vmul.f32 %v4129, %v4171
        %v4219 = vmul.f32 %v4130, %v4172
        %v4220 = vmul.f32 %v4131, %v4173
        %v4221 = vmul.f32 %v4132, %v4174
        %v4222 = vmul.f32 %v4133, %v4175
        %v4223 = vmul.f32 %v4134, %v4167
        %v4224 = vmul.f32 %v4135, %v4169
        %v4225 = vmul.f32 %v4136, %v4170
        %v4226 = vmul.f32 %v4137, %v4171
        %v4227 = vmul.f32 %v4138, %v4172
        %v4228 = vmul.f32 %v4139, %v4173
        %v4229 = vmul.f32 %v4140, %v4174
        %v4230 = vmul.f32 %v4141, %v4175
        %v4231 = vmul.f32 %v4142, %v4167
        %v4232 = vmul.f32 %v4143, %v4169
        %v4233 = vmul.f32 %v4144, %v4170
        %v4234 = vmul.f32 %v4145, %v4171
        %v4235 = vmul.f32 %v4146, %v4172
        %v4236 = vmul.f32 %v4147, %v4173
        %v4237 = vmul.f32 %v4148, %v4174
        %v4238 = vmul.f32 %v4149, %v4175
        %v4239 = vmul.f32 %v4150, %v4167
        %v4240 = vmul.f32 %v4151, %v4169
        %v4241 = vmul.f32 %v4152, %v4170
        %v4242 = vmul.f32 %v4153, %v4171
        %v4243 = vmul.f32 %v4154, %v4172
        %v4244 = vmul.f32 %v4155, %v4173
        %v4245 = vmul.f32 %v4156, %v4174
        %v4246 = vmul.f32 %v4157, %v4175
        %v4247 = vmul.f32 %v4158, %v4167
        %v4248 = vmul.f32 %v4159, %v4169
        %v4249 = vmul.f32 %v4160, %v4170
        %v4250 = vmul.f32 %v4161, %v4171
        %v4251 = vmul.f32 %v4162, %v4172
        %v4252 = vmul.f32 %v4163, %v4173
        %v4253 = vmul.f32 %v4164, %v4174
        %v4254 = vmul.f32 %v4165, %v4175
        %v4256 = vperm.slane %v3127, 0
        %v4258 = vrot.slane %v4256, 1
        %v4259 = vrot.slane %v4256, 2
        %v4260 = vrot.slane %v4256, 3
        %v4261 = vrot.slane %v4256, 4
        %v4262 = vrot.slane %v4256, 5
        %v4263 = vrot.slane %v4256, 6
        %v4264 = vrot.slane %v4256, 7
        %v4272 = vadd.f32 %v4183, %v4256
        %v4273 = vadd.f32 %v4184, %v4258
        %v4274 = vadd.f32 %v4185, %v4259
        %v4275 = vadd.f32 %v4186, %v4260
        %v4276 = vadd.f32 %v4187, %v4261
        %v4277 = vadd.f32 %v4188, %v4262
        %v4278 = vadd.f32 %v4189, %v4263
        %v4279 = vadd.f32 %v4190, %v4264
        %v4280 = vadd.f32 %v4191, %v4256
        %v4281 = vadd.f32 %v4192, %v4258
        %v4282 = vadd.f32 %v4193, %v4259
        %v4283 = vadd.f32 %v4194, %v4260
        %v4284 = vadd.f32 %v4195, %v4261
        %v4285 = vadd.f32 %v4196, %v4262
        %v4286 = vadd.f32 %v4197, %v4263
        %v4287 = vadd.f32 %v4198, %v4264
        %v4288 = vadd.f32 %v4199, %v4256
        %v4289 = vadd.f32 %v4200, %v4258
        %v4290 = vadd.f32 %v4201, %v4259
        %v4291 = vadd.f32 %v4202, %v4260
        %v4292 = vadd.f32 %v4203, %v4261
        %v4293 = vadd.f32 %v4204, %v4262
        %v4294 = vadd.f32 %v4205, %v4263
        %v4295 = vadd.f32 %v4206, %v4264
        %v4296 = vadd.f32 %v4207, %v4256
        %v4297 = vadd.f32 %v4208, %v4258
        %v4298 = vadd.f32 %v4209, %v4259
        %v4299 = vadd.f32 %v4210, %v4260
        %v4300 = vadd.f32 %v4211, %v4261
        %v4301 = vadd.f32 %v4212, %v4262
        %v4302 = vadd.f32 %v4213, %v4263
        %v4303 = vadd.f32 %v4214, %v4264
        %v4304 = vadd.f32 %v4215, %v4256
        %v4305 = vadd.f32 %v4216, %v4258
        %v4306 = vadd.f32 %v4217, %v4259
        %v4307 = vadd.f32 %v4218, %v4260
        %v4308 = vadd.f32 %v4219, %v4261
        %v4309 = vadd.f32 %v4220, %v4262
        %v4310 = vadd.f32 %v4221, %v4263
        %v4311 = vadd.f32 %v4222, %v4264
        %v4312 = vadd.f32 %v4223, %v4256
        %v4313 = vadd.f32 %v4224, %v4258
        %v4314 = vadd.f32 %v4225, %v4259
        %v4315 = vadd.f32 %v4226, %v4260
        %v4316 = vadd.f32 %v4227, %v4261
        %v4317 = vadd.f32 %v4228, %v4262
        %v4318 = vadd.f32 %v4229, %v4263
        %v4319 = vadd.f32 %v4230, %v4264
        %v4320 = vadd.f32 %v4231, %v4256
        %v4321 = vadd.f32 %v4232, %v4258
        %v4322 = vadd.f32 %v4233, %v4259
        %v4323 = vadd.f32 %v4234, %v4260
        %v4324 = vadd.f32 %v4235, %v4261
        %v4325 = vadd.f32 %v4236, %v4262
        %v4326 = vadd.f32 %v4237, %v4263
        %v4327 = vadd.f32 %v4238, %v4264
        %v4328 = vadd.f32 %v4239, %v4256
        %v4329 = vadd.f32 %v4240, %v4258
        %v4330 = vadd.f32 %v4241, %v4259
        %v4331 = vadd.f32 %v4242, %v4260
        %v4332 = vadd.f32 %v4243, %v4261
        %v4333 = vadd.f32 %v4244, %v4262
        %v4334 = vadd.f32 %v4245, %v4263
        %v4335 = vadd.f32 %v4246, %v4264
        %v4336 = vadd.f32 %v4247, %v4256
        %v4337 = vadd.f32 %v4248, %v4258
        %v4338 = vadd.f32 %v4249, %v4259
        %v4339 = vadd.f32 %v4250, %v4260
        %v4340 = vadd.f32 %v4251, %v4261
        %v4341 = vadd.f32 %v4252, %v4262
        %v4342 = vadd.f32 %v4253, %v4263
        %v4343 = vadd.f32 %v4254, %v4264
        %4416 = vst [vmem:[#allocation1] ss:$9 sm:$0xff] %v4272
        %s4417 = scalar_lea.vmem [#allocation1], 1
        %4418 = vst [vmem:[%s4417] ss:$9 sm:$0xff] %v4273
        %s4419 = scalar_lea.vmem [#allocation1], 2
        %4420 = vst [vmem:[%s4419] ss:$9 sm:$0xff] %v4274
        %s4421 = scalar_lea.vmem [#allocation1], 3
        %4422 = vst [vmem:[%s4421] ss:$9 sm:$0xff] %v4275
        %s4423 = scalar_lea.vmem [#allocation1], 4
        %4424 = vst [vmem:[%s4423] ss:$9 sm:$0xff] %v4276
        %s4425 = scalar_lea.vmem [#allocation1], 5
        %4426 = vst [vmem:[%s4425] ss:$9 sm:$0xff] %v4277
        %s4427 = scalar_lea.vmem [#allocation1], 6
        %4428 = vst [vmem:[%s4427] ss:$9 sm:$0xff] %v4278
        %s4429 = scalar_lea.vmem [#allocation1], 7
        %4430 = vst [vmem:[%s4429] ss:$9 sm:$0xff] %v4279
        %v4431 = vld [vmem:[#allocation1] sm:$0xff]
        %4432 = vst [vmem:[#allocation1] ss:$9 sm:$0xff] %v4280
        %4433 = vst [vmem:[%s4417] ss:$9 sm:$0xff] %v4281
        %4434 = vst [vmem:[%s4419] ss:$9 sm:$0xff] %v4282
        %4435 = vst [vmem:[%s4421] ss:$9 sm:$0xff] %v4283
        %4436 = vst [vmem:[%s4423] ss:$9 sm:$0xff] %v4284
        %4437 = vst [vmem:[%s4425] ss:$9 sm:$0xff] %v4285
        %4438 = vst [vmem:[%s4427] ss:$9 sm:$0xff] %v4286
        %4439 = vst [vmem:[%s4429] ss:$9 sm:$0xff] %v4287
        %v4440 = vld [vmem:[#allocation1] sm:$0xff]
        %4441 = vst [vmem:[#allocation1] ss:$9 sm:$0xff] %v4288
        %4442 = vst [vmem:[%s4417] ss:$9 sm:$0xff] %v4289
        %4443 = vst [vmem:[%s4419] ss:$9 sm:$0xff] %v4290
        %4444 = vst [vmem:[%s4421] ss:$9 sm:$0xff] %v4291
        %4445 = vst [vmem:[%s4423] ss:$9 sm:$0xff] %v4292
        %4446 = vst [vmem:[%s4425] ss:$9 sm:$0xff] %v4293
        %4447 = vst [vmem:[%s4427] ss:$9 sm:$0xff] %v4294
        %4448 = vst [vmem:[%s4429] ss:$9 sm:$0xff] %v4295
        %v4449 = vld [vmem:[#allocation1] sm:$0xff]
        %4450 = vst [vmem:[#allocation1] ss:$9 sm:$0xff] %v4296
        %4451 = vst [vmem:[%s4417] ss:$9 sm:$0xff] %v4297
        %4452 = vst [vmem:[%s4419] ss:$9 sm:$0xff] %v4298
        %4453 = vst [vmem:[%s4421] ss:$9 sm:$0xff] %v4299
        %4454 = vst [vmem:[%s4423] ss:$9 sm:$0xff] %v4300
        %4455 = vst [vmem:[%s4425] ss:$9 sm:$0xff] %v4301
        %4456 = vst [vmem:[%s4427] ss:$9 sm:$0xff] %v4302
        %4457 = vst [vmem:[%s4429] ss:$9 sm:$0xff] %v4303
        %v4458 = vld [vmem:[#allocation1] sm:$0xff]
        %4459 = vst [vmem:[#allocation1] ss:$9 sm:$0xff] %v4304
        %4460 = vst [vmem:[%s4417] ss:$9 sm:$0xff] %v4305
        %4461 = vst [vmem:[%s4419] ss:$9 sm:$0xff] %v4306
        %4462 = vst [vmem:[%s4421] ss:$9 sm:$0xff] %v4307
        %4463 = vst [vmem:[%s4423] ss:$9 sm:$0xff] %v4308
        %4464 = vst [vmem:[%s4425] ss:$9 sm:$0xff] %v4309
        %4465 = vst [vmem:[%s4427] ss:$9 sm:$0xff] %v4310
        %4466 = vst [vmem:[%s4429] ss:$9 sm:$0xff] %v4311
        %v4467 = vld [vmem:[#allocation1] sm:$0xff]
        %4468 = vst [vmem:[#allocation1] ss:$9 sm:$0xff] %v4312
        %4469 = vst [vmem:[%s4417] ss:$9 sm:$0xff] %v4313
        %4470 = vst [vmem:[%s4419] ss:$9 sm:$0xff] %v4314
        %4471 = vst [vmem:[%s4421] ss:$9 sm:$0xff] %v4315
        %4472 = vst [vmem:[%s4423] ss:$9 sm:$0xff] %v4316
        %4473 = vst [vmem:[%s4425] ss:$9 sm:$0xff] %v4317
        %4474 = vst [vmem:[%s4427] ss:$9 sm:$0xff] %v4318
        %4475 = vst [vmem:[%s4429] ss:$9 sm:$0xff] %v4319
        %v4476 = vld [vmem:[#allocation1] sm:$0xff]
        %4477 = vst [vmem:[#allocation1] ss:$9 sm:$0xff] %v4320
        %4478 = vst [vmem:[%s4417] ss:$9 sm:$0xff] %v4321
        %4479 = vst [vmem:[%s4419] ss:$9 sm:$0xff] %v4322
        %4480 = vst [vmem:[%s4421] ss:$9 sm:$0xff] %v4323
        %4481 = vst [vmem:[%s4423] ss:$9 sm:$0xff] %v4324
        %4482 = vst [vmem:[%s4425] ss:$9 sm:$0xff] %v4325
        %4483 = vst [vmem:[%s4427] ss:$9 sm:$0xff] %v4326
        %4484 = vst [vmem:[%s4429] ss:$9 sm:$0xff] %v4327
        %v4485 = vld [vmem:[#allocation1] sm:$0xff]
        %4486 = vst [vmem:[#allocation1] ss:$9 sm:$0xff] %v4328
        %4487 = vst [vmem:[%s4417] ss:$9 sm:$0xff] %v4329
        %4488 = vst [vmem:[%s4419] ss:$9 sm:$0xff] %v4330
        %4489 = vst [vmem:[%s4421] ss:$9 sm:$0xff] %v4331
        %4490 = vst [vmem:[%s4423] ss:$9 sm:$0xff] %v4332
        %4491 = vst [vmem:[%s4425] ss:$9 sm:$0xff] %v4333
        %4492 = vst [vmem:[%s4427] ss:$9 sm:$0xff] %v4334
        %4493 = vst [vmem:[%s4429] ss:$9 sm:$0xff] %v4335
        %v4494 = vld [vmem:[#allocation1] sm:$0xff]
        %4495 = vst [vmem:[#allocation1] ss:$9 sm:$0xff] %v4336
        %4496 = vst [vmem:[%s4417] ss:$9 sm:$0xff] %v4337
        %4497 = vst [vmem:[%s4419] ss:$9 sm:$0xff] %v4338
        %4498 = vst [vmem:[%s4421] ss:$9 sm:$0xff] %v4339
        %4499 = vst [vmem:[%s4423] ss:$9 sm:$0xff] %v4340
        %4500 = vst [vmem:[%s4425] ss:$9 sm:$0xff] %v4341
        %4501 = vst [vmem:[%s4427] ss:$9 sm:$0xff] %v4342
        %4502 = vst [vmem:[%s4429] ss:$9 sm:$0xff] %v4343
        %v4503 = vld [vmem:[#allocation1] sm:$0xff]
        %v4513 = vpack.c.bf16 %v4440, %v4431
        %v4514 = vpack.c.bf16 %v4458, %v4449
        %v4515 = vpack.c.bf16 %v4476, %v4467
        %v4516 = vpack.c.bf16 %v4494, %v4485
        %v4517 = vpack.c.bf16 %v4503, %v4503
        %v4518 = vld [vmem:[%s869] sm:$0xf]
        %v4519 = vld [vmem:[%s869 + $0x4] sm:$0xf]
        %v4520 = vld [vmem:[%s872] sm:$0x1]
        %v4522 = vperm.slane %v4520, 0
        %v4526 = vunpack.c.l.b16 %v4518
        %v4527 = vunpack.c.l.b16 %v4519
        %v4528 = vpack.c.b16 %v4527, %v4526
        %v4531 = vsel %vm1267, %v4513, 0
        %v4534 = vsel %vm1267, %v4514, 0
        %v4537 = vsel %vm1267, %v4515, 0
        %v4540 = vsel %vm1267, %v4516, 0
        %v4543 = vsel %vm1267, %v4517, 0
        %4545 = vmatpush.bf16.msra.mxu0 0
        %4546 = vmatpush.bf16.msra.mxu0 0
        %4547 = vmatpush.bf16.msra.mxu0 0
        %4548 = vmatpush.bf16.msra.mxu0 0
        %4549 = vmatpush.bf16.msra.mxu0 0
        %4550 = vmatpush.bf16.msra.mxu0 0
        %4551 = vmatpush.bf16.msra.mxu0 0
        %4552 = vmatpush.bf16.msra.mxu0 %v4528
        %4553 = vmatmul.bf16.gmra.mxu0 %v4531
        %v4554 = vpop.f32.mrf.mxu0
        %v4555 = vadd.f32 %v4522, %v4554
        %v4556 = vpop.f32.mrf.mxu0
        %v4557 = vadd.f32 %v4522, %v4556
        %4558 = vmatmul.bf16.gmra.mxu0 %v4534
        %v4559 = vpop.f32.mrf.mxu0
        %v4560 = vadd.f32 %v4522, %v4559
        %v4561 = vpop.f32.mrf.mxu0
        %v4562 = vadd.f32 %v4522, %v4561
        %4563 = vmatmul.bf16.gmra.mxu0 %v4537
        %v4564 = vpop.f32.mrf.mxu0
        %v4565 = vadd.f32 %v4522, %v4564
        %v4566 = vpop.f32.mrf.mxu0
        %v4567 = vadd.f32 %v4522, %v4566
        %4568 = vmatmul.bf16.gmra.mxu0 %v4540
        %v4569 = vpop.f32.mrf.mxu0
        %v4570 = vadd.f32 %v4522, %v4569
        %v4571 = vpop.f32.mrf.mxu0
        %v4572 = vadd.f32 %v4522, %v4571
        %4573 = vmatmul.bf16.gmra.mxu0 %v4543
        %v4574 = vpop.f32.mrf.mxu0
        %v4575 = vadd.f32 %v4522, %v4574
        %v4576 = vpop.f32.mrf.mxu0
        %4577 = vdwg.mxu0
        %v4578 = vmax.f32 %v4555, 0.0
        %v4579 = vmax.f32 %v4557, 0.0
        %v4580 = vmax.f32 %v4560, 0.0
        %v4581 = vmax.f32 %v4562, 0.0
        %v4582 = vmax.f32 %v4565, 0.0
        %v4583 = vmax.f32 %v4567, 0.0
        %v4584 = vmax.f32 %v4570, 0.0
        %v4585 = vmax.f32 %v4572, 0.0
        %v4586 = vmax.f32 %v4575, 0.0
        %v4587 = vpack.c.bf16 %v4579, %v4578
        %v4588 = vpack.c.bf16 %v4581, %v4580
        %v4589 = vpack.c.bf16 %v4583, %v4582
        %v4590 = vpack.c.bf16 %v4585, %v4584
        %v4591 = vpack.c.bf16 %v4586, %v4586
        %v4592 = vld [vmem:[%s877] sm:$0xf]
        %v4593 = vld [vmem:[%s877 + $0x4] sm:$0xf]
        %v4594 = vld [vmem:[%s877 + $0x8] sm:$0xf]
        %v4595 = vld [vmem:[%s877 + $0xc] sm:$0xf]
        %v4596 = vld [vmem:[%s877 + $0x10] sm:$0xf]
        %v4597 = vld [vmem:[%s877 + $0x14] sm:$0xf]
        %v4598 = vld [vmem:[%s877 + $0x18] sm:$0xf]
        %v4599 = vld [vmem:[%s877 + $0x1c] sm:$0xf]
        %v4600 = vld [vmem:[%s880] sm:$0x1]
        %v4602 = vperm.slane %v4600, 0
        %v4612 = vunpack.c.l.b16 %v4592
        %v4613 = vunpack.c.l.b16 %v4593
        %v4614 = vunpack.c.l.b16 %v4594
        %v4615 = vunpack.c.l.b16 %v4595
        %v4616 = vunpack.c.l.b16 %v4596
        %v4617 = vunpack.c.l.b16 %v4597
        %v4618 = vunpack.c.l.b16 %v4598
        %v4619 = vunpack.c.l.b16 %v4599
        %v4620 = vpack.c.b16 %v4613, %v4612
        %v4621 = vpack.c.b16 %v4615, %v4614
        %v4622 = vpack.c.b16 %v4617, %v4616
        %v4623 = vpack.c.b16 %v4619, %v4618
        %vm4628 = vcmask 523264
        %v4630 = vsel %vm4628, %v4587, 0
        %v4633 = vsel %vm4628, %v4588, 0
        %v4636 = vsel %vm4628, %v4589, 0
        %v4639 = vsel %vm4628, %v4590, 0
        %v4642 = vsel %vm4628, %v4591, 0
        %4644 = vmatpush.bf16.msra.mxu0 0
        %4645 = vmatpush.bf16.msra.mxu0 0
        %4646 = vmatpush.bf16.msra.mxu0 0
        %4647 = vmatpush.bf16.msra.mxu0 0
        %4648 = vmatpush.bf16.msra.mxu0 %v4623
        %4649 = vmatpush.bf16.msra.mxu0 %v4622
        %4650 = vmatpush.bf16.msra.mxu0 %v4621
        %4651 = vmatpush.bf16.msra.mxu0 %v4620
        %4652 = vmatmul.bf16.gmra.mxu0 %v4630
        %v4653 = vpop.f32.mrf.mxu0
        %v4654 = vadd.f32 %v4602, %v4653
        %v4655 = vpop.f32.mrf.mxu0
        %v4656 = vadd.f32 %v4602, %v4655
        %4657 = vmatmul.bf16.gmra.mxu0 %v4633
        %v4658 = vpop.f32.mrf.mxu0
        %v4659 = vadd.f32 %v4602, %v4658
        %v4660 = vpop.f32.mrf.mxu0
        %v4661 = vadd.f32 %v4602, %v4660
        %4662 = vmatmul.bf16.gmra.mxu0 %v4636
        %v4663 = vpop.f32.mrf.mxu0
        %v4664 = vadd.f32 %v4602, %v4663
        %v4665 = vpop.f32.mrf.mxu0
        %v4666 = vadd.f32 %v4602, %v4665
        %4667 = vmatmul.bf16.gmra.mxu0 %v4639
        %v4668 = vpop.f32.mrf.mxu0
        %v4669 = vadd.f32 %v4602, %v4668
        %v4670 = vpop.f32.mrf.mxu0
        %v4671 = vadd.f32 %v4602, %v4670
        %4672 = vmatmul.bf16.gmra.mxu0 %v4642
        %v4673 = vpop.f32.mrf.mxu0
        %v4674 = vadd.f32 %v4602, %v4673
        %v4675 = vpop.f32.mrf.mxu0
        %4676 = vdwg.mxu0
        %v4686 = vrot.slane %v4654, 1
        %v4687 = vrot.slane %v4654, 2
        %v4688 = vrot.slane %v4654, 3
        %v4689 = vrot.slane %v4654, 4
        %v4690 = vrot.slane %v4654, 5
        %v4691 = vrot.slane %v4654, 6
        %v4692 = vrot.slane %v4654, 7
        %v4693 = vrot.slane %v4656, 1
        %v4694 = vrot.slane %v4656, 2
        %v4695 = vrot.slane %v4656, 3
        %v4696 = vrot.slane %v4656, 4
        %v4697 = vrot.slane %v4656, 5
        %v4698 = vrot.slane %v4656, 6
        %v4699 = vrot.slane %v4656, 7
        %v4700 = vrot.slane %v4659, 1
        %v4701 = vrot.slane %v4659, 2
        %v4702 = vrot.slane %v4659, 3
        %v4703 = vrot.slane %v4659, 4
        %v4704 = vrot.slane %v4659, 5
        %v4705 = vrot.slane %v4659, 6
        %v4706 = vrot.slane %v4659, 7
        %v4707 = vrot.slane %v4661, 1
        %v4708 = vrot.slane %v4661, 2
        %v4709 = vrot.slane %v4661, 3
        %v4710 = vrot.slane %v4661, 4
        %v4711 = vrot.slane %v4661, 5
        %v4712 = vrot.slane %v4661, 6
        %v4713 = vrot.slane %v4661, 7
        %v4714 = vrot.slane %v4664, 1
        %v4715 = vrot.slane %v4664, 2
        %v4716 = vrot.slane %v4664, 3
        %v4717 = vrot.slane %v4664, 4
        %v4718 = vrot.slane %v4664, 5
        %v4719 = vrot.slane %v4664, 6
        %v4720 = vrot.slane %v4664, 7
        %v4721 = vrot.slane %v4666, 1
        %v4722 = vrot.slane %v4666, 2
        %v4723 = vrot.slane %v4666, 3
        %v4724 = vrot.slane %v4666, 4
        %v4725 = vrot.slane %v4666, 5
        %v4726 = vrot.slane %v4666, 6
        %v4727 = vrot.slane %v4666, 7
        %v4728 = vrot.slane %v4669, 1
        %v4729 = vrot.slane %v4669, 2
        %v4730 = vrot.slane %v4669, 3
        %v4731 = vrot.slane %v4669, 4
        %v4732 = vrot.slane %v4669, 5
        %v4733 = vrot.slane %v4669, 6
        %v4734 = vrot.slane %v4669, 7
        %v4735 = vrot.slane %v4671, 1
        %v4736 = vrot.slane %v4671, 2
        %v4737 = vrot.slane %v4671, 3
        %v4738 = vrot.slane %v4671, 4
        %v4739 = vrot.slane %v4671, 5
        %v4740 = vrot.slane %v4671, 6
        %v4741 = vrot.slane %v4671, 7
        %v4742 = vrot.slane %v4674, 1
        %v4743 = vrot.slane %v4674, 2
        %v4744 = vrot.slane %v4674, 3
        %v4745 = vrot.slane %v4674, 4
        %v4746 = vrot.slane %v4674, 5
        %v4747 = vrot.slane %v4674, 6
        %v4748 = vrot.slane %v4674, 7
        %v4812 = vadd.f32 %v4272, %v4654
        %v4813 = vadd.f32 %v4273, %v4686
        %v4814 = vadd.f32 %v4274, %v4687
        %v4815 = vadd.f32 %v4275, %v4688
        %v4816 = vadd.f32 %v4276, %v4689
        %v4817 = vadd.f32 %v4277, %v4690
        %v4818 = vadd.f32 %v4278, %v4691
        %v4819 = vadd.f32 %v4279, %v4692
        %v4820 = vadd.f32 %v4280, %v4656
        %v4821 = vadd.f32 %v4281, %v4693
        %v4822 = vadd.f32 %v4282, %v4694
        %v4823 = vadd.f32 %v4283, %v4695
        %v4824 = vadd.f32 %v4284, %v4696
        %v4825 = vadd.f32 %v4285, %v4697
        %v4826 = vadd.f32 %v4286, %v4698
        %v4827 = vadd.f32 %v4287, %v4699
        %v4828 = vadd.f32 %v4288, %v4659
        %v4829 = vadd.f32 %v4289, %v4700
        %v4830 = vadd.f32 %v4290, %v4701
        %v4831 = vadd.f32 %v4291, %v4702
        %v4832 = vadd.f32 %v4292, %v4703
        %v4833 = vadd.f32 %v4293, %v4704
        %v4834 = vadd.f32 %v4294, %v4705
        %v4835 = vadd.f32 %v4295, %v4706
        %v4836 = vadd.f32 %v4296, %v4661
        %v4837 = vadd.f32 %v4297, %v4707
        %v4838 = vadd.f32 %v4298, %v4708
        %v4839 = vadd.f32 %v4299, %v4709
        %v4840 = vadd.f32 %v4300, %v4710
        %v4841 = vadd.f32 %v4301, %v4711
        %v4842 = vadd.f32 %v4302, %v4712
        %v4843 = vadd.f32 %v4303, %v4713
        %v4844 = vadd.f32 %v4304, %v4664
        %v4845 = vadd.f32 %v4305, %v4714
        %v4846 = vadd.f32 %v4306, %v4715
        %v4847 = vadd.f32 %v4307, %v4716
        %v4848 = vadd.f32 %v4308, %v4717
        %v4849 = vadd.f32 %v4309, %v4718
        %v4850 = vadd.f32 %v4310, %v4719
        %v4851 = vadd.f32 %v4311, %v4720
        %v4852 = vadd.f32 %v4312, %v4666
        %v4853 = vadd.f32 %v4313, %v4721
        %v4854 = vadd.f32 %v4314, %v4722
        %v4855 = vadd.f32 %v4315, %v4723
        %v4856 = vadd.f32 %v4316, %v4724
        %v4857 = vadd.f32 %v4317, %v4725
        %v4858 = vadd.f32 %v4318, %v4726
        %v4859 = vadd.f32 %v4319, %v4727
        %v4860 = vadd.f32 %v4320, %v4669
        %v4861 = vadd.f32 %v4321, %v4728
        %v4862 = vadd.f32 %v4322, %v4729
        %v4863 = vadd.f32 %v4323, %v4730
        %v4864 = vadd.f32 %v4324, %v4731
        %v4865 = vadd.f32 %v4325, %v4732
        %v4866 = vadd.f32 %v4326, %v4733
        %v4867 = vadd.f32 %v4327, %v4734
        %v4868 = vadd.f32 %v4328, %v4671
        %v4869 = vadd.f32 %v4329, %v4735
        %v4870 = vadd.f32 %v4330, %v4736
        %v4871 = vadd.f32 %v4331, %v4737
        %v4872 = vadd.f32 %v4332, %v4738
        %v4873 = vadd.f32 %v4333, %v4739
        %v4874 = vadd.f32 %v4334, %v4740
        %v4875 = vadd.f32 %v4335, %v4741
        %v4876 = vadd.f32 %v4336, %v4674
        %v4877 = vadd.f32 %v4337, %v4742
        %v4878 = vadd.f32 %v4338, %v4743
        %v4879 = vadd.f32 %v4339, %v4744
        %v4880 = vadd.f32 %v4340, %v4745
        %v4881 = vadd.f32 %v4341, %v4746
        %v4882 = vadd.f32 %v4342, %v4747
        %v4883 = vadd.f32 %v4343, %v4748
        %v4884 = vld [vmem:[%s883] sm:$0x1]
        %v4885 = vld [vmem:[%s886] sm:$0x1]
        %4958 = vst [vmem:[#allocation1] ss:$9 sm:$0xff] %v4812
        %s4959 = scalar_lea.vmem [#allocation1], 1
        %4960 = vst [vmem:[%s4959] ss:$9 sm:$0xff] %v4813
        %s4961 = scalar_lea.vmem [#allocation1], 2
        %4962 = vst [vmem:[%s4961] ss:$9 sm:$0xff] %v4814
        %s4963 = scalar_lea.vmem [#allocation1], 3
        %4964 = vst [vmem:[%s4963] ss:$9 sm:$0xff] %v4815
        %s4965 = scalar_lea.vmem [#allocation1], 4
        %4966 = vst [vmem:[%s4965] ss:$9 sm:$0xff] %v4816
        %s4967 = scalar_lea.vmem [#allocation1], 5
        %4968 = vst [vmem:[%s4967] ss:$9 sm:$0xff] %v4817
        %s4969 = scalar_lea.vmem [#allocation1], 6
        %4970 = vst [vmem:[%s4969] ss:$9 sm:$0xff] %v4818
        %s4971 = scalar_lea.vmem [#allocation1], 7
        %4972 = vst [vmem:[%s4971] ss:$9 sm:$0xff] %v4819
        %v4973 = vld [vmem:[#allocation1] sm:$0xff]
        %4974 = vst [vmem:[#allocation1] ss:$9 sm:$0xff] %v4820
        %4975 = vst [vmem:[%s4959] ss:$9 sm:$0xff] %v4821
        %4976 = vst [vmem:[%s4961] ss:$9 sm:$0xff] %v4822
        %4977 = vst [vmem:[%s4963] ss:$9 sm:$0xff] %v4823
        %4978 = vst [vmem:[%s4965] ss:$9 sm:$0xff] %v4824
        %4979 = vst [vmem:[%s4967] ss:$9 sm:$0xff] %v4825
        %4980 = vst [vmem:[%s4969] ss:$9 sm:$0xff] %v4826
        %4981 = vst [vmem:[%s4971] ss:$9 sm:$0xff] %v4827
        %v4982 = vld [vmem:[#allocation1] sm:$0xff]
        %4983 = vst [vmem:[#allocation1] ss:$9 sm:$0xff] %v4828
        %4984 = vst [vmem:[%s4959] ss:$9 sm:$0xff] %v4829
        %4985 = vst [vmem:[%s4961] ss:$9 sm:$0xff] %v4830
        %4986 = vst [vmem:[%s4963] ss:$9 sm:$0xff] %v4831
        %4987 = vst [vmem:[%s4965] ss:$9 sm:$0xff] %v4832
        %4988 = vst [vmem:[%s4967] ss:$9 sm:$0xff] %v4833
        %4989 = vst [vmem:[%s4969] ss:$9 sm:$0xff] %v4834
        %4990 = vst [vmem:[%s4971] ss:$9 sm:$0xff] %v4835
        %v4991 = vld [vmem:[#allocation1] sm:$0xff]
        %4992 = vst [vmem:[#allocation1] ss:$9 sm:$0xff] %v4836
        %4993 = vst [vmem:[%s4959] ss:$9 sm:$0xff] %v4837
        %4994 = vst [vmem:[%s4961] ss:$9 sm:$0xff] %v4838
        %4995 = vst [vmem:[%s4963] ss:$9 sm:$0xff] %v4839
        %4996 = vst [vmem:[%s4965] ss:$9 sm:$0xff] %v4840
        %4997 = vst [vmem:[%s4967] ss:$9 sm:$0xff] %v4841
        %4998 = vst [vmem:[%s4969] ss:$9 sm:$0xff] %v4842
        %4999 = vst [vmem:[%s4971] ss:$9 sm:$0xff] %v4843
        %v5000 = vld [vmem:[#allocation1] sm:$0xff]
        %5001 = vst [vmem:[#allocation1] ss:$9 sm:$0xff] %v4844
        %5002 = vst [vmem:[%s4959] ss:$9 sm:$0xff] %v4845
        %5003 = vst [vmem:[%s4961] ss:$9 sm:$0xff] %v4846
        %5004 = vst [vmem:[%s4963] ss:$9 sm:$0xff] %v4847
        %5005 = vst [vmem:[%s4965] ss:$9 sm:$0xff] %v4848
        %5006 = vst [vmem:[%s4967] ss:$9 sm:$0xff] %v4849
        %5007 = vst [vmem:[%s4969] ss:$9 sm:$0xff] %v4850
        %5008 = vst [vmem:[%s4971] ss:$9 sm:$0xff] %v4851
        %v5009 = vld [vmem:[#allocation1] sm:$0xff]
        %5010 = vst [vmem:[#allocation1] ss:$9 sm:$0xff] %v4852
        %5011 = vst [vmem:[%s4959] ss:$9 sm:$0xff] %v4853
        %5012 = vst [vmem:[%s4961] ss:$9 sm:$0xff] %v4854
        %5013 = vst [vmem:[%s4963] ss:$9 sm:$0xff] %v4855
        %5014 = vst [vmem:[%s4965] ss:$9 sm:$0xff] %v4856
        %5015 = vst [vmem:[%s4967] ss:$9 sm:$0xff] %v4857
        %5016 = vst [vmem:[%s4969] ss:$9 sm:$0xff] %v4858
        %5017 = vst [vmem:[%s4971] ss:$9 sm:$0xff] %v4859
        %v5018 = vld [vmem:[#allocation1] sm:$0xff]
        %5019 = vst [vmem:[#allocation1] ss:$9 sm:$0xff] %v4860
        %5020 = vst [vmem:[%s4959] ss:$9 sm:$0xff] %v4861
        %5021 = vst [vmem:[%s4961] ss:$9 sm:$0xff] %v4862
        %5022 = vst [vmem:[%s4963] ss:$9 sm:$0xff] %v4863
        %5023 = vst [vmem:[%s4965] ss:$9 sm:$0xff] %v4864
        %5024 = vst [vmem:[%s4967] ss:$9 sm:$0xff] %v4865
        %5025 = vst [vmem:[%s4969] ss:$9 sm:$0xff] %v4866
        %5026 = vst [vmem:[%s4971] ss:$9 sm:$0xff] %v4867
        %v5027 = vld [vmem:[#allocation1] sm:$0xff]
        %5028 = vst [vmem:[#allocation1] ss:$9 sm:$0xff] %v4868
        %5029 = vst [vmem:[%s4959] ss:$9 sm:$0xff] %v4869
        %5030 = vst [vmem:[%s4961] ss:$9 sm:$0xff] %v4870
        %5031 = vst [vmem:[%s4963] ss:$9 sm:$0xff] %v4871
        %5032 = vst [vmem:[%s4965] ss:$9 sm:$0xff] %v4872
        %5033 = vst [vmem:[%s4967] ss:$9 sm:$0xff] %v4873
        %5034 = vst [vmem:[%s4969] ss:$9 sm:$0xff] %v4874
        %5035 = vst [vmem:[%s4971] ss:$9 sm:$0xff] %v4875
        %v5036 = vld [vmem:[#allocation1] sm:$0xff]
        %5037 = vst [vmem:[#allocation1] ss:$9 sm:$0xff] %v4876
        %5038 = vst [vmem:[%s4959] ss:$9 sm:$0xff] %v4877
        %5039 = vst [vmem:[%s4961] ss:$9 sm:$0xff] %v4878
        %5040 = vst [vmem:[%s4963] ss:$9 sm:$0xff] %v4879
        %5041 = vst [vmem:[%s4965] ss:$9 sm:$0xff] %v4880
        %5042 = vst [vmem:[%s4967] ss:$9 sm:$0xff] %v4881
        %5043 = vst [vmem:[%s4969] ss:$9 sm:$0xff] %v4882
        %5044 = vst [vmem:[%s4971] ss:$9 sm:$0xff] %v4883
        %v5045 = vld [vmem:[#allocation1] sm:$0xff]
        %v5055 = vsel %vm1267, %v4973, 0.0
        %5056 = vadd.xlane.f32.xlu0 %v5055
        %v5057 = vpop.xlane.xlu0 %5056
        %v5058 = vsel %vm1267, %v4982, 0.0
        %5059 = vadd.xlane.f32.xlu0 %v5058
        %v5060 = vpop.xlane.xlu0 %5059
        %v5061 = vsel %vm1267, %v4991, 0.0
        %5062 = vadd.xlane.f32.xlu0 %v5061
        %v5063 = vpop.xlane.xlu0 %5062
        %v5064 = vsel %vm1267, %v5000, 0.0
        %5065 = vadd.xlane.f32.xlu0 %v5064
        %v5066 = vpop.xlane.xlu0 %5065
        %v5067 = vsel %vm1267, %v5009, 0.0
        %5068 = vadd.xlane.f32.xlu0 %v5067
        %v5069 = vpop.xlane.xlu0 %5068
        %v5070 = vsel %vm1267, %v5018, 0.0
        %5071 = vadd.xlane.f32.xlu0 %v5070
        %v5072 = vpop.xlane.xlu0 %5071
        %v5073 = vsel %vm1267, %v5027, 0.0
        %5074 = vadd.xlane.f32.xlu0 %v5073
        %v5075 = vpop.xlane.xlu0 %5074
        %v5076 = vsel %vm1267, %v5036, 0.0
        %5077 = vadd.xlane.f32.xlu0 %v5076
        %v5078 = vpop.xlane.xlu0 %5077
        %v5079 = vsel %vm1267, %v5045, 0.0
        %5080 = vadd.xlane.f32.xlu0 %v5079
        %v5081 = vpop.xlane.xlu0 %5080
        %v5082 = vmul.f32 %v5057, %v3330
        %v5083 = vmul.f32 %v5060, %v3330
        %v5084 = vmul.f32 %v5063, %v3330
        %v5085 = vmul.f32 %v5066, %v3330
        %v5086 = vmul.f32 %v5069, %v3330
        %v5087 = vmul.f32 %v5072, %v3330
        %v5088 = vmul.f32 %v5075, %v3330
        %v5089 = vmul.f32 %v5078, %v3330
        %v5090 = vmul.f32 %v5081, %v3330
        %v5100 = vperm.slane %v5082, 0
        %v5101 = vperm.slane %v5082, 1
        %v5102 = vperm.slane %v5082, 2
        %v5103 = vperm.slane %v5082, 3
        %v5104 = vperm.slane %v5082, 4
        %v5105 = vperm.slane %v5082, 5
        %v5106 = vperm.slane %v5082, 6
        %v5107 = vperm.slane %v5082, 7
        %v5108 = vperm.slane %v5083, 0
        %v5109 = vperm.slane %v5083, 1
        %v5110 = vperm.slane %v5083, 2
        %v5111 = vperm.slane %v5083, 3
        %v5112 = vperm.slane %v5083, 4
        %v5113 = vperm.slane %v5083, 5
        %v5114 = vperm.slane %v5083, 6
        %v5115 = vperm.slane %v5083, 7
        %v5116 = vperm.slane %v5084, 0
        %v5117 = vperm.slane %v5084, 1
        %v5118 = vperm.slane %v5084, 2
        %v5119 = vperm.slane %v5084, 3
        %v5120 = vperm.slane %v5084, 4
        %v5121 = vperm.slane %v5084, 5
        %v5122 = vperm.slane %v5084, 6
        %v5123 = vperm.slane %v5084, 7
        %v5124 = vperm.slane %v5085, 0
        %v5125 = vperm.slane %v5085, 1
        %v5126 = vperm.slane %v5085, 2
        %v5127 = vperm.slane %v5085, 3
        %v5128 = vperm.slane %v5085, 4
        %v5129 = vperm.slane %v5085, 5
        %v5130 = vperm.slane %v5085, 6
        %v5131 = vperm.slane %v5085, 7
        %v5132 = vperm.slane %v5086, 0
        %v5133 = vperm.slane %v5086, 1
        %v5134 = vperm.slane %v5086, 2
        %v5135 = vperm.slane %v5086, 3
        %v5136 = vperm.slane %v5086, 4
        %v5137 = vperm.slane %v5086, 5
        %v5138 = vperm.slane %v5086, 6
        %v5139 = vperm.slane %v5086, 7
        %v5140 = vperm.slane %v5087, 0
        %v5141 = vperm.slane %v5087, 1
        %v5142 = vperm.slane %v5087, 2
        %v5143 = vperm.slane %v5087, 3
        %v5144 = vperm.slane %v5087, 4
        %v5145 = vperm.slane %v5087, 5
        %v5146 = vperm.slane %v5087, 6
        %v5147 = vperm.slane %v5087, 7
        %v5148 = vperm.slane %v5088, 0
        %v5149 = vperm.slane %v5088, 1
        %v5150 = vperm.slane %v5088, 2
        %v5151 = vperm.slane %v5088, 3
        %v5152 = vperm.slane %v5088, 4
        %v5153 = vperm.slane %v5088, 5
        %v5154 = vperm.slane %v5088, 6
        %v5155 = vperm.slane %v5088, 7
        %v5156 = vperm.slane %v5089, 0
        %v5157 = vperm.slane %v5089, 1
        %v5158 = vperm.slane %v5089, 2
        %v5159 = vperm.slane %v5089, 3
        %v5160 = vperm.slane %v5089, 4
        %v5161 = vperm.slane %v5089, 5
        %v5162 = vperm.slane %v5089, 6
        %v5163 = vperm.slane %v5089, 7
        %v5164 = vperm.slane %v5090, 0
        %v5165 = vperm.slane %v5090, 1
        %v5166 = vperm.slane %v5090, 2
        %v5167 = vperm.slane %v5090, 3
        %v5168 = vperm.slane %v5090, 4
        %v5169 = vperm.slane %v5090, 5
        %v5170 = vperm.slane %v5090, 6
        %v5171 = vperm.slane %v5090, 7
        %v5244 = vsub.f32 %v4812, %v5100
        %v5245 = vsub.f32 %v4813, %v5101
        %v5246 = vsub.f32 %v4814, %v5102
        %v5247 = vsub.f32 %v4815, %v5103
        %v5248 = vsub.f32 %v4816, %v5104
        %v5249 = vsub.f32 %v4817, %v5105
        %v5250 = vsub.f32 %v4818, %v5106
        %v5251 = vsub.f32 %v4819, %v5107
        %v5252 = vsub.f32 %v4820, %v5108
        %v5253 = vsub.f32 %v4821, %v5109
        %v5254 = vsub.f32 %v4822, %v5110
        %v5255 = vsub.f32 %v4823, %v5111
        %v5256 = vsub.f32 %v4824, %v5112
        %v5257 = vsub.f32 %v4825, %v5113
        %v5258 = vsub.f32 %v4826, %v5114
        %v5259 = vsub.f32 %v4827, %v5115
        %v5260 = vsub.f32 %v4828, %v5116
        %v5261 = vsub.f32 %v4829, %v5117
        %v5262 = vsub.f32 %v4830, %v5118
        %v5263 = vsub.f32 %v4831, %v5119
        %v5264 = vsub.f32 %v4832, %v5120
        %v5265 = vsub.f32 %v4833, %v5121
        %v5266 = vsub.f32 %v4834, %v5122
        %v5267 = vsub.f32 %v4835, %v5123
        %v5268 = vsub.f32 %v4836, %v5124
        %v5269 = vsub.f32 %v4837, %v5125
        %v5270 = vsub.f32 %v4838, %v5126
        %v5271 = vsub.f32 %v4839, %v5127
        %v5272 = vsub.f32 %v4840, %v5128
        %v5273 = vsub.f32 %v4841, %v5129
        %v5274 = vsub.f32 %v4842, %v5130
        %v5275 = vsub.f32 %v4843, %v5131
        %v5276 = vsub.f32 %v4844, %v5132
        %v5277 = vsub.f32 %v4845, %v5133
        %v5278 = vsub.f32 %v4846, %v5134
        %v5279 = vsub.f32 %v4847, %v5135
        %v5280 = vsub.f32 %v4848, %v5136
        %v5281 = vsub.f32 %v4849, %v5137
        %v5282 = vsub.f32 %v4850, %v5138
        %v5283 = vsub.f32 %v4851, %v5139
        %v5284 = vsub.f32 %v4852, %v5140
        %v5285 = vsub.f32 %v4853, %v5141
        %v5286 = vsub.f32 %v4854, %v5142
        %v5287 = vsub.f32 %v4855, %v5143
        %v5288 = vsub.f32 %v4856, %v5144
        %v5289 = vsub.f32 %v4857, %v5145
        %v5290 = vsub.f32 %v4858, %v5146
        %v5291 = vsub.f32 %v4859, %v5147
        %v5292 = vsub.f32 %v4860, %v5148
        %v5293 = vsub.f32 %v4861, %v5149
        %v5294 = vsub.f32 %v4862, %v5150
        %v5295 = vsub.f32 %v4863, %v5151
        %v5296 = vsub.f32 %v4864, %v5152
        %v5297 = vsub.f32 %v4865, %v5153
        %v5298 = vsub.f32 %v4866, %v5154
        %v5299 = vsub.f32 %v4867, %v5155
        %v5300 = vsub.f32 %v4868, %v5156
        %v5301 = vsub.f32 %v4869, %v5157
        %v5302 = vsub.f32 %v4870, %v5158
        %v5303 = vsub.f32 %v4871, %v5159
        %v5304 = vsub.f32 %v4872, %v5160
        %v5305 = vsub.f32 %v4873, %v5161
        %v5306 = vsub.f32 %v4874, %v5162
        %v5307 = vsub.f32 %v4875, %v5163
        %v5308 = vsub.f32 %v4876, %v5164
        %v5309 = vsub.f32 %v4877, %v5165
        %v5310 = vsub.f32 %v4878, %v5166
        %v5311 = vsub.f32 %v4879, %v5167
        %v5312 = vsub.f32 %v4880, %v5168
        %v5313 = vsub.f32 %v4881, %v5169
        %v5314 = vsub.f32 %v4882, %v5170
        %v5315 = vsub.f32 %v4883, %v5171
        %v5316 = vmul.f32 %v5244, %v5244
        %v5317 = vmul.f32 %v5245, %v5245
        %v5318 = vmul.f32 %v5246, %v5246
        %v5319 = vmul.f32 %v5247, %v5247
        %v5320 = vmul.f32 %v5248, %v5248
        %v5321 = vmul.f32 %v5249, %v5249
        %v5322 = vmul.f32 %v5250, %v5250
        %v5323 = vmul.f32 %v5251, %v5251
        %v5324 = vmul.f32 %v5252, %v5252
        %v5325 = vmul.f32 %v5253, %v5253
        %v5326 = vmul.f32 %v5254, %v5254
        %v5327 = vmul.f32 %v5255, %v5255
        %v5328 = vmul.f32 %v5256, %v5256
        %v5329 = vmul.f32 %v5257, %v5257
        %v5330 = vmul.f32 %v5258, %v5258
        %v5331 = vmul.f32 %v5259, %v5259
        %v5332 = vmul.f32 %v5260, %v5260
        %v5333 = vmul.f32 %v5261, %v5261
        %v5334 = vmul.f32 %v5262, %v5262
        %v5335 = vmul.f32 %v5263, %v5263
        %v5336 = vmul.f32 %v5264, %v5264
        %v5337 = vmul.f32 %v5265, %v5265
        %v5338 = vmul.f32 %v5266, %v5266
        %v5339 = vmul.f32 %v5267, %v5267
        %v5340 = vmul.f32 %v5268, %v5268
        %v5341 = vmul.f32 %v5269, %v5269
        %v5342 = vmul.f32 %v5270, %v5270
        %v5343 = vmul.f32 %v5271, %v5271
        %v5344 = vmul.f32 %v5272, %v5272
        %v5345 = vmul.f32 %v5273, %v5273
        %v5346 = vmul.f32 %v5274, %v5274
        %v5347 = vmul.f32 %v5275, %v5275
        %v5348 = vmul.f32 %v5276, %v5276
        %v5349 = vmul.f32 %v5277, %v5277
        %v5350 = vmul.f32 %v5278, %v5278
        %v5351 = vmul.f32 %v5279, %v5279
        %v5352 = vmul.f32 %v5280, %v5280
        %v5353 = vmul.f32 %v5281, %v5281
        %v5354 = vmul.f32 %v5282, %v5282
        %v5355 = vmul.f32 %v5283, %v5283
        %v5356 = vmul.f32 %v5284, %v5284
        %v5357 = vmul.f32 %v5285, %v5285
        %v5358 = vmul.f32 %v5286, %v5286
        %v5359 = vmul.f32 %v5287, %v5287
        %v5360 = vmul.f32 %v5288, %v5288
        %v5361 = vmul.f32 %v5289, %v5289
        %v5362 = vmul.f32 %v5290, %v5290
        %v5363 = vmul.f32 %v5291, %v5291
        %v5364 = vmul.f32 %v5292, %v5292
        %v5365 = vmul.f32 %v5293, %v5293
        %v5366 = vmul.f32 %v5294, %v5294
        %v5367 = vmul.f32 %v5295, %v5295
        %v5368 = vmul.f32 %v5296, %v5296
        %v5369 = vmul.f32 %v5297, %v5297
        %v5370 = vmul.f32 %v5298, %v5298
        %v5371 = vmul.f32 %v5299, %v5299
        %v5372 = vmul.f32 %v5300, %v5300
        %v5373 = vmul.f32 %v5301, %v5301
        %v5374 = vmul.f32 %v5302, %v5302
        %v5375 = vmul.f32 %v5303, %v5303
        %v5376 = vmul.f32 %v5304, %v5304
        %v5377 = vmul.f32 %v5305, %v5305
        %v5378 = vmul.f32 %v5306, %v5306
        %v5379 = vmul.f32 %v5307, %v5307
        %v5380 = vmul.f32 %v5308, %v5308
        %v5381 = vmul.f32 %v5309, %v5309
        %v5382 = vmul.f32 %v5310, %v5310
        %v5383 = vmul.f32 %v5311, %v5311
        %v5384 = vmul.f32 %v5312, %v5312
        %v5385 = vmul.f32 %v5313, %v5313
        %v5386 = vmul.f32 %v5314, %v5314
        %v5387 = vmul.f32 %v5315, %v5315
        %5460 = vst [vmem:[#allocation1] ss:$9 sm:$0xff] %v5316
        %s5461 = scalar_lea.vmem [#allocation1], 1
        %5462 = vst [vmem:[%s5461] ss:$9 sm:$0xff] %v5317
        %s5463 = scalar_lea.vmem [#allocation1], 2
        %5464 = vst [vmem:[%s5463] ss:$9 sm:$0xff] %v5318
        %s5465 = scalar_lea.vmem [#allocation1], 3
        %5466 = vst [vmem:[%s5465] ss:$9 sm:$0xff] %v5319
        %s5467 = scalar_lea.vmem [#allocation1], 4
        %5468 = vst [vmem:[%s5467] ss:$9 sm:$0xff] %v5320
        %s5469 = scalar_lea.vmem [#allocation1], 5
        %5470 = vst [vmem:[%s5469] ss:$9 sm:$0xff] %v5321
        %s5471 = scalar_lea.vmem [#allocation1], 6
        %5472 = vst [vmem:[%s5471] ss:$9 sm:$0xff] %v5322
        %s5473 = scalar_lea.vmem [#allocation1], 7
        %5474 = vst [vmem:[%s5473] ss:$9 sm:$0xff] %v5323
        %v5475 = vld [vmem:[#allocation1] sm:$0xff]
        %5476 = vst [vmem:[#allocation1] ss:$9 sm:$0xff] %v5324
        %5477 = vst [vmem:[%s5461] ss:$9 sm:$0xff] %v5325
        %5478 = vst [vmem:[%s5463] ss:$9 sm:$0xff] %v5326
        %5479 = vst [vmem:[%s5465] ss:$9 sm:$0xff] %v5327
        %5480 = vst [vmem:[%s5467] ss:$9 sm:$0xff] %v5328
        %5481 = vst [vmem:[%s5469] ss:$9 sm:$0xff] %v5329
        %5482 = vst [vmem:[%s5471] ss:$9 sm:$0xff] %v5330
        %5483 = vst [vmem:[%s5473] ss:$9 sm:$0xff] %v5331
        %v5484 = vld [vmem:[#allocation1] sm:$0xff]
        %5485 = vst [vmem:[#allocation1] ss:$9 sm:$0xff] %v5332
        %5486 = vst [vmem:[%s5461] ss:$9 sm:$0xff] %v5333
        %5487 = vst [vmem:[%s5463] ss:$9 sm:$0xff] %v5334
        %5488 = vst [vmem:[%s5465] ss:$9 sm:$0xff] %v5335
        %5489 = vst [vmem:[%s5467] ss:$9 sm:$0xff] %v5336
        %5490 = vst [vmem:[%s5469] ss:$9 sm:$0xff] %v5337
        %5491 = vst [vmem:[%s5471] ss:$9 sm:$0xff] %v5338
        %5492 = vst [vmem:[%s5473] ss:$9 sm:$0xff] %v5339
        %v5493 = vld [vmem:[#allocation1] sm:$0xff]
        %5494 = vst [vmem:[#allocation1] ss:$9 sm:$0xff] %v5340
        %5495 = vst [vmem:[%s5461] ss:$9 sm:$0xff] %v5341
        %5496 = vst [vmem:[%s5463] ss:$9 sm:$0xff] %v5342
        %5497 = vst [vmem:[%s5465] ss:$9 sm:$0xff] %v5343
        %5498 = vst [vmem:[%s5467] ss:$9 sm:$0xff] %v5344
        %5499 = vst [vmem:[%s5469] ss:$9 sm:$0xff] %v5345
        %5500 = vst [vmem:[%s5471] ss:$9 sm:$0xff] %v5346
        %5501 = vst [vmem:[%s5473] ss:$9 sm:$0xff] %v5347
        %v5502 = vld [vmem:[#allocation1] sm:$0xff]
        %5503 = vst [vmem:[#allocation1] ss:$9 sm:$0xff] %v5348
        %5504 = vst [vmem:[%s5461] ss:$9 sm:$0xff] %v5349
        %5505 = vst [vmem:[%s5463] ss:$9 sm:$0xff] %v5350
        %5506 = vst [vmem:[%s5465] ss:$9 sm:$0xff] %v5351
        %5507 = vst [vmem:[%s5467] ss:$9 sm:$0xff] %v5352
        %5508 = vst [vmem:[%s5469] ss:$9 sm:$0xff] %v5353
        %5509 = vst [vmem:[%s5471] ss:$9 sm:$0xff] %v5354
        %5510 = vst [vmem:[%s5473] ss:$9 sm:$0xff] %v5355
        %v5511 = vld [vmem:[#allocation1] sm:$0xff]
        %5512 = vst [vmem:[#allocation1] ss:$9 sm:$0xff] %v5356
        %5513 = vst [vmem:[%s5461] ss:$9 sm:$0xff] %v5357
        %5514 = vst [vmem:[%s5463] ss:$9 sm:$0xff] %v5358
        %5515 = vst [vmem:[%s5465] ss:$9 sm:$0xff] %v5359
        %5516 = vst [vmem:[%s5467] ss:$9 sm:$0xff] %v5360
        %5517 = vst [vmem:[%s5469] ss:$9 sm:$0xff] %v5361
        %5518 = vst [vmem:[%s5471] ss:$9 sm:$0xff] %v5362
        %5519 = vst [vmem:[%s5473] ss:$9 sm:$0xff] %v5363
        %v5520 = vld [vmem:[#allocation1] sm:$0xff]
        %5521 = vst [vmem:[#allocation1] ss:$9 sm:$0xff] %v5364
        %5522 = vst [vmem:[%s5461] ss:$9 sm:$0xff] %v5365
        %5523 = vst [vmem:[%s5463] ss:$9 sm:$0xff] %v5366
        %5524 = vst [vmem:[%s5465] ss:$9 sm:$0xff] %v5367
        %5525 = vst [vmem:[%s5467] ss:$9 sm:$0xff] %v5368
        %5526 = vst [vmem:[%s5469] ss:$9 sm:$0xff] %v5369
        %5527 = vst [vmem:[%s5471] ss:$9 sm:$0xff] %v5370
        %5528 = vst [vmem:[%s5473] ss:$9 sm:$0xff] %v5371
        %v5529 = vld [vmem:[#allocation1] sm:$0xff]
        %5530 = vst [vmem:[#allocation1] ss:$9 sm:$0xff] %v5372
        %5531 = vst [vmem:[%s5461] ss:$9 sm:$0xff] %v5373
        %5532 = vst [vmem:[%s5463] ss:$9 sm:$0xff] %v5374
        %5533 = vst [vmem:[%s5465] ss:$9 sm:$0xff] %v5375
        %5534 = vst [vmem:[%s5467] ss:$9 sm:$0xff] %v5376
        %5535 = vst [vmem:[%s5469] ss:$9 sm:$0xff] %v5377
        %5536 = vst [vmem:[%s5471] ss:$9 sm:$0xff] %v5378
        %5537 = vst [vmem:[%s5473] ss:$9 sm:$0xff] %v5379
        %v5538 = vld [vmem:[#allocation1] sm:$0xff]
        %5539 = vst [vmem:[#allocation1] ss:$9 sm:$0xff] %v5380
        %5540 = vst [vmem:[%s5461] ss:$9 sm:$0xff] %v5381
        %5541 = vst [vmem:[%s5463] ss:$9 sm:$0xff] %v5382
        %5542 = vst [vmem:[%s5465] ss:$9 sm:$0xff] %v5383
        %5543 = vst [vmem:[%s5467] ss:$9 sm:$0xff] %v5384
        %5544 = vst [vmem:[%s5469] ss:$9 sm:$0xff] %v5385
        %5545 = vst [vmem:[%s5471] ss:$9 sm:$0xff] %v5386
        %5546 = vst [vmem:[%s5473] ss:$9 sm:$0xff] %v5387
        %v5547 = vld [vmem:[#allocation1] sm:$0xff]
        %v5557 = vsel %vm1267, %v5475, 0.0
        %5558 = vadd.xlane.f32.xlu0 %v5557
        %v5559 = vpop.xlane.xlu0 %5558
        %v5560 = vsel %vm1267, %v5484, 0.0
        %5561 = vadd.xlane.f32.xlu0 %v5560
        %v5562 = vpop.xlane.xlu0 %5561
        %v5563 = vsel %vm1267, %v5493, 0.0
        %5564 = vadd.xlane.f32.xlu0 %v5563
        %v5565 = vpop.xlane.xlu0 %5564
        %v5566 = vsel %vm1267, %v5502, 0.0
        %5567 = vadd.xlane.f32.xlu0 %v5566
        %v5568 = vpop.xlane.xlu0 %5567
        %v5569 = vsel %vm1267, %v5511, 0.0
        %5570 = vadd.xlane.f32.xlu0 %v5569
        %v5571 = vpop.xlane.xlu0 %5570
        %v5572 = vsel %vm1267, %v5520, 0.0
        %5573 = vadd.xlane.f32.xlu0 %v5572
        %v5574 = vpop.xlane.xlu0 %5573
        %v5575 = vsel %vm1267, %v5529, 0.0
        %5576 = vadd.xlane.f32.xlu0 %v5575
        %v5577 = vpop.xlane.xlu0 %5576
        %v5578 = vsel %vm1267, %v5538, 0.0
        %5579 = vadd.xlane.f32.xlu0 %v5578
        %v5580 = vpop.xlane.xlu0 %5579
        %v5581 = vsel %vm1267, %v5547, 0.0
        %5582 = vadd.xlane.f32.xlu0 %v5581
        %v5583 = vpop.xlane.xlu0 %5582
        %v5584 = vmul.f32 %v5559, %v3330
        %v5585 = vmul.f32 %v5562, %v3330
        %v5586 = vmul.f32 %v5565, %v3330
        %v5587 = vmul.f32 %v5568, %v3330
        %v5588 = vmul.f32 %v5571, %v3330
        %v5589 = vmul.f32 %v5574, %v3330
        %v5590 = vmul.f32 %v5577, %v3330
        %v5591 = vmul.f32 %v5580, %v3330
        %v5592 = vmul.f32 %v5583, %v3330
        %v5593 = vadd.f32 %v5584, 1e-05
        %v5594 = vadd.f32 %v5585, 1e-05
        %v5595 = vadd.f32 %v5586, 1e-05
        %v5596 = vadd.f32 %v5587, 1e-05
        %v5597 = vadd.f32 %v5588, 1e-05
        %v5598 = vadd.f32 %v5589, 1e-05
        %v5599 = vadd.f32 %v5590, 1e-05
        %v5600 = vadd.f32 %v5591, 1e-05
        %v5601 = vadd.f32 %v5592, 1e-05
        %v5602 = vrsqrt.pop %v5593
        %v5603 = vmul.f32 %v5602, %v5593
        %v5604 = vmul.f32 %v5603, %v5602
        %v5605 = vmul.f32 0.5, %v5604
        %v5606 = vsub.f32 1.5, %v5605
        %v5607 = vmul.f32 %v5602, %v5606
        %vm5608 = vweird.f32 %v5593
        %vm5609 = vweird.f32 %v5602
        %vm5610 = vmor %vm5608, %vm5609
        %v5611 = vsel %vm5610, %v5602, %v5607
        %v5612 = vrsqrt.pop %v5594
        %v5613 = vmul.f32 %v5612, %v5594
        %v5614 = vmul.f32 %v5613, %v5612
        %v5615 = vmul.f32 0.5, %v5614
        %v5616 = vsub.f32 1.5, %v5615
        %v5617 = vmul.f32 %v5612, %v5616
        %vm5618 = vweird.f32 %v5594
        %vm5619 = vweird.f32 %v5612
        %vm5620 = vmor %vm5618, %vm5619
        %v5621 = vsel %vm5620, %v5612, %v5617
        %v5622 = vrsqrt.pop %v5595
        %v5623 = vmul.f32 %v5622, %v5595
        %v5624 = vmul.f32 %v5623, %v5622
        %v5625 = vmul.f32 0.5, %v5624
        %v5626 = vsub.f32 1.5, %v5625
        %v5627 = vmul.f32 %v5622, %v5626
        %vm5628 = vweird.f32 %v5595
        %vm5629 = vweird.f32 %v5622
        %vm5630 = vmor %vm5628, %vm5629
        %v5631 = vsel %vm5630, %v5622, %v5627
        %v5632 = vrsqrt.pop %v5596
        %v5633 = vmul.f32 %v5632, %v5596
        %v5634 = vmul.f32 %v5633, %v5632
        %v5635 = vmul.f32 0.5, %v5634
        %v5636 = vsub.f32 1.5, %v5635
        %v5637 = vmul.f32 %v5632, %v5636
        %vm5638 = vweird.f32 %v5596
        %vm5639 = vweird.f32 %v5632
        %vm5640 = vmor %vm5638, %vm5639
        %v5641 = vsel %vm5640, %v5632, %v5637
        %v5642 = vrsqrt.pop %v5597
        %v5643 = vmul.f32 %v5642, %v5597
        %v5644 = vmul.f32 %v5643, %v5642
        %v5645 = vmul.f32 0.5, %v5644
        %v5646 = vsub.f32 1.5, %v5645
        %v5647 = vmul.f32 %v5642, %v5646
        %vm5648 = vweird.f32 %v5597
        %vm5649 = vweird.f32 %v5642
        %vm5650 = vmor %vm5648, %vm5649
        %v5651 = vsel %vm5650, %v5642, %v5647
        %v5652 = vrsqrt.pop %v5598
        %v5653 = vmul.f32 %v5652, %v5598
        %v5654 = vmul.f32 %v5653, %v5652
        %v5655 = vmul.f32 0.5, %v5654
        %v5656 = vsub.f32 1.5, %v5655
        %v5657 = vmul.f32 %v5652, %v5656
        %vm5658 = vweird.f32 %v5598
        %vm5659 = vweird.f32 %v5652
        %vm5660 = vmor %vm5658, %vm5659
        %v5661 = vsel %vm5660, %v5652, %v5657
        %v5662 = vrsqrt.pop %v5599
        %v5663 = vmul.f32 %v5662, %v5599
        %v5664 = vmul.f32 %v5663, %v5662
        %v5665 = vmul.f32 0.5, %v5664
        %v5666 = vsub.f32 1.5, %v5665
        %v5667 = vmul.f32 %v5662, %v5666
        %vm5668 = vweird.f32 %v5599
        %vm5669 = vweird.f32 %v5662
        %vm5670 = vmor %vm5668, %vm5669
        %v5671 = vsel %vm5670, %v5662, %v5667
        %v5672 = vrsqrt.pop %v5600
        %v5673 = vmul.f32 %v5672, %v5600
        %v5674 = vmul.f32 %v5673, %v5672
        %v5675 = vmul.f32 0.5, %v5674
        %v5676 = vsub.f32 1.5, %v5675
        %v5677 = vmul.f32 %v5672, %v5676
        %vm5678 = vweird.f32 %v5600
        %vm5679 = vweird.f32 %v5672
        %vm5680 = vmor %vm5678, %vm5679
        %v5681 = vsel %vm5680, %v5672, %v5677
        %v5682 = vrsqrt.pop %v5601
        %v5683 = vmul.f32 %v5682, %v5601
        %v5684 = vmul.f32 %v5683, %v5682
        %v5685 = vmul.f32 0.5, %v5684
        %v5686 = vsub.f32 1.5, %v5685
        %v5687 = vmul.f32 %v5682, %v5686
        %vm5688 = vweird.f32 %v5601
        %vm5689 = vweird.f32 %v5682
        %vm5690 = vmor %vm5688, %vm5689
        %v5691 = vsel %vm5690, %v5682, %v5687
        %v5701 = vperm.slane %v5611, 0
        %v5702 = vperm.slane %v5611, 1
        %v5703 = vperm.slane %v5611, 2
        %v5704 = vperm.slane %v5611, 3
        %v5705 = vperm.slane %v5611, 4
        %v5706 = vperm.slane %v5611, 5
        %v5707 = vperm.slane %v5611, 6
        %v5708 = vperm.slane %v5611, 7
        %v5709 = vperm.slane %v5621, 0
        %v5710 = vperm.slane %v5621, 1
        %v5711 = vperm.slane %v5621, 2
        %v5712 = vperm.slane %v5621, 3
        %v5713 = vperm.slane %v5621, 4
        %v5714 = vperm.slane %v5621, 5
        %v5715 = vperm.slane %v5621, 6
        %v5716 = vperm.slane %v5621, 7
        %v5717 = vperm.slane %v5631, 0
        %v5718 = vperm.slane %v5631, 1
        %v5719 = vperm.slane %v5631, 2
        %v5720 = vperm.slane %v5631, 3
        %v5721 = vperm.slane %v5631, 4
        %v5722 = vperm.slane %v5631, 5
        %v5723 = vperm.slane %v5631, 6
        %v5724 = vperm.slane %v5631, 7
        %v5725 = vperm.slane %v5641, 0
        %v5726 = vperm.slane %v5641, 1
        %v5727 = vperm.slane %v5641, 2
        %v5728 = vperm.slane %v5641, 3
        %v5729 = vperm.slane %v5641, 4
        %v5730 = vperm.slane %v5641, 5
        %v5731 = vperm.slane %v5641, 6
        %v5732 = vperm.slane %v5641, 7
        %v5733 = vperm.slane %v5651, 0
        %v5734 = vperm.slane %v5651, 1
        %v5735 = vperm.slane %v5651, 2
        %v5736 = vperm.slane %v5651, 3
        %v5737 = vperm.slane %v5651, 4
        %v5738 = vperm.slane %v5651, 5
        %v5739 = vperm.slane %v5651, 6
        %v5740 = vperm.slane %v5651, 7
        %v5741 = vperm.slane %v5661, 0
        %v5742 = vperm.slane %v5661, 1
        %v5743 = vperm.slane %v5661, 2
        %v5744 = vperm.slane %v5661, 3
        %v5745 = vperm.slane %v5661, 4
        %v5746 = vperm.slane %v5661, 5
        %v5747 = vperm.slane %v5661, 6
        %v5748 = vperm.slane %v5661, 7
        %v5749 = vperm.slane %v5671, 0
        %v5750 = vperm.slane %v5671, 1
        %v5751 = vperm.slane %v5671, 2
        %v5752 = vperm.slane %v5671, 3
        %v5753 = vperm.slane %v5671, 4
        %v5754 = vperm.slane %v5671, 5
        %v5755 = vperm.slane %v5671, 6
        %v5756 = vperm.slane %v5671, 7
        %v5757 = vperm.slane %v5681, 0
        %v5758 = vperm.slane %v5681, 1
        %v5759 = vperm.slane %v5681, 2
        %v5760 = vperm.slane %v5681, 3
        %v5761 = vperm.slane %v5681, 4
        %v5762 = vperm.slane %v5681, 5
        %v5763 = vperm.slane %v5681, 6
        %v5764 = vperm.slane %v5681, 7
        %v5765 = vperm.slane %v5691, 0
        %v5766 = vperm.slane %v5691, 1
        %v5767 = vperm.slane %v5691, 2
        %v5768 = vperm.slane %v5691, 3
        %v5769 = vperm.slane %v5691, 4
        %v5770 = vperm.slane %v5691, 5
        %v5771 = vperm.slane %v5691, 6
        %v5772 = vperm.slane %v5691, 7
        %v5845 = vmul.f32 %v5244, %v5701
        %v5846 = vmul.f32 %v5245, %v5702
        %v5847 = vmul.f32 %v5246, %v5703
        %v5848 = vmul.f32 %v5247, %v5704
        %v5849 = vmul.f32 %v5248, %v5705
        %v5850 = vmul.f32 %v5249, %v5706
        %v5851 = vmul.f32 %v5250, %v5707
        %v5852 = vmul.f32 %v5251, %v5708
        %v5853 = vmul.f32 %v5252, %v5709
        %v5854 = vmul.f32 %v5253, %v5710
        %v5855 = vmul.f32 %v5254, %v5711
        %v5856 = vmul.f32 %v5255, %v5712
        %v5857 = vmul.f32 %v5256, %v5713
        %v5858 = vmul.f32 %v5257, %v5714
        %v5859 = vmul.f32 %v5258, %v5715
        %v5860 = vmul.f32 %v5259, %v5716
        %v5861 = vmul.f32 %v5260, %v5717
        %v5862 = vmul.f32 %v5261, %v5718
        %v5863 = vmul.f32 %v5262, %v5719
        %v5864 = vmul.f32 %v5263, %v5720
        %v5865 = vmul.f32 %v5264, %v5721
        %v5866 = vmul.f32 %v5265, %v5722
        %v5867 = vmul.f32 %v5266, %v5723
        %v5868 = vmul.f32 %v5267, %v5724
        %v5869 = vmul.f32 %v5268, %v5725
        %v5870 = vmul.f32 %v5269, %v5726
        %v5871 = vmul.f32 %v5270, %v5727
        %v5872 = vmul.f32 %v5271, %v5728
        %v5873 = vmul.f32 %v5272, %v5729
        %v5874 = vmul.f32 %v5273, %v5730
        %v5875 = vmul.f32 %v5274, %v5731
        %v5876 = vmul.f32 %v5275, %v5732
        %v5877 = vmul.f32 %v5276, %v5733
        %v5878 = vmul.f32 %v5277, %v5734
        %v5879 = vmul.f32 %v5278, %v5735
        %v5880 = vmul.f32 %v5279, %v5736
        %v5881 = vmul.f32 %v5280, %v5737
        %v5882 = vmul.f32 %v5281, %v5738
        %v5883 = vmul.f32 %v5282, %v5739
        %v5884 = vmul.f32 %v5283, %v5740
        %v5885 = vmul.f32 %v5284, %v5741
        %v5886 = vmul.f32 %v5285, %v5742
        %v5887 = vmul.f32 %v5286, %v5743
        %v5888 = vmul.f32 %v5287, %v5744
        %v5889 = vmul.f32 %v5288, %v5745
        %v5890 = vmul.f32 %v5289, %v5746
        %v5891 = vmul.f32 %v5290, %v5747
        %v5892 = vmul.f32 %v5291, %v5748
        %v5893 = vmul.f32 %v5292, %v5749
        %v5894 = vmul.f32 %v5293, %v5750
        %v5895 = vmul.f32 %v5294, %v5751
        %v5896 = vmul.f32 %v5295, %v5752
        %v5897 = vmul.f32 %v5296, %v5753
        %v5898 = vmul.f32 %v5297, %v5754
        %v5899 = vmul.f32 %v5298, %v5755
        %v5900 = vmul.f32 %v5299, %v5756
        %v5901 = vmul.f32 %v5300, %v5757
        %v5902 = vmul.f32 %v5301, %v5758
        %v5903 = vmul.f32 %v5302, %v5759
        %v5904 = vmul.f32 %v5303, %v5760
        %v5905 = vmul.f32 %v5304, %v5761
        %v5906 = vmul.f32 %v5305, %v5762
        %v5907 = vmul.f32 %v5306, %v5763
        %v5908 = vmul.f32 %v5307, %v5764
        %v5909 = vmul.f32 %v5308, %v5765
        %v5910 = vmul.f32 %v5309, %v5766
        %v5911 = vmul.f32 %v5310, %v5767
        %v5912 = vmul.f32 %v5311, %v5768
        %v5913 = vmul.f32 %v5312, %v5769
        %v5914 = vmul.f32 %v5313, %v5770
        %v5915 = vmul.f32 %v5314, %v5771
        %v5916 = vmul.f32 %v5315, %v5772
        %v5918 = vperm.slane %v4884, 0
        %v5920 = vrot.slane %v5918, 1
        %v5921 = vrot.slane %v5918, 2
        %v5922 = vrot.slane %v5918, 3
        %v5923 = vrot.slane %v5918, 4
        %v5924 = vrot.slane %v5918, 5
        %v5925 = vrot.slane %v5918, 6
        %v5926 = vrot.slane %v5918, 7
        %v5934 = vmul.f32 %v5845, %v5918
        %v5935 = vmul.f32 %v5846, %v5920
        %v5936 = vmul.f32 %v5847, %v5921
        %v5937 = vmul.f32 %v5848, %v5922
        %v5938 = vmul.f32 %v5849, %v5923
        %v5939 = vmul.f32 %v5850, %v5924
        %v5940 = vmul.f32 %v5851, %v5925
        %v5941 = vmul.f32 %v5852, %v5926
        %v5942 = vmul.f32 %v5853, %v5918
        %v5943 = vmul.f32 %v5854, %v5920
        %v5944 = vmul.f32 %v5855, %v5921
        %v5945 = vmul.f32 %v5856, %v5922
        %v5946 = vmul.f32 %v5857, %v5923
        %v5947 = vmul.f32 %v5858, %v5924
        %v5948 = vmul.f32 %v5859, %v5925
        %v5949 = vmul.f32 %v5860, %v5926
        %v5950 = vmul.f32 %v5861, %v5918
        %v5951 = vmul.f32 %v5862, %v5920
        %v5952 = vmul.f32 %v5863, %v5921
        %v5953 = vmul.f32 %v5864, %v5922
        %v5954 = vmul.f32 %v5865, %v5923
        %v5955 = vmul.f32 %v5866, %v5924
        %v5956 = vmul.f32 %v5867, %v5925
        %v5957 = vmul.f32 %v5868, %v5926
        %v5958 = vmul.f32 %v5869, %v5918
        %v5959 = vmul.f32 %v5870, %v5920
        %v5960 = vmul.f32 %v5871, %v5921
        %v5961 = vmul.f32 %v5872, %v5922
        %v5962 = vmul.f32 %v5873, %v5923
        %v5963 = vmul.f32 %v5874, %v5924
        %v5964 = vmul.f32 %v5875, %v5925
        %v5965 = vmul.f32 %v5876, %v5926
        %v5966 = vmul.f32 %v5877, %v5918
        %v5967 = vmul.f32 %v5878, %v5920
        %v5968 = vmul.f32 %v5879, %v5921
        %v5969 = vmul.f32 %v5880, %v5922
        %v5970 = vmul.f32 %v5881, %v5923
        %v5971 = vmul.f32 %v5882, %v5924
        %v5972 = vmul.f32 %v5883, %v5925
        %v5973 = vmul.f32 %v5884, %v5926
        %v5974 = vmul.f32 %v5885, %v5918
        %v5975 = vmul.f32 %v5886, %v5920
        %v5976 = vmul.f32 %v5887, %v5921
        %v5977 = vmul.f32 %v5888, %v5922
        %v5978 = vmul.f32 %v5889, %v5923
        %v5979 = vmul.f32 %v5890, %v5924
        %v5980 = vmul.f32 %v5891, %v5925
        %v5981 = vmul.f32 %v5892, %v5926
        %v5982 = vmul.f32 %v5893, %v5918
        %v5983 = vmul.f32 %v5894, %v5920
        %v5984 = vmul.f32 %v5895, %v5921
        %v5985 = vmul.f32 %v5896, %v5922
        %v5986 = vmul.f32 %v5897, %v5923
        %v5987 = vmul.f32 %v5898, %v5924
        %v5988 = vmul.f32 %v5899, %v5925
        %v5989 = vmul.f32 %v5900, %v5926
        %v5990 = vmul.f32 %v5901, %v5918
        %v5991 = vmul.f32 %v5902, %v5920
        %v5992 = vmul.f32 %v5903, %v5921
        %v5993 = vmul.f32 %v5904, %v5922
        %v5994 = vmul.f32 %v5905, %v5923
        %v5995 = vmul.f32 %v5906, %v5924
        %v5996 = vmul.f32 %v5907, %v5925
        %v5997 = vmul.f32 %v5908, %v5926
        %v5998 = vmul.f32 %v5909, %v5918
        %v5999 = vmul.f32 %v5910, %v5920
        %v6000 = vmul.f32 %v5911, %v5921
        %v6001 = vmul.f32 %v5912, %v5922
        %v6002 = vmul.f32 %v5913, %v5923
        %v6003 = vmul.f32 %v5914, %v5924
        %v6004 = vmul.f32 %v5915, %v5925
        %v6005 = vmul.f32 %v5916, %v5926
        %v6007 = vperm.slane %v4885, 0
        %v6009 = vrot.slane %v6007, 1
        %v6010 = vrot.slane %v6007, 2
        %v6011 = vrot.slane %v6007, 3
        %v6012 = vrot.slane %v6007, 4
        %v6013 = vrot.slane %v6007, 5
        %v6014 = vrot.slane %v6007, 6
        %v6015 = vrot.slane %v6007, 7
        %v6023 = vadd.f32 %v5934, %v6007
        %v6024 = vadd.f32 %v5935, %v6009
        %v6025 = vadd.f32 %v5936, %v6010
        %v6026 = vadd.f32 %v5937, %v6011
        %v6027 = vadd.f32 %v5938, %v6012
        %v6028 = vadd.f32 %v5939, %v6013
        %v6029 = vadd.f32 %v5940, %v6014
        %v6030 = vadd.f32 %v5941, %v6015
        %v6031 = vadd.f32 %v5942, %v6007
        %v6032 = vadd.f32 %v5943, %v6009
        %v6033 = vadd.f32 %v5944, %v6010
        %v6034 = vadd.f32 %v5945, %v6011
        %v6035 = vadd.f32 %v5946, %v6012
        %v6036 = vadd.f32 %v5947, %v6013
        %v6037 = vadd.f32 %v5948, %v6014
        %v6038 = vadd.f32 %v5949, %v6015
        %v6039 = vadd.f32 %v5950, %v6007
        %v6040 = vadd.f32 %v5951, %v6009
        %v6041 = vadd.f32 %v5952, %v6010
        %v6042 = vadd.f32 %v5953, %v6011
        %v6043 = vadd.f32 %v5954, %v6012
        %v6044 = vadd.f32 %v5955, %v6013
        %v6045 = vadd.f32 %v5956, %v6014
        %v6046 = vadd.f32 %v5957, %v6015
        %v6047 = vadd.f32 %v5958, %v6007
        %v6048 = vadd.f32 %v5959, %v6009
        %v6049 = vadd.f32 %v5960, %v6010
        %v6050 = vadd.f32 %v5961, %v6011
        %v6051 = vadd.f32 %v5962, %v6012
        %v6052 = vadd.f32 %v5963, %v6013
        %v6053 = vadd.f32 %v5964, %v6014
        %v6054 = vadd.f32 %v5965, %v6015
        %v6055 = vadd.f32 %v5966, %v6007
        %v6056 = vadd.f32 %v5967, %v6009
        %v6057 = vadd.f32 %v5968, %v6010
        %v6058 = vadd.f32 %v5969, %v6011
        %v6059 = vadd.f32 %v5970, %v6012
        %v6060 = vadd.f32 %v5971, %v6013
        %v6061 = vadd.f32 %v5972, %v6014
        %v6062 = vadd.f32 %v5973, %v6015
        %v6063 = vadd.f32 %v5974, %v6007
        %v6064 = vadd.f32 %v5975, %v6009
        %v6065 = vadd.f32 %v5976, %v6010
        %v6066 = vadd.f32 %v5977, %v6011
        %v6067 = vadd.f32 %v5978, %v6012
        %v6068 = vadd.f32 %v5979, %v6013
        %v6069 = vadd.f32 %v5980, %v6014
        %v6070 = vadd.f32 %v5981, %v6015
        %v6071 = vadd.f32 %v5982, %v6007
        %v6072 = vadd.f32 %v5983, %v6009
        %v6073 = vadd.f32 %v5984, %v6010
        %v6074 = vadd.f32 %v5985, %v6011
        %v6075 = vadd.f32 %v5986, %v6012
        %v6076 = vadd.f32 %v5987, %v6013
        %v6077 = vadd.f32 %v5988, %v6014
        %v6078 = vadd.f32 %v5989, %v6015
        %v6079 = vadd.f32 %v5990, %v6007
        %v6080 = vadd.f32 %v5991, %v6009
        %v6081 = vadd.f32 %v5992, %v6010
        %v6082 = vadd.f32 %v5993, %v6011
        %v6083 = vadd.f32 %v5994, %v6012
        %v6084 = vadd.f32 %v5995, %v6013
        %v6085 = vadd.f32 %v5996, %v6014
        %v6086 = vadd.f32 %v5997, %v6015
        %v6087 = vadd.f32 %v5998, %v6007
        %v6088 = vadd.f32 %v5999, %v6009
        %v6089 = vadd.f32 %v6000, %v6010
        %v6090 = vadd.f32 %v6001, %v6011
        %v6091 = vadd.f32 %v6002, %v6012
        %v6092 = vadd.f32 %v6003, %v6013
        %v6093 = vadd.f32 %v6004, %v6014
        %v6094 = vadd.f32 %v6005, %v6015
        %6167 = vst [vmem:[#allocation1] ss:$9 sm:$0xff] %v6023
        %s6168 = scalar_lea.vmem [#allocation1], 1
        %6169 = vst [vmem:[%s6168] ss:$9 sm:$0xff] %v6024
        %s6170 = scalar_lea.vmem [#allocation1], 2
        %6171 = vst [vmem:[%s6170] ss:$9 sm:$0xff] %v6025
        %s6172 = scalar_lea.vmem [#allocation1], 3
        %6173 = vst [vmem:[%s6172] ss:$9 sm:$0xff] %v6026
        %s6174 = scalar_lea.vmem [#allocation1], 4
        %6175 = vst [vmem:[%s6174] ss:$9 sm:$0xff] %v6027
        %s6176 = scalar_lea.vmem [#allocation1], 5
        %6177 = vst [vmem:[%s6176] ss:$9 sm:$0xff] %v6028
        %s6178 = scalar_lea.vmem [#allocation1], 6
        %6179 = vst [vmem:[%s6178] ss:$9 sm:$0xff] %v6029
        %s6180 = scalar_lea.vmem [#allocation1], 7
        %6181 = vst [vmem:[%s6180] ss:$9 sm:$0xff] %v6030
        %v6182 = vld [vmem:[#allocation1] sm:$0xff]
        %6183 = vst [vmem:[#allocation1] ss:$9 sm:$0xff] %v6031
        %v6184 = vld [vmem:[#allocation1] sm:$0xff]
        %6185 = vst [vmem:[#allocation1] ss:$9 sm:$0xff] %v6032
        %6186 = vst [vmem:[%s6168] ss:$9 sm:$0xff] %v6033
        %6187 = vst [vmem:[%s6170] ss:$9 sm:$0xff] %v6034
        %6188 = vst [vmem:[%s6172] ss:$9 sm:$0xff] %v6035
        %6189 = vst [vmem:[%s6174] ss:$9 sm:$0xff] %v6036
        %6190 = vst [vmem:[%s6176] ss:$9 sm:$0xff] %v6037
        %6191 = vst [vmem:[%s6178] ss:$9 sm:$0xff] %v6038
        %6192 = vst [vmem:[%s6180] ss:$9 sm:$0xff] %v6039
        %v6193 = vld [vmem:[#allocation1] sm:$0xff]
        %6194 = vst [vmem:[#allocation1] ss:$9 sm:$0xff] %v6040
        %v6195 = vld [vmem:[#allocation1] sm:$0xff]
        %6196 = vst [vmem:[#allocation1] ss:$9 sm:$0xff] %v6041
        %6197 = vst [vmem:[%s6168] ss:$9 sm:$0xff] %v6042
        %6198 = vst [vmem:[%s6170] ss:$9 sm:$0xff] %v6043
        %6199 = vst [vmem:[%s6172] ss:$9 sm:$0xff] %v6044
        %6200 = vst [vmem:[%s6174] ss:$9 sm:$0xff] %v6045
        %6201 = vst [vmem:[%s6176] ss:$9 sm:$0xff] %v6046
        %6202 = vst [vmem:[%s6178] ss:$9 sm:$0xff] %v6047
        %6203 = vst [vmem:[%s6180] ss:$9 sm:$0xff] %v6048
        %v6204 = vld [vmem:[#allocation1] sm:$0xff]
        %6205 = vst [vmem:[#allocation1] ss:$9 sm:$0xff] %v6049
        %v6206 = vld [vmem:[#allocation1] sm:$0xff]
        %6207 = vst [vmem:[#allocation1] ss:$9 sm:$0xff] %v6050
        %6208 = vst [vmem:[%s6168] ss:$9 sm:$0xff] %v6051
        %6209 = vst [vmem:[%s6170] ss:$9 sm:$0xff] %v6052
        %6210 = vst [vmem:[%s6172] ss:$9 sm:$0xff] %v6053
        %6211 = vst [vmem:[%s6174] ss:$9 sm:$0xff] %v6054
        %6212 = vst [vmem:[%s6176] ss:$9 sm:$0xff] %v6055
        %6213 = vst [vmem:[%s6178] ss:$9 sm:$0xff] %v6056
        %6214 = vst [vmem:[%s6180] ss:$9 sm:$0xff] %v6057
        %v6215 = vld [vmem:[#allocation1] sm:$0xff]
        %6216 = vst [vmem:[#allocation1] ss:$9 sm:$0xff] %v6058
        %v6217 = vld [vmem:[#allocation1] sm:$0xff]
        %6218 = vst [vmem:[#allocation1] ss:$9 sm:$0xff] %v6059
        %6219 = vst [vmem:[%s6168] ss:$9 sm:$0xff] %v6060
        %6220 = vst [vmem:[%s6170] ss:$9 sm:$0xff] %v6061
        %6221 = vst [vmem:[%s6172] ss:$9 sm:$0xff] %v6062
        %6222 = vst [vmem:[%s6174] ss:$9 sm:$0xff] %v6063
        %6223 = vst [vmem:[%s6176] ss:$9 sm:$0xff] %v6064
        %6224 = vst [vmem:[%s6178] ss:$9 sm:$0xff] %v6065
        %6225 = vst [vmem:[%s6180] ss:$9 sm:$0xff] %v6066
        %v6226 = vld [vmem:[#allocation1] sm:$0xff]
        %6227 = vst [vmem:[#allocation1] ss:$9 sm:$0xff] %v6067
        %v6228 = vld [vmem:[#allocation1] sm:$0xff]
        %6229 = vst [vmem:[#allocation1] ss:$9 sm:$0xff] %v6068
        %6230 = vst [vmem:[%s6168] ss:$9 sm:$0xff] %v6069
        %6231 = vst [vmem:[%s6170] ss:$9 sm:$0xff] %v6070
        %6232 = vst [vmem:[%s6172] ss:$9 sm:$0xff] %v6071
        %6233 = vst [vmem:[%s6174] ss:$9 sm:$0xff] %v6072
        %6234 = vst [vmem:[%s6176] ss:$9 sm:$0xff] %v6073
        %6235 = vst [vmem:[%s6178] ss:$9 sm:$0xff] %v6074
        %6236 = vst [vmem:[%s6180] ss:$9 sm:$0xff] %v6075
        %v6237 = vld [vmem:[#allocation1] sm:$0xff]
        %6238 = vst [vmem:[#allocation1] ss:$9 sm:$0xff] %v6076
        %v6239 = vld [vmem:[#allocation1] sm:$0xff]
        %6240 = vst [vmem:[#allocation1] ss:$9 sm:$0xff] %v6077
        %6241 = vst [vmem:[%s6168] ss:$9 sm:$0xff] %v6078
        %6242 = vst [vmem:[%s6170] ss:$9 sm:$0xff] %v6079
        %6243 = vst [vmem:[%s6172] ss:$9 sm:$0xff] %v6080
        %6244 = vst [vmem:[%s6174] ss:$9 sm:$0xff] %v6081
        %6245 = vst [vmem:[%s6176] ss:$9 sm:$0xff] %v6082
        %6246 = vst [vmem:[%s6178] ss:$9 sm:$0xff] %v6083
        %6247 = vst [vmem:[%s6180] ss:$9 sm:$0xff] %v6084
        %v6248 = vld [vmem:[#allocation1] sm:$0xff]
        %6249 = vst [vmem:[#allocation1] ss:$9 sm:$0xff] %v6085
        %v6250 = vld [vmem:[#allocation1] sm:$0xff]
        %6251 = vst [vmem:[#allocation1] ss:$9 sm:$0xff] %v6086
        %6252 = vst [vmem:[%s6168] ss:$9 sm:$0xff] %v6087
        %6253 = vst [vmem:[%s6170] ss:$9 sm:$0xff] %v6088
        %6254 = vst [vmem:[%s6172] ss:$9 sm:$0xff] %v6089
        %6255 = vst [vmem:[%s6174] ss:$9 sm:$0xff] %v6090
        %6256 = vst [vmem:[%s6176] ss:$9 sm:$0xff] %v6091
        %6257 = vst [vmem:[%s6178] ss:$9 sm:$0xff] %v6092
        %6258 = vst [vmem:[%s6180] ss:$9 sm:$0xff] %v6093
        %v6259 = vld [vmem:[#allocation1] sm:$0xff]
        %6260 = vst [vmem:[#allocation1] ss:$9 sm:$0xff] %v6094
        %v6261 = vld [vmem:[#allocation1] sm:$0xff]
        %6278 = vst.msk [vmem:[#allocation2] sm:$0xff] %vm1267, %v6182
        %vm6279 = vcmask 122880
        %6280 = vst.msk [vmem:[#allocation2 + $0x8] sm:$0x1] %vm6279, %v6184
        %6281 = vst.msk [vmem:[#allocation2 + $0x10] sm:$0xff] %vm1267, %v6193
        %6282 = vst.msk [vmem:[#allocation2 + $0x18] sm:$0x1] %vm6279, %v6195
        %6283 = vst.msk [vmem:[#allocation2 + $0x20] sm:$0xff] %vm1267, %v6204
        %6284 = vst.msk [vmem:[#allocation2 + $0x28] sm:$0x1] %vm6279, %v6206
        %6285 = vst.msk [vmem:[#allocation2 + $0x30] sm:$0xff] %vm1267, %v6215
        %6286 = vst.msk [vmem:[#allocation2 + $0x38] sm:$0x1] %vm6279, %v6217
        %6287 = vst.msk [vmem:[#allocation2 + $0x40] sm:$0xff] %vm1267, %v6226
        %6288 = vst.msk [vmem:[#allocation2 + $0x48] sm:$0x1] %vm6279, %v6228
        %6289 = vst.msk [vmem:[#allocation2 + $0x50] sm:$0xff] %vm1267, %v6237
        %6290 = vst.msk [vmem:[#allocation2 + $0x58] sm:$0x1] %vm6279, %v6239
        %6291 = vst.msk [vmem:[#allocation2 + $0x60] sm:$0xff] %vm1267, %v6248
        %6292 = vst.msk [vmem:[#allocation2 + $0x68] sm:$0x1] %vm6279, %v6250
        %6293 = vst.msk [vmem:[#allocation2 + $0x70] sm:$0xff] %vm1267, %v6259
        %6294 = vst.msk [vmem:[#allocation2 + $0x78] sm:$0x1] %vm6279, %v6261
        %p6295 = scmp.eq.s32.totalorder %s42, 1
        // Predicated region
        $region109: #{tpu_custom_call.1} parent=103 // pred_check
          %p6296 = pneg %p6295
        $region110: #{tpu_custom_call.1} parent=103 // pred_check_branch
          %6298 = sbr.rel (%p6296) target = $region112
        $region111: #{tpu_custom_call.1} parent=103 // pred_region
          %v6299 = vpack.c.bf16 %v6023, %v6023
          %v6300 = vpack.c.bf16 %v6032, %v6032
          %v6301 = vpack.c.bf16 %v6041, %v6041
          %v6302 = vpack.c.bf16 %v6050, %v6050
          %v6303 = vpack.c.bf16 %v6059, %v6059
          %v6304 = vpack.c.bf16 %v6068, %v6068
          %v6305 = vpack.c.bf16 %v6077, %v6077
          %v6306 = vpack.c.bf16 %v6086, %v6086
          %v6307 = vld [vmem:[%s17] sm:$0xf]
          %v6308 = vld [vmem:[%s17 + $0x4] sm:$0xf]
          %v6309 = vld [vmem:[%s18] sm:$0x1]
          %v6311 = vperm.slane %v6309, 0
          %v6321 = vunpack.c.l.b16 %v6299
          %v6322 = vunpack.c.l.b16 %v6300
          %v6323 = vunpack.c.l.b16 %v6301
          %v6324 = vunpack.c.l.b16 %v6302
          %v6325 = vunpack.c.l.b16 %v6303
          %v6326 = vunpack.c.l.b16 %v6304
          %v6327 = vunpack.c.l.b16 %v6305
          %v6328 = vunpack.c.l.b16 %v6306
          %v6329 = vrot.slane %v6322, 7
          %vm6330 = vcmask 1041409
          %v6331 = vsel %vm6330, %v6329, %v6321
          %v6332 = vrot.slane %v6323, 6
          %vm6333 = vcmask 1042434
          %v6334 = vsel %vm6333, %v6332, %v6331
          %v6335 = vrot.slane %v6324, 5
          %vm6336 = vcmask 1043459
          %v6337 = vsel %vm6336, %v6335, %v6334
          %v6338 = vrot.slane %v6325, 4
          %vm6339 = vcmask 1044484
          %v6340 = vsel %vm6339, %v6338, %v6337
          %v6341 = vrot.slane %v6326, 3
          %vm6342 = vcmask 1045509
          %v6343 = vsel %vm6342, %v6341, %v6340
          %v6344 = vrot.slane %v6327, 2
          %vm6345 = vcmask 1046534
          %v6346 = vsel %vm6345, %v6344, %v6343
          %v6347 = vrot.slane %v6328, 1
          %vm6348 = vcmask 1047559
          %v6349 = vsel %vm6348, %v6347, %v6346
          %v6350 = vpack.c.b16 %v6349, %v6349
          %v6353 = vunpack.c.l.b16 %v6307
          %v6354 = vunpack.c.l.b16 %v6308
          %v6355 = vpack.c.b16 %v6354, %v6353
          %v6358 = vsel %vm1267, %v6350, 0
          %6360 = vmatpush.bf16.msra.mxu0 0
          %6361 = vmatpush.bf16.msra.mxu0 0
          %6362 = vmatpush.bf16.msra.mxu0 0
          %6363 = vmatpush.bf16.msra.mxu0 0
          %6364 = vmatpush.bf16.msra.mxu0 0
          %6365 = vmatpush.bf16.msra.mxu0 0
          %6366 = vmatpush.bf16.msra.mxu0 0
          %6367 = vmatpush.bf16.msra.mxu0 %v6355
          %6368 = vmatmul.bf16.gmra.mxu0 %v6358
          %v6369 = vpop.f32.mrf.mxu0
          %v6370 = vadd.f32 %v6311, %v6369
          %v6371 = vpop.f32.mrf.mxu0
          %6372 = vdwg.mxu0
          %v6373 = vld [vmem:[%s19] sm:$0x1]
          %v6374 = vld [vmem:[%s20] sm:$0x1]
          %v6375 = vsel %vm4628, %v6370, 0.0
          %6376 = vadd.xlane.f32.xlu0 %v6375
          %v6377 = vpop.xlane.xlu0 %6376
          %v6378 = vrcp.pop 64.0
          %v6379 = vmul.f32 64.0, %v6378
          %v6380 = vsub.f32 1.0, %v6379
          %v6381 = vmul.f32 %v6378, %v6380
          %v6382 = vadd.f32 %v6378, %v6381
          %vm6383 = vweird.f32 %v6378
          %v6384 = vsel %vm6383, %v6378, %v6382
          %v6385 = vmul.f32 %v6377, %v6384
          %v6386 = vsub.f32 %v6370, %v6385
          %v6387 = vmul.f32 %v6386, %v6386
          %v6388 = vsel %vm4628, %v6387, 0.0
          %6389 = vadd.xlane.f32.xlu0 %v6388
          %v6390 = vpop.xlane.xlu0 %6389
          %v6391 = vmul.f32 %v6390, %v6384
          %v6392 = vadd.f32 %v6391, 1e-05
          %v6393 = vrsqrt.pop %v6392
          %v6394 = vmul.f32 %v6393, %v6392
          %v6395 = vmul.f32 %v6394, %v6393
          %v6396 = vmul.f32 0.5, %v6395
          %v6397 = vsub.f32 1.5, %v6396
          %v6398 = vmul.f32 %v6393, %v6397
          %vm6399 = vweird.f32 %v6392
          %vm6400 = vweird.f32 %v6393
          %vm6401 = vmor %vm6399, %vm6400
          %v6402 = vsel %vm6401, %v6393, %v6398
          %v6403 = vmul.f32 %v6386, %v6402
          %v6405 = vperm.slane %v6373, 0
          %v6407 = vmul.f32 %v6403, %v6405
          %v6409 = vperm.slane %v6374, 0
          %v6411 = vadd.f32 %v6407, %v6409
          %v6412 = vsel %vm4628, %v6411, 0.0
          %6413 = vst [vmem:[%s831] sm:$0xff] %v6412
        $region112: #{tpu_custom_call.1} parent=103 // pred_fallthru
          _
        %s6414 = sand.u32 %s572, 1
        %s6415 = scalar_lea.sflag [#allocation4], %s6414
        %s6416 = sand.u32 %s572, 1
        %s6417 = smul.addr %s6416, 8
        %s6418 = scalar_lea.vmem [#allocation3], %s6417
        // Predicated region
        $region113: #{tpu_custom_call.1} parent=103 // pred_check
          %p6419 = pneg %p582
        $region114: #{tpu_custom_call.1} parent=103 // pred_check_branch
          %6421 = sbr.rel (%p6419) target = $region116
        $region115: #{tpu_custom_call.1} parent=103 // pred_region
          %6423 = vsyncadd %s6415, 0
          %s6424 = smul.addr %s40, 2
          %s6425 = sadd.s32 %s41, %s6424
          %s6426 = smul.addr %s6425, 8
          %s6427 = scalar_lea.hbm %s21, %s6426
          %s6429 = sshll.u32 %s6418, 4
          %s6430 = int_to_ptr.vmem [resolvable:$true] %s6429
          %s6431 = sshll.u32 %s6427, 4
          %s6432 = int_to_ptr.hbm [resolvable:$true] %s6431
          %6434 = dma.vmem_to_hbm [thread:$0]  %s6430, 128, %s6432, %s6415
        $region116: #{tpu_custom_call.1} parent=103 // pred_fallthru
          _
      $region104: #{tpu_custom_call.1} parent=5 // pred_fallthru
        _
      %p6435 = scmp.le.s32.totalorder 2, %s30
      // Predicated region
      $region117: #{tpu_custom_call.1} parent=5 // pred_check
        %p6436 = pneg %p6435
      $region118: #{tpu_custom_call.1} parent=5 // pred_check_branch
        %6438 = sbr.rel (%p6436) target = $region120
      $region119: #{tpu_custom_call.1} parent=5 // pred_region
        %s6439 = ssub.s32 %s30, 2
        // Predicated region
        $region121: #{tpu_custom_call.1} parent=119 // pred_check
          %p6440 = pneg %p588
        $region122: #{tpu_custom_call.1} parent=119 // pred_check_branch
          %6442 = sbr.rel (%p6440) target = $region124
        $region123: #{tpu_custom_call.1} parent=119 // pred_region
          %s6443 = sand.u32 %s573, 1
          %s6444 = scalar_lea.sflag [#allocation4], %s6443
          %s6445 = sand.u32 %s573, 1
          %s6446 = smul.addr %s6445, 8
          %s6447 = scalar_lea.vmem [#allocation3], %s6446
          %6449 = dma.done %s6444, 128
        $region124: #{tpu_custom_call.1} parent=119 // pred_fallthru
          _
      $region120: #{tpu_custom_call.1} parent=5 // pred_fallthru
        _
    $region6: #{tpu_custom_call.1} parent=1 // loop_footer
      %s34 = sadd.s32 1, %s30
    $region7: #{tpu_custom_call.1} parent=1 // loop_footer_branch
      %29 = sbr.rel target = $region3
    $region8: #{tpu_custom_call.1} parent=1 // loop_exit
      _
    %6450 = vsyncpa [#allocation4], 1
    %s6451 = scalar_lea.sflag [#allocation4], 1
    %6452 = vsyncpa %s6451, 1

</llo_original>
